<compile_context>
chip_gen: v7x
topology: tpu7x:2x2x1
jax: 0.10.0
libtpu: 0.0.40
codegen_flags: <defaults>
</compile_context>

<pallas_src>
import jax
import jax.numpy as jnp
from jax.experimental import pallas as pl
from jax.experimental.pallas import tpu as pltpu

NEG_SLOPE = 0.01          # torch.nn.LeakyReLU default
H1, H2 = 512, 256         # layer widths from the module


def _leaky_relu(v):
    # one mul + one max (cheaper than cmp+select+mul on the VALU)
    return jnp.maximum(v, NEG_SLOPE * v)


def discriminator_kernel(
    x_ref,      # (TM, TK)   x tile (any float dtype; cast to bf16 in-kernel)
    y_ref,      # (TM, 1)    f32
    w1x_ref,    # (TK, 512)  bf16   rows of layer-1 weight acting on x
    w1y_ref,    # (1, 512)   f32    layer-1 weight row acting on y
    b1_ref,     # (1, 512)   f32
    w2_ref,     # (512, 256) bf16
    b2_ref,     # (1, 256)   f32
    w3_ref,     # (1, 256)   f32    output weight, transposed
    b3_ref,     # (1,)       f32    SMEM scalar
    o_ref,      # (TM, 1)    f32
    acc_ref,    # (TM, 512)  f32    layer-1 accumulator over the D (k) axis
):
    k = pl.program_id(1)

    @pl.when(k == 0)
    def _init():
        acc_ref[...] = jnp.zeros_like(acc_ref)

    # layer-1 partial product: bf16 MXU inputs, f32 accumulation.
    acc_ref[...] += jnp.dot(
        x_ref[...].astype(jnp.bfloat16), w1x_ref[...],
        preferred_element_type=jnp.float32)

    @pl.when(k == pl.num_programs(1) - 1)
    def _finalize():
        # rank-1 y column contribution (VPU broadcast) + bias + LeakyReLU.
        h1 = _leaky_relu(acc_ref[...] + y_ref[...] * w1y_ref[...] + b1_ref[...])
        # layer-2: 512 -> 256 (bf16 MXU, f32 accumulate) + LeakyReLU.
        h2 = jnp.dot(h1.astype(jnp.bfloat16), w2_ref[...],
                     preferred_element_type=jnp.float32) + b2_ref[...]
        h2 = _leaky_relu(h2)
        # output head: 256 -> 1 as a lane reduction, then an exact sigmoid
        # (exp on the EUP; the divide touches only (TM, 1) values).
        z = jnp.sum(h2 * w3_ref[...], axis=-1, keepdims=True) + b3_ref[0]
        o_ref[...] = 1.0 / (1.0 + jnp.exp(-z))


def _round_up(v, m):
    return ((v + m - 1) // m) * m


def _vmem_budget_bytes():
    """Per-generation VMEM limit: ~48 MiB on v7x, ~96 MiB on v5e/v6e."""
    try:
        cap = int(pltpu.get_tpu_info().vmem_capacity_bytes)
    except Exception:
        cap = 64 * 1024 * 1024       # conservative (v7x-sized) fallback
    return min(cap * 3 // 4, 100 * 1024 * 1024)


def _pick_tiles(B, D, vmem_budget, block_rows, block_k):
    # TM: multiple of 16 (bf16 native sublane tile), aim for >=4 batch grid
    # steps so v7x's two TensorCores both get work, cap at 512 rows.
    if block_rows is None:
        tm = min(512, max(16, _round_up(pl.cdiv(B, 4), 16)))
    else:
        tm = max(16, _round_up(block_rows, 16))
    tm = min(tm, _round_up(B, 16))

    if block_k is not None:
        return tm, block_k

    # TK from the VMEM budget (counting everything double-buffered, even
    # though constant-index-map weights request a single buffer):
    #   2*TM*TK*4 (f32 x tile) + 2*TK*512*2 (bf16 w1x tile)
    #   + TM*512*4 (acc) + 2*512*256*2 (w2) + slack  <=  budget
    slack = 4 * 1024 * 1024
    fixed = tm * H1 * 4 + 2 * H1 * H2 * 2 + slack
    avail = max(vmem_budget - fixed, 1024 * 1024)
    max_tk = avail // (2 * tm * 4 + 2 * H1 * 2)
    if D <= max_tk:
        return tm, D
    tk = 0
    cand = (max_tk // 128) * 128
    while cand >= 128:
        if D % cand == 0:
            tk = cand
            break
        cand -= 128
    if tk == 0:
        # TODO(synk): emb_dim with no 128-multiple divisor under the budget
        # would need D padding; fall back to a single full-D block.
        tk = D
    return tm, tk


def discriminator_forward(x, y, params, *, block_rows=None, block_k=None):
    """x: (B, D), y: (B,)  ->  (B, 1) float32.  Matches Discriminator.forward."""
    B, D = x.shape
    w1x, w1y, b1, w2, b2, w3t, b3 = params

    vmem_budget = _vmem_budget_bytes()
    TM, TK = _pick_tiles(B, D, vmem_budget, block_rows, block_k)
    if D % TK != 0:
        raise ValueError(f"block_k={TK} must divide emb_dim={D}")
    if TK != D and TK % 128 != 0:
        raise ValueError("block_k must be a multiple of 128 (lane width)")
    num_b = pl.cdiv(B, TM)
    num_k = D // TK

    # No cast / pad of x in the wrapper (it would add a full extra HBM pass).
    y2 = y.reshape(B, 1).astype(jnp.float32)
    w1x_b = w1x.astype(jnp.bfloat16)          # one-time weight casts only
    w2_b = w2.astype(jnp.bfloat16)
    b3_1 = b3.reshape(1).astype(jnp.float32)

    flops = 2 * B * (D * H1 + H1 * H2 + H2)
    bytes_accessed = (
        x.size * x.dtype.itemsize
        + y2.size * 4
        + w1x_b.size * 2 * (num_b if num_k > 1 else 1)
        + w2_b.size * 2
        + (w1y.size + b1.size + b2.size + w3t.size + 1) * 4
        + B * 4
    )

    def _call(single_buffer_weights):
        # Constant-index-map blocks are never re-fetched -> a single VMEM
        # buffer is enough; halves resident-weight VMEM (matters on v7x).
        res = ({"pipeline_mode": pl.Buffered(1)}
               if single_buffer_weights else {})
        w1x_kw = res if num_k == 1 else {}
        return pl.pallas_call(
            discriminator_kernel,
            out_shape=jax.ShapeDtypeStruct((B, 1), jnp.float32),
            grid=(num_b, num_k),
            in_specs=[
                pl.BlockSpec((TM, TK), lambda i, k: (i, k)),            # x
                pl.BlockSpec((TM, 1), lambda i, k: (i, 0)),             # y
                pl.BlockSpec((TK, H1), lambda i, k: (k, 0), **w1x_kw),  # w1x
                pl.BlockSpec((1, H1), lambda i, k: (0, 0), **res),      # w1y
                pl.BlockSpec((1, H1), lambda i, k: (0, 0), **res),      # b1
                pl.BlockSpec((H1, H2), lambda i, k: (0, 0), **res),     # w2
                pl.BlockSpec((1, H2), lambda i, k: (0, 0), **res),      # b2
                pl.BlockSpec((1, H2), lambda i, k: (0, 0), **res),      # w3^T
                pl.BlockSpec(memory_space=pltpu.SMEM),                  # b3
            ],
            out_specs=pl.BlockSpec((TM, 1), lambda i, k: (i, 0)),
            scratch_shapes=[pltpu.VMEM((TM, H1), jnp.float32)],
            compiler_params=pltpu.CompilerParams(
                dimension_semantics=("parallel", "arbitrary"),
                vmem_limit_bytes=vmem_budget,
            ),
            cost_estimate=pl.CostEstimate(
                flops=flops, transcendentals=B, bytes_accessed=bytes_accessed,
            ),
        )(x, y2, w1x_b, w1y, b1, w2_b, b2, w3t, b3_1)

    try:
        return _call(True)
    except Exception:
        # TODO(synk): this jax version rejects pipeline_mode on the top-level
        # TPU pipeline; fall back to default double buffering (the TM/TK
        # budget already assumes two buffers per block, so this stays safe).
        return _call(False)


def init_params(emb_dim, key):
    """Deterministic init mirroring torch.nn.Linear's U(-1/sqrt(fan_in), ...)."""
    k = jax.random.split(key, 6)

    def uniform(key, shape, fan_in):
        bound = 1.0 / jnp.sqrt(jnp.float32(fan_in))
        return jax.random.uniform(key, shape, jnp.float32, -bound, bound)

    d_in1 = emb_dim + 1
    w1_full = uniform(k[0], (d_in1, H1), d_in1)
    w1x, w1y = w1_full[:emb_dim, :], w1_full[emb_dim:, :]
    b1 = uniform(k[1], (1, H1), d_in1)
    w2 = uniform(k[2], (H1, H2), H1)
    b2 = uniform(k[3], (1, H2), H1)
    w3t = uniform(k[4], (1, H2), H2)          # output weight stored transposed
    b3 = uniform(k[5], (1,), H2)
    return (w1x, w1y, b1, w2, b2, w3t, b3)


def reference_forward(x, y, params):
    w1x, w1y, b1, w2, b2, w3t, b3 = params
    xc = jnp.concatenate([x, y.reshape(y.shape[0], 1)], axis=1)
    w1 = jnp.concatenate([w1x, w1y], axis=0)
    h1 = _leaky_relu(xc @ w1 + b1)
    h2 = _leaky_relu(h1 @ w2 + b2)
    z = h2 @ w3t.T + b3.reshape(1, 1)
    return jax.nn.sigmoid(z)


if __name__ == "__main__":
    # Small synthetic shapes consistent with the module (emb_dim kept small so
    # the test is fast; the K-tiled path is exercised explicitly below).
    EMB_DIM = 256
    BATCH = 64

    key = jax.random.PRNGKey(0)
    kx, ky, kp = jax.random.split(key, 3)

    x = jax.random.normal(kx, (BATCH, EMB_DIM), dtype=jnp.float32)
    y = jax.random.normal(ky, (BATCH,), dtype=jnp.float32)
    params = init_params(EMB_DIM, kp)
    ref = reference_forward(x, y, params)

    # 1) multi-step batch grid, single K step (weights fully VMEM-resident).
    out = jax.block_until_ready(
        discriminator_forward(x, y, params, block_rows=16))
    assert out.shape == (BATCH, 1)
    err = float(jnp.max(jnp.abs(out - ref)))
    assert err < 2e-2, f"single-K mismatch vs reference: max abs err {err}"

    # 2) K-tiled path (emb_dim split over the reduction grid axis).
    out_k = jax.block_until_ready(
        discriminator_forward(x, y, params, block_rows=32, block_k=128))
    err_k = float(jnp.max(jnp.abs(out_k - ref)))
    assert err_k < 2e-2, f"K-tiled mismatch vs reference: max abs err {err_k}"

    # 3) ragged batch (B not a multiple of the batch tile) -> boundary block.
    out_r = jax.block_until_ready(
        discriminator_forward(x[:50], y[:50], params, block_rows=16))
    assert out_r.shape == (50, 1)
    err_r = float(jnp.max(jnp.abs(out_r - ref[:50])))
    assert err_r < 2e-2, f"ragged-batch mismatch vs reference: max abs err {err_r}"

    print("KERNEL_OK")
</pallas_src>

<mosaic_0001>
module attributes {stable_mosaic.version = 11 : i64} {
  func.func @discriminator_kernel(%arg0: i32, %arg1: i32, %arg2: memref<16x256xf32, #tpu.memory_space<vmem>>, %arg3: memref<16x1xf32, #tpu.memory_space<vmem>>, %arg4: memref<256x512xbf16, #tpu.memory_space<vmem>>, %arg5: memref<1x512xf32, #tpu.memory_space<vmem>>, %arg6: memref<1x512xf32, #tpu.memory_space<vmem>>, %arg7: memref<512x256xbf16, #tpu.memory_space<vmem>>, %arg8: memref<1x256xf32, #tpu.memory_space<vmem>>, %arg9: memref<1x256xf32, #tpu.memory_space<vmem>>, %arg10: memref<1xf32, #tpu.memory_space<smem>>, %arg11: memref<16x1xf32, #tpu.memory_space<vmem>>, %arg12: memref<16x512xf32, #tpu.memory_space<vmem>>) attributes {dimension_semantics = [#tpu.dimension_semantics<parallel>, #tpu.dimension_semantics<arbitrary>], iteration_bounds = array<i64: 4, 1>, scalar_prefetch = 0 : i64, scratch_operands = 1 : i64, tpu.core_type = #tpu.core_type<tc>, window_params = [{transform_indices = @transform_0, window_bounds = array<i64: 16, 256>}, {transform_indices = @transform_1, window_bounds = array<i64: 16, 1>}, {pipeline_mode = #tpu.pipeline_mode<synchronous>, transform_indices = @transform_2, window_bounds = array<i64: 256, 512>}, {pipeline_mode = #tpu.pipeline_mode<synchronous>, transform_indices = @transform_3, window_bounds = array<i64: 1, 512>}, {pipeline_mode = #tpu.pipeline_mode<synchronous>, transform_indices = @transform_4, window_bounds = array<i64: 1, 512>}, {pipeline_mode = #tpu.pipeline_mode<synchronous>, transform_indices = @transform_5, window_bounds = array<i64: 512, 256>}, {pipeline_mode = #tpu.pipeline_mode<synchronous>, transform_indices = @transform_6, window_bounds = array<i64: 1, 256>}, {pipeline_mode = #tpu.pipeline_mode<synchronous>, transform_indices = @transform_7, window_bounds = array<i64: 1, 256>}, {transform_indices = @transform_8, window_bounds = array<i64: 1>}, {transform_indices = @transform_9, window_bounds = array<i64: 16, 1>}]} {
    %c0_i32 = arith.constant 0 : i32
    %0 = arith.cmpi eq, %arg1, %c0_i32 : i32
    %1 = arith.extui %0 : i1 to i32
    %c0_i32_0 = arith.constant 0 : i32
    %2 = arith.cmpi ne, %1, %c0_i32_0 : i32
    scf.if %2 {
      %cst_10 = arith.constant 0.000000e+00 : f32
      %13 = vector.broadcast %cst_10 : f32 to vector<16x512xf32>
      %c0_11 = arith.constant 0 : index
      %c0_12 = arith.constant 0 : index
      %14 = vector.load %arg12[%c0_11, %c0_12] : memref<16x512xf32, #tpu.memory_space<vmem>>, vector<16x512xf32>
      tpu.vector_store %arg12[%c0_11, %c0_12], %13 {strides = array<i32>} : memref<16x512xf32, #tpu.memory_space<vmem>>, vector<16x512xf32>,
    } else {
    }
    %c0 = arith.constant 0 : index
    %c0_1 = arith.constant 0 : index
    %3 = vector.load %arg12[%c0, %c0_1] : memref<16x512xf32, #tpu.memory_space<vmem>>, vector<16x512xf32>
    %c0_2 = arith.constant 0 : index
    %c0_3 = arith.constant 0 : index
    %4 = vector.load %arg2[%c0_2, %c0_3] : memref<16x256xf32, #tpu.memory_space<vmem>>, vector<16x256xf32>
    %5 = arith.truncf %4 : vector<16x256xf32> to vector<16x256xbf16>
    %c0_4 = arith.constant 0 : index
    %c0_5 = arith.constant 0 : index
    %6 = vector.load %arg4[%c0_4, %c0_5] : memref<256x512xbf16, #tpu.memory_space<vmem>>, vector<256x512xbf16>
    %cst = arith.constant dense<0.000000e+00> : vector<16x512xf32>
    %7 = tpu.matmul %5, %6, %cst {dimension_numbers = #tpu.dot_dimension_numbers<[1], [0], [0], [1], [0, 0, 1, 1], [], []>} : vector<16x256xbf16>, vector<256x512xbf16>, vector<16x512xf32> -> vector<16x512xf32>
    %8 = arith.addf %3, %7 : vector<16x512xf32>
    %c0_6 = arith.constant 0 : index
    %c0_7 = arith.constant 0 : index
    %9 = vector.load %arg12[%c0_6, %c0_7] : memref<16x512xf32, #tpu.memory_space<vmem>>, vector<16x512xf32>
    tpu.vector_store %arg12[%c0_6, %c0_7], %8 {strides = array<i32>} : memref<16x512xf32, #tpu.memory_space<vmem>>, vector<16x512xf32>,
    %c0_i32_8 = arith.constant 0 : i32
    %10 = arith.cmpi eq, %arg1, %c0_i32_8 : i32
    %11 = arith.extui %10 : i1 to i32
    %c0_i32_9 = arith.constant 0 : i32
    %12 = arith.cmpi ne, %11, %c0_i32_9 : i32
    scf.if %12 {
      %c0_10 = arith.constant 0 : index
      %c0_11 = arith.constant 0 : index
      %13 = vector.load %arg12[%c0_10, %c0_11] : memref<16x512xf32, #tpu.memory_space<vmem>>, vector<16x512xf32>
      %c0_12 = arith.constant 0 : index
      %c0_13 = arith.constant 0 : index
      %14 = vector.load %arg3[%c0_12, %c0_13] : memref<16x1xf32, #tpu.memory_space<vmem>>, vector<16x1xf32>
      %c0_14 = arith.constant 0 : index
      %c0_15 = arith.constant 0 : index
      %15 = vector.load %arg5[%c0_14, %c0_15] : memref<1x512xf32, #tpu.memory_space<vmem>>, vector<1x512xf32>
      %16 = vector.broadcast %14 : vector<16x1xf32> to vector<16x512xf32>
      %17 = vector.broadcast %15 : vector<1x512xf32> to vector<16x512xf32>
      %18 = arith.mulf %16, %17 : vector<16x512xf32>
      %19 = arith.addf %13, %18 : vector<16x512xf32>
      %c0_16 = arith.constant 0 : index
      %c0_17 = arith.constant 0 : index
      %20 = vector.load %arg6[%c0_16, %c0_17] : memref<1x512xf32, #tpu.memory_space<vmem>>, vector<1x512xf32>
      %21 = vector.broadcast %20 : vector<1x512xf32> to vector<16x512xf32>
      %22 = arith.addf %19, %21 : vector<16x512xf32>
      %cst_18 = arith.constant 0.00999999977 : f32
      %23 = vector.broadcast %cst_18 : f32 to vector<16x512xf32>
      %24 = arith.mulf %23, %22 : vector<16x512xf32>
      %25 = arith.maximumf %22, %24 : vector<16x512xf32>
      %26 = arith.truncf %25 : vector<16x512xf32> to vector<16x512xbf16>
      %c0_19 = arith.constant 0 : index
      %c0_20 = arith.constant 0 : index
      %27 = vector.load %arg7[%c0_19, %c0_20] : memref<512x256xbf16, #tpu.memory_space<vmem>>, vector<512x256xbf16>
      %cst_21 = arith.constant dense<0.000000e+00> : vector<16x256xf32>
      %28 = tpu.matmul %26, %27, %cst_21 {dimension_numbers = #tpu.dot_dimension_numbers<[1], [0], [0], [1], [0, 0, 1, 1], [], []>} : vector<16x512xbf16>, vector<512x256xbf16>, vector<16x256xf32> -> vector<16x256xf32>
      %c0_22 = arith.constant 0 : index
      %c0_23 = arith.constant 0 : index
      %29 = vector.load %arg8[%c0_22, %c0_23] : memref<1x256xf32, #tpu.memory_space<vmem>>, vector<1x256xf32>
      %30 = vector.broadcast %29 : vector<1x256xf32> to vector<16x256xf32>
      %31 = arith.addf %28, %30 : vector<16x256xf32>
      %cst_24 = arith.constant 0.00999999977 : f32
      %32 = vector.broadcast %cst_24 : f32 to vector<16x256xf32>
      %33 = arith.mulf %32, %31 : vector<16x256xf32>
      %34 = arith.maximumf %31, %33 : vector<16x256xf32>
      %c0_25 = arith.constant 0 : index
      %c0_26 = arith.constant 0 : index
      %35 = vector.load %arg9[%c0_25, %c0_26] : memref<1x256xf32, #tpu.memory_space<vmem>>, vector<1x256xf32>
      %36 = vector.broadcast %35 : vector<1x256xf32> to vector<16x256xf32>
      %37 = arith.mulf %34, %36 : vector<16x256xf32>
      %cst_27 = arith.constant dense<0.000000e+00> : vector<16xf32>
      %38 = vector.multi_reduction <add>, %37, %cst_27 [1] : vector<16x256xf32> to vector<16xf32>
      %39 = vector.shape_cast %38 : vector<16xf32> to vector<16x1xf32>
      %c0_28 = arith.constant 0 : index
      %40 = memref.load %arg10[%c0_28] : memref<1xf32, #tpu.memory_space<smem>>
      %41 = vector.broadcast %40 : f32 to vector<16x1xf32>
      %42 = arith.addf %39, %41 : vector<16x1xf32>
      %cst_29 = arith.constant 0.000000e+00 : f32
      %43 = vector.broadcast %cst_29 : f32 to vector<16x1xf32>
      %44 = arith.subf %43, %42 : vector<16x1xf32>
      %45 = math.exp %44 : vector<16x1xf32>
      %cst_30 = arith.constant 1.000000e+00 : f32
      %46 = vector.broadcast %cst_30 : f32 to vector<16x1xf32>
      %47 = arith.addf %46, %45 : vector<16x1xf32>
      %cst_31 = arith.constant 1.000000e+00 : f32
      %48 = vector.broadcast %cst_31 : f32 to vector<16x1xf32>
      %49 = arith.divf %48, %47 : vector<16x1xf32>
      %c0_32 = arith.constant 0 : index
      %c0_33 = arith.constant 0 : index
      %50 = vector.load %arg11[%c0_32, %c0_33] : memref<16x1xf32, #tpu.memory_space<vmem>>, vector<16x1xf32>
      tpu.vector_store %arg11[%c0_32, %c0_33], %49 {strides = array<i32>} : memref<16x1xf32, #tpu.memory_space<vmem>>, vector<16x1xf32>,
    } else {
    }
    return
  }
  func.func @transform_0(%arg0: i32, %arg1: i32) -> (i32, i32) {
    %c0_i32 = arith.constant 0 : i32
    return %arg0, %arg1 : i32, i32
  }
  func.func @transform_1(%arg0: i32, %arg1: i32) -> (i32, i32) {
    %c0_i32 = arith.constant 0 : i32
    %c0_i32_0 = arith.constant 0 : i32
    return %arg0, %c0_i32 : i32, i32
  }
  func.func @transform_2(%arg0: i32, %arg1: i32) -> (i32, i32) {
    %c0_i32 = arith.constant 0 : i32
    %c0_i32_0 = arith.constant 0 : i32
    return %arg1, %c0_i32 : i32, i32
  }
  func.func @transform_3(%arg0: i32, %arg1: i32) -> (i32, i32) {
    %c0_i32 = arith.constant 0 : i32
    %c0_i32_0 = arith.constant 0 : i32
    %c0_i32_1 = arith.constant 0 : i32
    return %c0_i32, %c0_i32_0 : i32, i32
  }
  func.func @transform_4(%arg0: i32, %arg1: i32) -> (i32, i32) {
    %c0_i32 = arith.constant 0 : i32
    %c0_i32_0 = arith.constant 0 : i32
    %c0_i32_1 = arith.constant 0 : i32
    return %c0_i32, %c0_i32_0 : i32, i32
  }
  func.func @transform_5(%arg0: i32, %arg1: i32) -> (i32, i32) {
    %c0_i32 = arith.constant 0 : i32
    %c0_i32_0 = arith.constant 0 : i32
    %c0_i32_1 = arith.constant 0 : i32
    return %c0_i32, %c0_i32_0 : i32, i32
  }
  func.func @transform_6(%arg0: i32, %arg1: i32) -> (i32, i32) {
    %c0_i32 = arith.constant 0 : i32
    %c0_i32_0 = arith.constant 0 : i32
    %c0_i32_1 = arith.constant 0 : i32
    return %c0_i32, %c0_i32_0 : i32, i32
  }
  func.func @transform_7(%arg0: i32, %arg1: i32) -> (i32, i32) {
    %c0_i32 = arith.constant 0 : i32
    %c0_i32_0 = arith.constant 0 : i32
    %c0_i32_1 = arith.constant 0 : i32
    return %c0_i32, %c0_i32_0 : i32, i32
  }
  func.func @transform_8(%arg0: i32, %arg1: i32) -> i32 {
    %c0_i32 = arith.constant 0 : i32
    %c0_i32_0 = arith.constant 0 : i32
    return %c0_i32 : i32
  }
  func.func @transform_9(%arg0: i32, %arg1: i32) -> (i32, i32) {
    %c0_i32 = arith.constant 0 : i32
    %c0_i32_0 = arith.constant 0 : i32
    return %arg0, %c0_i32 : i32, i32
  }
}

module attributes {stable_mosaic.version = 11 : i64} {
  func.func @discriminator_kernel(%arg0: i32, %arg1: i32, %arg2: memref<16x256xf32, #tpu.memory_space<vmem>>, %arg3: memref<16x1xf32, #tpu.memory_space<vmem>>, %arg4: memref<256x512xbf16, #tpu.memory_space<vmem>>, %arg5: memref<1x512xf32, #tpu.memory_space<vmem>>, %arg6: memref<1x512xf32, #tpu.memory_space<vmem>>, %arg7: memref<512x256xbf16, #tpu.memory_space<vmem>>, %arg8: memref<1x256xf32, #tpu.memory_space<vmem>>, %arg9: memref<1x256xf32, #tpu.memory_space<vmem>>, %arg10: memref<1xf32, #tpu.memory_space<smem>>, %arg11: memref<16x1xf32, #tpu.memory_space<vmem>>, %arg12: memref<16x512xf32, #tpu.memory_space<vmem>>) attributes {dimension_semantics = [#tpu.dimension_semantics<parallel>, #tpu.dimension_semantics<arbitrary>], iteration_bounds = array<i64: 4, 1>, scalar_prefetch = 0 : i64, scratch_operands = 1 : i64, tpu.core_type = #tpu.core_type<tc>, window_params = [{transform_indices = @transform_0, window_bounds = array<i64: 16, 256>}, {transform_indices = @transform_1, window_bounds = array<i64: 16, 1>}, {transform_indices = @transform_2, window_bounds = array<i64: 256, 512>}, {pipeline_mode = #tpu.pipeline_mode<synchronous>, transform_indices = @transform_3, window_bounds = array<i64: 1, 512>}, {pipeline_mode = #tpu.pipeline_mode<synchronous>, transform_indices = @transform_4, window_bounds = array<i64: 1, 512>}, {pipeline_mode = #tpu.pipeline_mode<synchronous>, transform_indices = @transform_5, window_bounds = array<i64: 512, 256>}, {pipeline_mode = #tpu.pipeline_mode<synchronous>, transform_indices = @transform_6, window_bounds = array<i64: 1, 256>}, {pipeline_mode = #tpu.pipeline_mode<synchronous>, transform_indices = @transform_7, window_bounds = array<i64: 1, 256>}, {transform_indices = @transform_8, window_bounds = array<i64: 1>}, {transform_indices = @transform_9, window_bounds = array<i64: 16, 1>}]} {
    %c0_i32 = arith.constant 0 : i32
    %0 = arith.cmpi eq, %arg1, %c0_i32 : i32
    %1 = arith.extui %0 : i1 to i32
    %c0_i32_0 = arith.constant 0 : i32
    %2 = arith.cmpi ne, %1, %c0_i32_0 : i32
    scf.if %2 {
      %cst_10 = arith.constant 0.000000e+00 : f32
      %13 = vector.broadcast %cst_10 : f32 to vector<16x512xf32>
      %c0_11 = arith.constant 0 : index
      %c0_12 = arith.constant 0 : index
      %14 = vector.load %arg12[%c0_11, %c0_12] : memref<16x512xf32, #tpu.memory_space<vmem>>, vector<16x512xf32>
      tpu.vector_store %arg12[%c0_11, %c0_12], %13 {strides = array<i32>} : memref<16x512xf32, #tpu.memory_space<vmem>>, vector<16x512xf32>,
    } else {
    }
    %c0 = arith.constant 0 : index
    %c0_1 = arith.constant 0 : index
    %3 = vector.load %arg12[%c0, %c0_1] : memref<16x512xf32, #tpu.memory_space<vmem>>, vector<16x512xf32>
    %c0_2 = arith.constant 0 : index
    %c0_3 = arith.constant 0 : index
    %4 = vector.load %arg2[%c0_2, %c0_3] : memref<16x256xf32, #tpu.memory_space<vmem>>, vector<16x256xf32>
    %5 = arith.truncf %4 : vector<16x256xf32> to vector<16x256xbf16>
    %c0_4 = arith.constant 0 : index
    %c0_5 = arith.constant 0 : index
    %6 = vector.load %arg4[%c0_4, %c0_5] : memref<256x512xbf16, #tpu.memory_space<vmem>>, vector<256x512xbf16>
    %cst = arith.constant dense<0.000000e+00> : vector<16x512xf32>
    %7 = tpu.matmul %5, %6, %cst {dimension_numbers = #tpu.dot_dimension_numbers<[1], [0], [0], [1], [0, 0, 1, 1], [], []>} : vector<16x256xbf16>, vector<256x512xbf16>, vector<16x512xf32> -> vector<16x512xf32>
    %8 = arith.addf %3, %7 : vector<16x512xf32>
    %c0_6 = arith.constant 0 : index
    %c0_7 = arith.constant 0 : index
    %9 = vector.load %arg12[%c0_6, %c0_7] : memref<16x512xf32, #tpu.memory_space<vmem>>, vector<16x512xf32>
    tpu.vector_store %arg12[%c0_6, %c0_7], %8 {strides = array<i32>} : memref<16x512xf32, #tpu.memory_space<vmem>>, vector<16x512xf32>,
    %c0_i32_8 = arith.constant 0 : i32
    %10 = arith.cmpi eq, %arg1, %c0_i32_8 : i32
    %11 = arith.extui %10 : i1 to i32
    %c0_i32_9 = arith.constant 0 : i32
    %12 = arith.cmpi ne, %11, %c0_i32_9 : i32
    scf.if %12 {
      %c0_10 = arith.constant 0 : index
      %c0_11 = arith.constant 0 : index
      %13 = vector.load %arg12[%c0_10, %c0_11] : memref<16x512xf32, #tpu.memory_space<vmem>>, vector<16x512xf32>
      %c0_12 = arith.constant 0 : index
      %c0_13 = arith.constant 0 : index
      %14 = vector.load %arg3[%c0_12, %c0_13] : memref<16x1xf32, #tpu.memory_space<vmem>>, vector<16x1xf32>
      %c0_14 = arith.constant 0 : index
      %c0_15 = arith.constant 0 : index
      %15 = vector.load %arg5[%c0_14, %c0_15] : memref<1x512xf32, #tpu.memory_space<vmem>>, vector<1x512xf32>
      %16 = vector.broadcast %14 : vector<16x1xf32> to vector<16x512xf32>
      %17 = vector.broadcast %15 : vector<1x512xf32> to vector<16x512xf32>
      %18 = arith.mulf %16, %17 : vector<16x512xf32>
      %19 = arith.addf %13, %18 : vector<16x512xf32>
      %c0_16 = arith.constant 0 : index
      %c0_17 = arith.constant 0 : index
      %20 = vector.load %arg6[%c0_16, %c0_17] : memref<1x512xf32, #tpu.memory_space<vmem>>, vector<1x512xf32>
      %21 = vector.broadcast %20 : vector<1x512xf32> to vector<16x512xf32>
      %22 = arith.addf %19, %21 : vector<16x512xf32>
      %cst_18 = arith.constant 0.00999999977 : f32
      %23 = vector.broadcast %cst_18 : f32 to vector<16x512xf32>
      %24 = arith.mulf %23, %22 : vector<16x512xf32>
      %25 = arith.maximumf %22, %24 : vector<16x512xf32>
      %26 = arith.truncf %25 : vector<16x512xf32> to vector<16x512xbf16>
      %c0_19 = arith.constant 0 : index
      %c0_20 = arith.constant 0 : index
      %27 = vector.load %arg7[%c0_19, %c0_20] : memref<512x256xbf16, #tpu.memory_space<vmem>>, vector<512x256xbf16>
      %cst_21 = arith.constant dense<0.000000e+00> : vector<16x256xf32>
      %28 = tpu.matmul %26, %27, %cst_21 {dimension_numbers = #tpu.dot_dimension_numbers<[1], [0], [0], [1], [0, 0, 1, 1], [], []>} : vector<16x512xbf16>, vector<512x256xbf16>, vector<16x256xf32> -> vector<16x256xf32>
      %c0_22 = arith.constant 0 : index
      %c0_23 = arith.constant 0 : index
      %29 = vector.load %arg8[%c0_22, %c0_23] : memref<1x256xf32, #tpu.memory_space<vmem>>, vector<1x256xf32>
      %30 = vector.broadcast %29 : vector<1x256xf32> to vector<16x256xf32>
      %31 = arith.addf %28, %30 : vector<16x256xf32>
      %cst_24 = arith.constant 0.00999999977 : f32
      %32 = vector.broadcast %cst_24 : f32 to vector<16x256xf32>
      %33 = arith.mulf %32, %31 : vector<16x256xf32>
      %34 = arith.maximumf %31, %33 : vector<16x256xf32>
      %c0_25 = arith.constant 0 : index
      %c0_26 = arith.constant 0 : index
      %35 = vector.load %arg9[%c0_25, %c0_26] : memref<1x256xf32, #tpu.memory_space<vmem>>, vector<1x256xf32>
      %36 = vector.broadcast %35 : vector<1x256xf32> to vector<16x256xf32>
      %37 = arith.mulf %34, %36 : vector<16x256xf32>
      %cst_27 = arith.constant dense<0.000000e+00> : vector<16xf32>
      %38 = vector.multi_reduction <add>, %37, %cst_27 [1] : vector<16x256xf32> to vector<16xf32>
      %39 = vector.shape_cast %38 : vector<16xf32> to vector<16x1xf32>
      %c0_28 = arith.constant 0 : index
      %40 = memref.load %arg10[%c0_28] : memref<1xf32, #tpu.memory_space<smem>>
      %41 = vector.broadcast %40 : f32 to vector<16x1xf32>
      %42 = arith.addf %39, %41 : vector<16x1xf32>
      %cst_29 = arith.constant 0.000000e+00 : f32
      %43 = vector.broadcast %cst_29 : f32 to vector<16x1xf32>
      %44 = arith.subf %43, %42 : vector<16x1xf32>
      %45 = math.exp %44 : vector<16x1xf32>
      %cst_30 = arith.constant 1.000000e+00 : f32
      %46 = vector.broadcast %cst_30 : f32 to vector<16x1xf32>
      %47 = arith.addf %46, %45 : vector<16x1xf32>
      %cst_31 = arith.constant 1.000000e+00 : f32
      %48 = vector.broadcast %cst_31 : f32 to vector<16x1xf32>
      %49 = arith.divf %48, %47 : vector<16x1xf32>
      %c0_32 = arith.constant 0 : index
      %c0_33 = arith.constant 0 : index
      %50 = vector.load %arg11[%c0_32, %c0_33] : memref<16x1xf32, #tpu.memory_space<vmem>>, vector<16x1xf32>
      tpu.vector_store %arg11[%c0_32, %c0_33], %49 {strides = array<i32>} : memref<16x1xf32, #tpu.memory_space<vmem>>, vector<16x1xf32>,
    } else {
    }
    return
  }
  func.func @transform_0(%arg0: i32, %arg1: i32) -> (i32, i32) {
    %c0_i32 = arith.constant 0 : i32
    return %arg0, %arg1 : i32, i32
  }
  func.func @transform_1(%arg0: i32, %arg1: i32) -> (i32, i32) {
    %c0_i32 = arith.constant 0 : i32
    %c0_i32_0 = arith.constant 0 : i32
    return %arg0, %c0_i32 : i32, i32
  }
  func.func @transform_2(%arg0: i32, %arg1: i32) -> (i32, i32) {
    %c0_i32 = arith.constant 0 : i32
    %c0_i32_0 = arith.constant 0 : i32
    return %arg1, %c0_i32 : i32, i32
  }
  func.func @transform_3(%arg0: i32, %arg1: i32) -> (i32, i32) {
    %c0_i32 = arith.constant 0 : i32
    %c0_i32_0 = arith.constant 0 : i32
    %c0_i32_1 = arith.constant 0 : i32
    return %c0_i32, %c0_i32_0 : i32, i32
  }
  func.func @transform_4(%arg0: i32, %arg1: i32) -> (i32, i32) {
    %c0_i32 = arith.constant 0 : i32
    %c0_i32_0 = arith.constant 0 : i32
    %c0_i32_1 = arith.constant 0 : i32
    return %c0_i32, %c0_i32_0 : i32, i32
  }
  func.func @transform_5(%arg0: i32, %arg1: i32) -> (i32, i32) {
    %c0_i32 = arith.constant 0 : i32
    %c0_i32_0 = arith.constant 0 : i32
    %c0_i32_1 = arith.constant 0 : i32
    return %c0_i32, %c0_i32_0 : i32, i32
  }
  func.func @transform_6(%arg0: i32, %arg1: i32) -> (i32, i32) {
    %c0_i32 = arith.constant 0 : i32
    %c0_i32_0 = arith.constant 0 : i32
    %c0_i32_1 = arith.constant 0 : i32
    return %c0_i32, %c0_i32_0 : i32, i32
  }
  func.func @transform_7(%arg0: i32, %arg1: i32) -> (i32, i32) {
    %c0_i32 = arith.constant 0 : i32
    %c0_i32_0 = arith.constant 0 : i32
    %c0_i32_1 = arith.constant 0 : i32
    return %c0_i32, %c0_i32_0 : i32, i32
  }
  func.func @transform_8(%arg0: i32, %arg1: i32) -> i32 {
    %c0_i32 = arith.constant 0 : i32
    %c0_i32_0 = arith.constant 0 : i32
    return %c0_i32 : i32
  }
  func.func @transform_9(%arg0: i32, %arg1: i32) -> (i32, i32) {
    %c0_i32 = arith.constant 0 : i32
    %c0_i32_0 = arith.constant 0 : i32
    return %arg0, %c0_i32 : i32, i32
  }
}

</mosaic_0001>

<llo_original>
// kernel: tpu_custom_call.1
$region0: #{tpu_custom_call.1}
  #allocation0 [shape = 'u32[]', space=smem, size = 0x4, offset = 0x4, fixed_abs, tag = 'smem constant byte address 0x4 - core index']
  #allocation1 [shape = 'u32[144,128]{1,0:T(1,128)}', space=vmem, size = 0x12000, scoped, tag = 'internal scratch']
  #allocation2 [shape = 'f32[16,512]{1,0:T(8,128)}', space=vmem, size = 0x8000, scoped, tag = 'scratch operand']
  #allocation3 [shape = 'f32[1]{0:T(128)S(6)}', space=smem, size = 0x200, scoped, tag = 'scoped memory for tpu_custom_call.1']
  %s0 = inlined_call_operand.hbm [shape: f32[64,256], index: 0, kind: input, shape index: {}]
  %s1 = inlined_call_operand.vmem [shape: f32[64,1], index: 1, kind: input, shape index: {}]
  %s2 = inlined_call_operand.hbm [shape: bf16[256,512], index: 2, kind: input, shape index: {}]
  %s3 = inlined_call_operand.vmem [shape: f32[1,512], index: 3, kind: input, shape index: {}]
  %s4 = inlined_call_operand.vmem [shape: f32[1,512], index: 4, kind: input, shape index: {}]
  %s5 = inlined_call_operand.hbm [shape: bf16[512,256], index: 5, kind: input, shape index: {}]
  %s6 = inlined_call_operand.vmem [shape: f32[1,256], index: 6, kind: input, shape index: {}]
  %s7 = inlined_call_operand.vmem [shape: f32[1,256], index: 7, kind: input, shape index: {}]
  %s8 = inlined_call_operand.<no memory space> [shape: f32[1], index: 8, kind: input, shape index: {}]
  %s9 = inlined_call_operand.vmem [shape: f32[64,1], index: 9, kind: output, shape index: {}]
  %s10 = sld [smem:[#allocation0]]
  $region89: #{tpu_custom_call.1} parent=0
    _
  %s12 = ssub.s32 1, %s10
  %s13 = scalar_select 0, %s12, %s10
  %14 = sst [smem:[#allocation3]] %s8
  $region1: #{tpu_custom_call.1} parent=0
    #allocation4 [shape = 'u8[32768]{0}', space=vmem, size = 0x8000, scoped, tag = 'input window, operand 0']
    #allocation5 [shape = 's32[2]{0}', space=sflag, size = 0x8, scoped, tag = 'scoped memory for tpu_custom_call.1']
    #allocation6 [shape = 'u8[262144]{0}', space=vmem, size = 0x40000, scoped, tag = 'input window, operand 2, single buffered']
    #allocation7 [shape = 's32[1]{0}', space=sflag, size = 0x4, scoped, tag = 'scoped memory for tpu_custom_call.1']
    #allocation8 [shape = 'u8[262144]{0}', space=vmem, size = 0x40000, scoped, tag = 'input window, operand 5, single buffered']
    %15 = vsyncpa [#allocation5], 0
    %s16 = scalar_lea.sflag [#allocation5], 1
    %17 = vsyncpa %s16, 0
    %18 = vsyncpa [#allocation7], 0
    loop: start=0, step=1, limit=6
    $region2: #{tpu_custom_call.1} parent=1 // loop_pre_header
      _
    $region3: #{tpu_custom_call.1} parent=1 // loop_header
      %s20 = sphi 0, %s24
      %p21 = scmp.ge.s32.totalorder %s20, 6
      %s27 = sphi 0, %s39
      %s28 = sphi 0, %s35
      %s29 = sphi 0, %s27
      %s30 = sphi 0, %s28
      %s31 = sphi 0, %s29
      %s32 = sphi 0, %s30
      %s44 = sphi 0, %s46
      %s47 = sphi 0, %s44
      %s48 = sphi 0, %s47
      %s64 = sphi 0, %s48
      %s70 = sphi 0, %s72
      %s73 = sphi 0, %s70
      %s74 = sphi 0, %s73
      %s90 = sphi 0, %s74
      %s96 = sphi 0, %s98
      %s99 = sphi 0, %s96
      %s100 = sphi 0, %s99
      %s116 = sphi 0, %s100
      %s120 = sphi 0, %s120
      %s122 = sphi 0, %s120
      %s123 = sphi 0, %s122
      %s137 = sphi 0, %s123
      %s141 = sphi 0, %s141
      %s143 = sphi 0, %s141
      %s144 = sphi 0, %s143
      %s158 = sphi 0, %s144
      %s162 = sphi 0, %s162
      %s164 = sphi 0, %s162
      %s165 = sphi 0, %s164
      %s179 = sphi 0, %s165
      %s183 = sphi 0, %s183
      %s185 = sphi 0, %s183
      %s186 = sphi 0, %s185
      %s200 = sphi 0, %s186
      %s204 = sphi 0, %s204
      %s206 = sphi 0, %s204
      %s207 = sphi 0, %s206
      %s221 = sphi 0, %s207
      %s225 = sphi 0, %s225
      %s227 = sphi 0, %s225
      %s228 = sphi 0, %s227
      %s242 = sphi 0, %s228
      %s248 = sphi 0, %s250
      %s251 = sphi 0, %s248
      %s252 = sphi 0, %s251
      %s268 = sphi 0, %s252
    $region4: #{tpu_custom_call.1} parent=1 // loop_header_branch
      %23 = sbr.rel (%p21) target = $region8
    $region5: #{tpu_custom_call.1} parent=1 // loop_body
      %s25 = ssub.s32 %s20, 1
      %s26 = ssub.s32 %s20, 2
      %s33 = sadd.s32 1, %s28
      %p34 = scmp.ge.s32.totalorder %s33, 1
      %s35 = scalar_select %p34, 0, %s33
      %s36 = sadd.s32 1, %s27
      %s37 = scalar_select %p34, %s36, %s27
      %p38 = scmp.ge.s32.totalorder %s37, 4
      %s39 = scalar_select %p38, 0, %s37
      %s40 = ssub.s32 %s27, %s39
      %s41 = ssub.s32 %s28, %s35
      %s42 = sor.u32 %s40, %s41
      %p43 = scmp.eq.s32.totalorder %s42, 0
      %s45 = sadd.s32 %s44, 1
      %s46 = scalar_select %p43, %s44, %s45
      %p49 = pneg %p43
      %p50 = scmp.eq.s32.totalorder %s20, 3
      %p51 = por %p49, %p50
      %p52 = scmp.ne.s32.totalorder %s44, %s47
      %p53 = scmp.eq.s32.totalorder %s20, 0
      %p54 = por %p52, %p53
      %p55 = scmp.ne.s32.totalorder %s44, %s47
      %p56 = scmp.eq.s32.totalorder %s25, 3
      %p57 = por %p55, %p56
      %p58 = scmp.ne.s32.totalorder %s47, %s48
      %p59 = scmp.eq.s32.totalorder %s25, 0
      %p60 = por %p58, %p59
      %p61 = scmp.ne.s32.totalorder %s47, %s48
      %p62 = scmp.eq.s32.totalorder %s26, 3
      %p63 = por %p61, %p62
      %p65 = scmp.ne.s32.totalorder %s48, %s64
      %p66 = scmp.eq.s32.totalorder %s26, 0
      %p67 = por %p65, %p66
      %s68 = ssub.s32 %s27, %s39
      %p69 = scmp.eq.s32.totalorder %s68, 0
      %s71 = sadd.s32 %s70, 1
      %s72 = scalar_select %p69, %s70, %s71
      %p75 = pneg %p69
      %p76 = scmp.eq.s32.totalorder %s20, 3
      %p77 = por %p75, %p76
      %p78 = scmp.ne.s32.totalorder %s70, %s73
      %p79 = scmp.eq.s32.totalorder %s20, 0
      %p80 = por %p78, %p79
      %p81 = scmp.ne.s32.totalorder %s70, %s73
      %p82 = scmp.eq.s32.totalorder %s25, 3
      %p83 = por %p81, %p82
      %p84 = scmp.ne.s32.totalorder %s73, %s74
      %p85 = scmp.eq.s32.totalorder %s25, 0
      %p86 = por %p84, %p85
      %p87 = scmp.ne.s32.totalorder %s73, %s74
      %p88 = scmp.eq.s32.totalorder %s26, 3
      %p89 = por %p87, %p88
      %p91 = scmp.ne.s32.totalorder %s74, %s90
      %p92 = scmp.eq.s32.totalorder %s26, 0
      %p93 = por %p91, %p92
      %s94 = ssub.s32 %s28, %s35
      %p95 = scmp.eq.s32.totalorder %s94, 0
      %s97 = sadd.s32 %s96, 1
      %s98 = scalar_select %p95, %s96, %s97
      %p101 = pneg %p95
      %p102 = scmp.eq.s32.totalorder %s20, 3
      %p103 = por %p101, %p102
      %p104 = scmp.ne.s32.totalorder %s96, %s99
      %p105 = scmp.eq.s32.totalorder %s20, 0
      %p106 = por %p104, %p105
      %p107 = scmp.ne.s32.totalorder %s96, %s99
      %p108 = scmp.eq.s32.totalorder %s25, 3
      %p109 = por %p107, %p108
      %p110 = scmp.ne.s32.totalorder %s99, %s100
      %p111 = scmp.eq.s32.totalorder %s25, 0
      %p112 = por %p110, %p111
      %p113 = scmp.ne.s32.totalorder %s99, %s100
      %p114 = scmp.eq.s32.totalorder %s26, 3
      %p115 = por %p113, %p114
      %p117 = scmp.ne.s32.totalorder %s100, %s116
      %p118 = scmp.eq.s32.totalorder %s26, 0
      %p119 = por %p117, %p118
      %s121 = sadd.s32 %s120, 1
      %p124 = scmp.eq.s32.totalorder %s20, 3
      %p125 = scmp.ne.s32.totalorder %s120, %s122
      %p126 = scmp.eq.s32.totalorder %s20, 0
      %p127 = por %p125, %p126
      %p128 = scmp.ne.s32.totalorder %s120, %s122
      %p129 = scmp.eq.s32.totalorder %s25, 3
      %p130 = por %p128, %p129
      %p131 = scmp.ne.s32.totalorder %s122, %s123
      %p132 = scmp.eq.s32.totalorder %s25, 0
      %p133 = por %p131, %p132
      %p134 = scmp.ne.s32.totalorder %s122, %s123
      %p135 = scmp.eq.s32.totalorder %s26, 3
      %p136 = por %p134, %p135
      %p138 = scmp.ne.s32.totalorder %s123, %s137
      %p139 = scmp.eq.s32.totalorder %s26, 0
      %p140 = por %p138, %p139
      %s142 = sadd.s32 %s141, 1
      %p145 = scmp.eq.s32.totalorder %s20, 3
      %p146 = scmp.ne.s32.totalorder %s141, %s143
      %p147 = scmp.eq.s32.totalorder %s20, 0
      %p148 = por %p146, %p147
      %p149 = scmp.ne.s32.totalorder %s141, %s143
      %p150 = scmp.eq.s32.totalorder %s25, 3
      %p151 = por %p149, %p150
      %p152 = scmp.ne.s32.totalorder %s143, %s144
      %p153 = scmp.eq.s32.totalorder %s25, 0
      %p154 = por %p152, %p153
      %p155 = scmp.ne.s32.totalorder %s143, %s144
      %p156 = scmp.eq.s32.totalorder %s26, 3
      %p157 = por %p155, %p156
      %p159 = scmp.ne.s32.totalorder %s144, %s158
      %p160 = scmp.eq.s32.totalorder %s26, 0
      %p161 = por %p159, %p160
      %s163 = sadd.s32 %s162, 1
      %p166 = scmp.eq.s32.totalorder %s20, 3
      %p167 = scmp.ne.s32.totalorder %s162, %s164
      %p168 = scmp.eq.s32.totalorder %s20, 0
      %p169 = por %p167, %p168
      %p170 = scmp.ne.s32.totalorder %s162, %s164
      %p171 = scmp.eq.s32.totalorder %s25, 3
      %p172 = por %p170, %p171
      %p173 = scmp.ne.s32.totalorder %s164, %s165
      %p174 = scmp.eq.s32.totalorder %s25, 0
      %p175 = por %p173, %p174
      %p176 = scmp.ne.s32.totalorder %s164, %s165
      %p177 = scmp.eq.s32.totalorder %s26, 3
      %p178 = por %p176, %p177
      %p180 = scmp.ne.s32.totalorder %s165, %s179
      %p181 = scmp.eq.s32.totalorder %s26, 0
      %p182 = por %p180, %p181
      %s184 = sadd.s32 %s183, 1
      %p187 = scmp.eq.s32.totalorder %s20, 3
      %p188 = scmp.ne.s32.totalorder %s183, %s185
      %p189 = scmp.eq.s32.totalorder %s20, 0
      %p190 = por %p188, %p189
      %p191 = scmp.ne.s32.totalorder %s183, %s185
      %p192 = scmp.eq.s32.totalorder %s25, 3
      %p193 = por %p191, %p192
      %p194 = scmp.ne.s32.totalorder %s185, %s186
      %p195 = scmp.eq.s32.totalorder %s25, 0
      %p196 = por %p194, %p195
      %p197 = scmp.ne.s32.totalorder %s185, %s186
      %p198 = scmp.eq.s32.totalorder %s26, 3
      %p199 = por %p197, %p198
      %p201 = scmp.ne.s32.totalorder %s186, %s200
      %p202 = scmp.eq.s32.totalorder %s26, 0
      %p203 = por %p201, %p202
      %s205 = sadd.s32 %s204, 1
      %p208 = scmp.eq.s32.totalorder %s20, 3
      %p209 = scmp.ne.s32.totalorder %s204, %s206
      %p210 = scmp.eq.s32.totalorder %s20, 0
      %p211 = por %p209, %p210
      %p212 = scmp.ne.s32.totalorder %s204, %s206
      %p213 = scmp.eq.s32.totalorder %s25, 3
      %p214 = por %p212, %p213
      %p215 = scmp.ne.s32.totalorder %s206, %s207
      %p216 = scmp.eq.s32.totalorder %s25, 0
      %p217 = por %p215, %p216
      %p218 = scmp.ne.s32.totalorder %s206, %s207
      %p219 = scmp.eq.s32.totalorder %s26, 3
      %p220 = por %p218, %p219
      %p222 = scmp.ne.s32.totalorder %s207, %s221
      %p223 = scmp.eq.s32.totalorder %s26, 0
      %p224 = por %p222, %p223
      %s226 = sadd.s32 %s225, 1
      %p229 = scmp.eq.s32.totalorder %s20, 3
      %p230 = scmp.ne.s32.totalorder %s225, %s227
      %p231 = scmp.eq.s32.totalorder %s20, 0
      %p232 = por %p230, %p231
      %p233 = scmp.ne.s32.totalorder %s225, %s227
      %p234 = scmp.eq.s32.totalorder %s25, 3
      %p235 = por %p233, %p234
      %p236 = scmp.ne.s32.totalorder %s227, %s228
      %p237 = scmp.eq.s32.totalorder %s25, 0
      %p238 = por %p236, %p237
      %p239 = scmp.ne.s32.totalorder %s227, %s228
      %p240 = scmp.eq.s32.totalorder %s26, 3
      %p241 = por %p239, %p240
      %p243 = scmp.ne.s32.totalorder %s228, %s242
      %p244 = scmp.eq.s32.totalorder %s26, 0
      %p245 = por %p243, %p244
      %s246 = ssub.s32 %s27, %s39
      %p247 = scmp.eq.s32.totalorder %s246, 0
      %s249 = sadd.s32 %s248, 1
      %s250 = scalar_select %p247, %s248, %s249
      %p253 = pneg %p247
      %p254 = scmp.eq.s32.totalorder %s20, 3
      %p255 = por %p253, %p254
      %p256 = scmp.ne.s32.totalorder %s248, %s251
      %p257 = scmp.eq.s32.totalorder %s20, 0
      %p258 = por %p256, %p257
      %p259 = scmp.ne.s32.totalorder %s248, %s251
      %p260 = scmp.eq.s32.totalorder %s25, 3
      %p261 = por %p259, %p260
      %p262 = scmp.ne.s32.totalorder %s251, %s252
      %p263 = scmp.eq.s32.totalorder %s25, 0
      %p264 = por %p262, %p263
      %p265 = scmp.ne.s32.totalorder %s251, %s252
      %p266 = scmp.eq.s32.totalorder %s26, 3
      %p267 = por %p265, %p266
      %p269 = scmp.ne.s32.totalorder %s252, %s268
      %p270 = scmp.eq.s32.totalorder %s26, 0
      %p271 = por %p269, %p270
      %p272 = scmp.le.s32.totalorder 1, %s20
      %p273 = scmp.lt.s32.totalorder %s20, 5
      %p274 = pnand %p272, %p273
      %p275 = pneg %p274
      // Predicated region
      $region9: #{tpu_custom_call.1} parent=5 // pred_check
        _
      $region10: #{tpu_custom_call.1} parent=5 // pred_check_branch
        %277 = sbr.rel (%p274) target = $region12
      $region11: #{tpu_custom_call.1} parent=5 // pred_region
        %s278 = ssub.s32 %s20, 1
        // Predicated region
        $region13: #{tpu_custom_call.1} parent=11 // pred_check
          %p279 = pneg %p112
        $region14: #{tpu_custom_call.1} parent=11 // pred_check_branch
          %281 = sbr.rel (%p279) target = $region16
        $region15: #{tpu_custom_call.1} parent=11 // pred_region
          %s282 = smul.u32 32, %s30
          %s284 = ssub.s32 8192, 8192
          %285 = vsyncadd [#allocation7], %s284
          %s286 = smul.addr %s282, 4
          %s287 = smul.addr %s286, 64
          %s288 = scalar_lea.hbm %s2, %s287
          %s289 = sshll.u32 [#allocation6], 4
          %s290 = int_to_ptr.vmem [resolvable:$true] %s289
          %295 = dma.hbm_to_vmem [thread:$0]  %s288, 8192, %s290, [#allocation7], 256, 256, 16
        $region16: #{tpu_custom_call.1} parent=11 // pred_fallthru
          _
        // Predicated region
        $region17: #{tpu_custom_call.1} parent=11 // pred_check
          %p296 = pneg %p133
        $region18: #{tpu_custom_call.1} parent=11 // pred_check_branch
          %298 = sbr.rel (%p296) target = $region20
        $region19: #{tpu_custom_call.1} parent=11 // pred_region
          _
        $region20: #{tpu_custom_call.1} parent=11 // pred_fallthru
          _
        // Predicated region
        $region21: #{tpu_custom_call.1} parent=11 // pred_check
          %p299 = pneg %p154
        $region22: #{tpu_custom_call.1} parent=11 // pred_check_branch
          %301 = sbr.rel (%p299) target = $region24
        $region23: #{tpu_custom_call.1} parent=11 // pred_region
          _
        $region24: #{tpu_custom_call.1} parent=11 // pred_fallthru
          _
        // Predicated region
        $region25: #{tpu_custom_call.1} parent=11 // pred_check
          %p302 = pneg %p175
        $region26: #{tpu_custom_call.1} parent=11 // pred_check_branch
          %304 = sbr.rel (%p302) target = $region28
        $region27: #{tpu_custom_call.1} parent=11 // pred_region
          %s306 = ssub.s32 8192, 8192
          %307 = vsyncadd [#allocation7], %s306
          %s308 = sshll.u32 [#allocation8], 4
          %s309 = int_to_ptr.vmem [resolvable:$true] %s308
          %314 = dma.hbm_to_vmem [thread:$0]  %s5, 8192, %s309, [#allocation7], 128, 128, 8
        $region28: #{tpu_custom_call.1} parent=11 // pred_fallthru
          _
        // Predicated region
        $region29: #{tpu_custom_call.1} parent=11 // pred_check
          %p315 = pneg %p196
        $region30: #{tpu_custom_call.1} parent=11 // pred_check_branch
          %317 = sbr.rel (%p315) target = $region32
        $region31: #{tpu_custom_call.1} parent=11 // pred_region
          _
        $region32: #{tpu_custom_call.1} parent=11 // pred_fallthru
          _
        // Predicated region
        $region33: #{tpu_custom_call.1} parent=11 // pred_check
          %p318 = pneg %p217
        $region34: #{tpu_custom_call.1} parent=11 // pred_check_branch
          %320 = sbr.rel (%p318) target = $region36
        $region35: #{tpu_custom_call.1} parent=11 // pred_region
          _
        $region36: #{tpu_custom_call.1} parent=11 // pred_fallthru
          _
        // Predicated region
        $region37: #{tpu_custom_call.1} parent=11 // pred_check
          %p321 = pneg %p238
        $region38: #{tpu_custom_call.1} parent=11 // pred_check_branch
          %323 = sbr.rel (%p321) target = $region40
        $region39: #{tpu_custom_call.1} parent=11 // pred_region
          _
        $region40: #{tpu_custom_call.1} parent=11 // pred_fallthru
          _
      $region12: #{tpu_custom_call.1} parent=5 // pred_fallthru
        _
      %p324 = scmp.lt.s32.totalorder %s20, 4
      // Predicated region
      $region41: #{tpu_custom_call.1} parent=5 // pred_check
        %p325 = pneg %p324
      $region42: #{tpu_custom_call.1} parent=5 // pred_check_branch
        %327 = sbr.rel (%p325) target = $region44
      $region43: #{tpu_custom_call.1} parent=5 // pred_region
        // Predicated region
        $region45: #{tpu_custom_call.1} parent=43 // pred_check
          %p328 = pneg %p54
        $region46: #{tpu_custom_call.1} parent=43 // pred_check_branch
          %330 = sbr.rel (%p328) target = $region48
        $region47: #{tpu_custom_call.1} parent=43 // pred_region
          %s331 = sand.u32 %s44, 1
          %s332 = scalar_lea.sflag [#allocation5], %s331
          %s333 = sand.u32 %s44, 1
          %s334 = smul.addr %s333, 32
          %s335 = scalar_lea.vmem [#allocation4], %s334
          %s336 = smul.u32 2, %s27
          %s337 = smul.u32 2, %s28
          %s339 = ssub.s32 512, 512
          %340 = vsyncadd %s332, %s339
          %s341 = smul.addr %s336, 2
          %s342 = sadd.s32 %s337, %s341
          %s343 = smul.addr %s342, 128
          %s344 = scalar_lea.hbm %s0, %s343
          %s345 = sshll.u32 %s335, 4
          %s346 = int_to_ptr.vmem [resolvable:$true] %s345
          %351 = dma.hbm_to_vmem [thread:$0]  %s344, 512, %s346, %s332, 256, 256, 16
        $region48: #{tpu_custom_call.1} parent=43 // pred_fallthru
          _
        // Predicated region
        $region49: #{tpu_custom_call.1} parent=43 // pred_check
          %p352 = pneg %p80
        $region50: #{tpu_custom_call.1} parent=43 // pred_check_branch
          %354 = sbr.rel (%p352) target = $region52
        $region51: #{tpu_custom_call.1} parent=43 // pred_region
          %s355 = smul.u32 2, %s27
          %p356 = scmp.lt.s32.totalorder %s355, 7
          %s357 = scalar_select %p356, %s355, 7
          %s358 = smul.addr %s357, 8
          %s359 = scalar_lea.vmem %s1, %s358
          %s360 = smul.u32 2, %s27
        $region52: #{tpu_custom_call.1} parent=43 // pred_fallthru
          _
      $region44: #{tpu_custom_call.1} parent=5 // pred_fallthru
        _
      %p361 = scmp.le.s32.totalorder 1, %s20
      %p362 = scmp.lt.s32.totalorder %s20, 5
      %p363 = pnand %p361, %p362
      %p364 = pneg %p363
      // Predicated region
      $region53: #{tpu_custom_call.1} parent=5 // pred_check
        _
      $region54: #{tpu_custom_call.1} parent=5 // pred_check_branch
        %366 = sbr.rel (%p363) target = $region56
      $region55: #{tpu_custom_call.1} parent=5 // pred_region
        %s367 = ssub.s32 %s20, 1
        %s368 = sand.u32 %s47, 1
        %s369 = scalar_lea.sflag [#allocation5], %s368
        %s370 = sand.u32 %s47, 1
        %s371 = smul.addr %s370, 32
        %s372 = scalar_lea.vmem [#allocation4], %s371
        // Predicated region
        $region57: #{tpu_custom_call.1} parent=55 // pred_check
          %p373 = pneg %p60
        $region58: #{tpu_custom_call.1} parent=55 // pred_check_branch
          %375 = sbr.rel (%p373) target = $region60
        $region59: #{tpu_custom_call.1} parent=55 // pred_region
          %376 = dma.done %s369, 512
        $region60: #{tpu_custom_call.1} parent=55 // pred_fallthru
          _
        // Predicated region
        $region61: #{tpu_custom_call.1} parent=55 // pred_check
          %p377 = pneg %p112
        $region62: #{tpu_custom_call.1} parent=55 // pred_check_branch
          %379 = sbr.rel (%p377) target = $region64
        $region63: #{tpu_custom_call.1} parent=55 // pred_region
          %380 = dma.done [#allocation7], 8192
        $region64: #{tpu_custom_call.1} parent=55 // pred_fallthru
          _
        // Predicated region
        $region65: #{tpu_custom_call.1} parent=55 // pred_check
          %p381 = pneg %p175
        $region66: #{tpu_custom_call.1} parent=55 // pred_check_branch
          %383 = sbr.rel (%p381) target = $region68
        $region67: #{tpu_custom_call.1} parent=55 // pred_region
          %384 = dma.done [#allocation7], 8192
        $region68: #{tpu_custom_call.1} parent=55 // pred_fallthru
          _
        %s385 = sand.u32 %s47, 1
        %s386 = scalar_lea.sflag [#allocation5], %s385
        %s387 = sand.u32 %s47, 1
        %s388 = smul.addr %s387, 32
        %s389 = scalar_lea.vmem [#allocation4], %s388
        %p390 = pneg %p60
        %p391 = pneg %p57
        %s392 = smul.u32 2, %s29
        %p393 = scmp.lt.s32.totalorder %s392, 7
        %s394 = scalar_select %p393, %s392, 7
        %s395 = smul.addr %s394, 8
        %s396 = scalar_lea.vmem %s1, %s395
        %p397 = pneg %p86
        %p398 = pneg %p83
        %p399 = pneg %p112
        %p400 = pneg %p109
        %p401 = pneg %p133
        %p402 = pneg %p130
        %p403 = pneg %p154
        %p404 = pneg %p151
        %p405 = pneg %p175
        %p406 = pneg %p172
        %p407 = pneg %p196
        %p408 = pneg %p193
        %p409 = pneg %p217
        %p410 = pneg %p214
        %p411 = pneg %p238
        %p412 = pneg %p235
        %p413 = pneg %p264
        %p414 = pneg %p261
        %s415 = smul.u32 2, %s29
        %p416 = scmp.lt.s32.totalorder %s415, 7
        %s417 = scalar_select %p416, %s415, 7
        %s418 = smul.addr %s417, 8
        %s419 = scalar_lea.vmem %s9, %s418
        %s420 = smul.u32 2, %s29
        %s421 = smul.u32 2, %s30
        %s422 = smul.u32 2, %s29
        %p423 = scmp.lt.s32.totalorder %s422, 7
        %s424 = scalar_select %p423, %s422, 7
        %s425 = smul.addr %s424, 8
        %s426 = scalar_lea.vmem %s1, %s425
        %s427 = smul.u32 2, %s29
        %s428 = smul.u32 32, %s30
        %s429 = smul.u32 2, %s29
        %p430 = scmp.lt.s32.totalorder %s429, 7
        %s431 = scalar_select %p430, %s429, 7
        %s432 = smul.addr %s431, 8
        %s433 = scalar_lea.vmem %s9, %s432
        %s434 = smul.u32 2, %s29
        %p435 = scmp.eq.s32.totalorder %s30, 0
        // Predicated region
        $region69: #{tpu_custom_call.1} parent=55 // pred_check
          %p436 = pneg %p435
        $region70: #{tpu_custom_call.1} parent=55 // pred_check_branch
          %438 = sbr.rel (%p436) target = $region72
        $region71: #{tpu_custom_call.1} parent=55 // pred_region
          %439 = vst [vmem:[#allocation2] sm:$0xff] 0.0
          %440 = vst [vmem:[#allocation2 + $0x8] sm:$0xff] 0.0
          %441 = vst [vmem:[#allocation2 + $0x10] sm:$0xff] 0.0
          %442 = vst [vmem:[#allocation2 + $0x18] sm:$0xff] 0.0
          %443 = vst [vmem:[#allocation2 + $0x20] sm:$0xff] 0.0
          %444 = vst [vmem:[#allocation2 + $0x28] sm:$0xff] 0.0
          %445 = vst [vmem:[#allocation2 + $0x30] sm:$0xff] 0.0
          %446 = vst [vmem:[#allocation2 + $0x38] sm:$0xff] 0.0
        $region72: #{tpu_custom_call.1} parent=55 // pred_fallthru
          _
        %v447 = vld [vmem:[#allocation2] sm:$0xff]
        %v448 = vld [vmem:[#allocation2 + $0x8] sm:$0xff]
        %v449 = vld [vmem:[#allocation2 + $0x10] sm:$0xff]
        %v450 = vld [vmem:[#allocation2 + $0x18] sm:$0xff]
        %v451 = vld [vmem:[#allocation2 + $0x20] sm:$0xff]
        %v452 = vld [vmem:[#allocation2 + $0x28] sm:$0xff]
        %v453 = vld [vmem:[#allocation2 + $0x30] sm:$0xff]
        %v454 = vld [vmem:[#allocation2 + $0x38] sm:$0xff]
        %v455 = vld [vmem:[%s372] sm:$0xff]
        %v456 = vld [vmem:[%s372 + $0x8] sm:$0xff]
        %v457 = vld [vmem:[%s372 + $0x10] sm:$0xff]
        %v458 = vld [vmem:[%s372 + $0x18] sm:$0xff]
        %v459 = vpack.c.bf16 %v457, %v455
        %v460 = vpack.c.bf16 %v458, %v456
        %v461 = vld [vmem:[#allocation6] sm:$0xff]
        %v462 = vld [vmem:[#allocation6 + $0x8] sm:$0xff]
        %v463 = vld [vmem:[#allocation6 + $0x10] sm:$0xff]
        %v464 = vld [vmem:[#allocation6 + $0x18] sm:$0xff]
        %v465 = vld [vmem:[#allocation6 + $0x20] sm:$0xff]
        %v466 = vld [vmem:[#allocation6 + $0x28] sm:$0xff]
        %v467 = vld [vmem:[#allocation6 + $0x30] sm:$0xff]
        %v468 = vld [vmem:[#allocation6 + $0x38] sm:$0xff]
        %v469 = vld [vmem:[#allocation6 + $0x40] sm:$0xff]
        %v470 = vld [vmem:[#allocation6 + $0x48] sm:$0xff]
        %v471 = vld [vmem:[#allocation6 + $0x50] sm:$0xff]
        %v472 = vld [vmem:[#allocation6 + $0x58] sm:$0xff]
        %v473 = vld [vmem:[#allocation6 + $0x60] sm:$0xff]
        %v474 = vld [vmem:[#allocation6 + $0x68] sm:$0xff]
        %v475 = vld [vmem:[#allocation6 + $0x70] sm:$0xff]
        %v476 = vld [vmem:[#allocation6 + $0x78] sm:$0xff]
        %v477 = vld [vmem:[#allocation6 + $0x80] sm:$0xff]
        %v478 = vld [vmem:[#allocation6 + $0x88] sm:$0xff]
        %v479 = vld [vmem:[#allocation6 + $0x90] sm:$0xff]
        %v480 = vld [vmem:[#allocation6 + $0x98] sm:$0xff]
        %v481 = vld [vmem:[#allocation6 + $0xa0] sm:$0xff]
        %v482 = vld [vmem:[#allocation6 + $0xa8] sm:$0xff]
        %v483 = vld [vmem:[#allocation6 + $0xb0] sm:$0xff]
        %v484 = vld [vmem:[#allocation6 + $0xb8] sm:$0xff]
        %v485 = vld [vmem:[#allocation6 + $0xc0] sm:$0xff]
        %v486 = vld [vmem:[#allocation6 + $0xc8] sm:$0xff]
        %v487 = vld [vmem:[#allocation6 + $0xd0] sm:$0xff]
        %v488 = vld [vmem:[#allocation6 + $0xd8] sm:$0xff]
        %v489 = vld [vmem:[#allocation6 + $0xe0] sm:$0xff]
        %v490 = vld [vmem:[#allocation6 + $0xe8] sm:$0xff]
        %v491 = vld [vmem:[#allocation6 + $0xf0] sm:$0xff]
        %v492 = vld [vmem:[#allocation6 + $0xf8] sm:$0xff]
        %v493 = vld [vmem:[#allocation6 + $0x100] sm:$0xff]
        %v494 = vld [vmem:[#allocation6 + $0x108] sm:$0xff]
        %v495 = vld [vmem:[#allocation6 + $0x110] sm:$0xff]
        %v496 = vld [vmem:[#allocation6 + $0x118] sm:$0xff]
        %v497 = vld [vmem:[#allocation6 + $0x120] sm:$0xff]
        %v498 = vld [vmem:[#allocation6 + $0x128] sm:$0xff]
        %v499 = vld [vmem:[#allocation6 + $0x130] sm:$0xff]
        %v500 = vld [vmem:[#allocation6 + $0x138] sm:$0xff]
        %v501 = vld [vmem:[#allocation6 + $0x140] sm:$0xff]
        %v502 = vld [vmem:[#allocation6 + $0x148] sm:$0xff]
        %v503 = vld [vmem:[#allocation6 + $0x150] sm:$0xff]
        %v504 = vld [vmem:[#allocation6 + $0x158] sm:$0xff]
        %v505 = vld [vmem:[#allocation6 + $0x160] sm:$0xff]
        %v506 = vld [vmem:[#allocation6 + $0x168] sm:$0xff]
        %v507 = vld [vmem:[#allocation6 + $0x170] sm:$0xff]
        %v508 = vld [vmem:[#allocation6 + $0x178] sm:$0xff]
        %v509 = vld [vmem:[#allocation6 + $0x180] sm:$0xff]
        %v510 = vld [vmem:[#allocation6 + $0x188] sm:$0xff]
        %v511 = vld [vmem:[#allocation6 + $0x190] sm:$0xff]
        %v512 = vld [vmem:[#allocation6 + $0x198] sm:$0xff]
        %v513 = vld [vmem:[#allocation6 + $0x1a0] sm:$0xff]
        %v514 = vld [vmem:[#allocation6 + $0x1a8] sm:$0xff]
        %v515 = vld [vmem:[#allocation6 + $0x1b0] sm:$0xff]
        %v516 = vld [vmem:[#allocation6 + $0x1b8] sm:$0xff]
        %v517 = vld [vmem:[#allocation6 + $0x1c0] sm:$0xff]
        %v518 = vld [vmem:[#allocation6 + $0x1c8] sm:$0xff]
        %v519 = vld [vmem:[#allocation6 + $0x1d0] sm:$0xff]
        %v520 = vld [vmem:[#allocation6 + $0x1d8] sm:$0xff]
        %v521 = vld [vmem:[#allocation6 + $0x1e0] sm:$0xff]
        %v522 = vld [vmem:[#allocation6 + $0x1e8] sm:$0xff]
        %v523 = vld [vmem:[#allocation6 + $0x1f0] sm:$0xff]
        %v524 = vld [vmem:[#allocation6 + $0x1f8] sm:$0xff]
        %v589 = vunpack.c.l.b16 %v461
        %v590 = vunpack.c.h.b16 %v461
        %v591 = vunpack.c.l.b16 %v462
        %v592 = vunpack.c.h.b16 %v462
        %v593 = vunpack.c.l.b16 %v463
        %v594 = vunpack.c.h.b16 %v463
        %v595 = vunpack.c.l.b16 %v464
        %v596 = vunpack.c.h.b16 %v464
        %v597 = vunpack.c.l.b16 %v465
        %v598 = vunpack.c.h.b16 %v465
        %v599 = vunpack.c.l.b16 %v466
        %v600 = vunpack.c.h.b16 %v466
        %v601 = vunpack.c.l.b16 %v467
        %v602 = vunpack.c.h.b16 %v467
        %v603 = vunpack.c.l.b16 %v468
        %v604 = vunpack.c.h.b16 %v468
        %v605 = vunpack.c.l.b16 %v469
        %v606 = vunpack.c.h.b16 %v469
        %v607 = vunpack.c.l.b16 %v470
        %v608 = vunpack.c.h.b16 %v470
        %v609 = vunpack.c.l.b16 %v471
        %v610 = vunpack.c.h.b16 %v471
        %v611 = vunpack.c.l.b16 %v472
        %v612 = vunpack.c.h.b16 %v472
        %v613 = vunpack.c.l.b16 %v473
        %v614 = vunpack.c.h.b16 %v473
        %v615 = vunpack.c.l.b16 %v474
        %v616 = vunpack.c.h.b16 %v474
        %v617 = vunpack.c.l.b16 %v475
        %v618 = vunpack.c.h.b16 %v475
        %v619 = vunpack.c.l.b16 %v476
        %v620 = vunpack.c.h.b16 %v476
        %v621 = vunpack.c.l.b16 %v477
        %v622 = vunpack.c.h.b16 %v477
        %v623 = vunpack.c.l.b16 %v478
        %v624 = vunpack.c.h.b16 %v478
        %v625 = vunpack.c.l.b16 %v479
        %v626 = vunpack.c.h.b16 %v479
        %v627 = vunpack.c.l.b16 %v480
        %v628 = vunpack.c.h.b16 %v480
        %v629 = vunpack.c.l.b16 %v481
        %v630 = vunpack.c.h.b16 %v481
        %v631 = vunpack.c.l.b16 %v482
        %v632 = vunpack.c.h.b16 %v482
        %v633 = vunpack.c.l.b16 %v483
        %v634 = vunpack.c.h.b16 %v483
        %v635 = vunpack.c.l.b16 %v484
        %v636 = vunpack.c.h.b16 %v484
        %v637 = vunpack.c.l.b16 %v485
        %v638 = vunpack.c.h.b16 %v485
        %v639 = vunpack.c.l.b16 %v486
        %v640 = vunpack.c.h.b16 %v486
        %v641 = vunpack.c.l.b16 %v487
        %v642 = vunpack.c.h.b16 %v487
        %v643 = vunpack.c.l.b16 %v488
        %v644 = vunpack.c.h.b16 %v488
        %v645 = vunpack.c.l.b16 %v489
        %v646 = vunpack.c.h.b16 %v489
        %v647 = vunpack.c.l.b16 %v490
        %v648 = vunpack.c.h.b16 %v490
        %v649 = vunpack.c.l.b16 %v491
        %v650 = vunpack.c.h.b16 %v491
        %v651 = vunpack.c.l.b16 %v492
        %v652 = vunpack.c.h.b16 %v492
        %v653 = vunpack.c.l.b16 %v493
        %v654 = vunpack.c.h.b16 %v493
        %v655 = vunpack.c.l.b16 %v494
        %v656 = vunpack.c.h.b16 %v494
        %v657 = vunpack.c.l.b16 %v495
        %v658 = vunpack.c.h.b16 %v495
        %v659 = vunpack.c.l.b16 %v496
        %v660 = vunpack.c.h.b16 %v496
        %v661 = vunpack.c.l.b16 %v497
        %v662 = vunpack.c.h.b16 %v497
        %v663 = vunpack.c.l.b16 %v498
        %v664 = vunpack.c.h.b16 %v498
        %v665 = vunpack.c.l.b16 %v499
        %v666 = vunpack.c.h.b16 %v499
        %v667 = vunpack.c.l.b16 %v500
        %v668 = vunpack.c.h.b16 %v500
        %v669 = vunpack.c.l.b16 %v501
        %v670 = vunpack.c.h.b16 %v501
        %v671 = vunpack.c.l.b16 %v502
        %v672 = vunpack.c.h.b16 %v502
        %v673 = vunpack.c.l.b16 %v503
        %v674 = vunpack.c.h.b16 %v503
        %v675 = vunpack.c.l.b16 %v504
        %v676 = vunpack.c.h.b16 %v504
        %v677 = vunpack.c.l.b16 %v505
        %v678 = vunpack.c.h.b16 %v505
        %v679 = vunpack.c.l.b16 %v506
        %v680 = vunpack.c.h.b16 %v506
        %v681 = vunpack.c.l.b16 %v507
        %v682 = vunpack.c.h.b16 %v507
        %v683 = vunpack.c.l.b16 %v508
        %v684 = vunpack.c.h.b16 %v508
        %v685 = vunpack.c.l.b16 %v509
        %v686 = vunpack.c.h.b16 %v509
        %v687 = vunpack.c.l.b16 %v510
        %v688 = vunpack.c.h.b16 %v510
        %v689 = vunpack.c.l.b16 %v511
        %v690 = vunpack.c.h.b16 %v511
        %v691 = vunpack.c.l.b16 %v512
        %v692 = vunpack.c.h.b16 %v512
        %v693 = vunpack.c.l.b16 %v513
        %v694 = vunpack.c.h.b16 %v513
        %v695 = vunpack.c.l.b16 %v514
        %v696 = vunpack.c.h.b16 %v514
        %v697 = vunpack.c.l.b16 %v515
        %v698 = vunpack.c.h.b16 %v515
        %v699 = vunpack.c.l.b16 %v516
        %v700 = vunpack.c.h.b16 %v516
        %v701 = vunpack.c.l.b16 %v517
        %v702 = vunpack.c.h.b16 %v517
        %v703 = vunpack.c.l.b16 %v518
        %v704 = vunpack.c.h.b16 %v518
        %v705 = vunpack.c.l.b16 %v519
        %v706 = vunpack.c.h.b16 %v519
        %v707 = vunpack.c.l.b16 %v520
        %v708 = vunpack.c.h.b16 %v520
        %v709 = vunpack.c.l.b16 %v521
        %v710 = vunpack.c.h.b16 %v521
        %v711 = vunpack.c.l.b16 %v522
        %v712 = vunpack.c.h.b16 %v522
        %v713 = vunpack.c.l.b16 %v523
        %v714 = vunpack.c.h.b16 %v523
        %v715 = vunpack.c.l.b16 %v524
        %v716 = vunpack.c.h.b16 %v524
        %v717 = vpack.c.b16 %v593, %v589
        %v718 = vpack.c.b16 %v594, %v590
        %v719 = vpack.c.b16 %v595, %v591
        %v720 = vpack.c.b16 %v596, %v592
        %v721 = vpack.c.b16 %v601, %v597
        %v722 = vpack.c.b16 %v602, %v598
        %v723 = vpack.c.b16 %v603, %v599
        %v724 = vpack.c.b16 %v604, %v600
        %v725 = vpack.c.b16 %v609, %v605
        %v726 = vpack.c.b16 %v610, %v606
        %v727 = vpack.c.b16 %v611, %v607
        %v728 = vpack.c.b16 %v612, %v608
        %v729 = vpack.c.b16 %v617, %v613
        %v730 = vpack.c.b16 %v618, %v614
        %v731 = vpack.c.b16 %v619, %v615
        %v732 = vpack.c.b16 %v620, %v616
        %v733 = vpack.c.b16 %v625, %v621
        %v734 = vpack.c.b16 %v626, %v622
        %v735 = vpack.c.b16 %v627, %v623
        %v736 = vpack.c.b16 %v628, %v624
        %v737 = vpack.c.b16 %v633, %v629
        %v738 = vpack.c.b16 %v634, %v630
        %v739 = vpack.c.b16 %v635, %v631
        %v740 = vpack.c.b16 %v636, %v632
        %v741 = vpack.c.b16 %v641, %v637
        %v742 = vpack.c.b16 %v642, %v638
        %v743 = vpack.c.b16 %v643, %v639
        %v744 = vpack.c.b16 %v644, %v640
        %v745 = vpack.c.b16 %v649, %v645
        %v746 = vpack.c.b16 %v650, %v646
        %v747 = vpack.c.b16 %v651, %v647
        %v748 = vpack.c.b16 %v652, %v648
        %v749 = vpack.c.b16 %v657, %v653
        %v750 = vpack.c.b16 %v658, %v654
        %v751 = vpack.c.b16 %v659, %v655
        %v752 = vpack.c.b16 %v660, %v656
        %v753 = vpack.c.b16 %v665, %v661
        %v754 = vpack.c.b16 %v666, %v662
        %v755 = vpack.c.b16 %v667, %v663
        %v756 = vpack.c.b16 %v668, %v664
        %v757 = vpack.c.b16 %v673, %v669
        %v758 = vpack.c.b16 %v674, %v670
        %v759 = vpack.c.b16 %v675, %v671
        %v760 = vpack.c.b16 %v676, %v672
        %v761 = vpack.c.b16 %v681, %v677
        %v762 = vpack.c.b16 %v682, %v678
        %v763 = vpack.c.b16 %v683, %v679
        %v764 = vpack.c.b16 %v684, %v680
        %v765 = vpack.c.b16 %v689, %v685
        %v766 = vpack.c.b16 %v690, %v686
        %v767 = vpack.c.b16 %v691, %v687
        %v768 = vpack.c.b16 %v692, %v688
        %v769 = vpack.c.b16 %v697, %v693
        %v770 = vpack.c.b16 %v698, %v694
        %v771 = vpack.c.b16 %v699, %v695
        %v772 = vpack.c.b16 %v700, %v696
        %v773 = vpack.c.b16 %v705, %v701
        %v774 = vpack.c.b16 %v706, %v702
        %v775 = vpack.c.b16 %v707, %v703
        %v776 = vpack.c.b16 %v708, %v704
        %v777 = vpack.c.b16 %v713, %v709
        %v778 = vpack.c.b16 %v714, %v710
        %v779 = vpack.c.b16 %v715, %v711
        %v780 = vpack.c.b16 %v716, %v712
        %845 = vmatprep.subr.bf16.mxu0 %v718
        %846 = vmatpush1.bf16.msra.mxu0 %v717
        %847 = vmatprep.subr.bf16.mxu0 %v722
        %848 = vmatpush1.bf16.msra.mxu0 %v721
        %849 = vmatprep.subr.bf16.mxu0 %v726
        %850 = vmatpush1.bf16.msra.mxu0 %v725
        %851 = vmatprep.subr.bf16.mxu0 %v730
        %852 = vmatpush1.bf16.msra.mxu0 %v729
        %853 = vmatprep.subr.bf16.mxu0 %v734
        %854 = vmatpush1.bf16.msra.mxu0 %v733
        %855 = vmatprep.subr.bf16.mxu0 %v738
        %856 = vmatpush1.bf16.msra.mxu0 %v737
        %857 = vmatprep.subr.bf16.mxu0 %v742
        %858 = vmatpush1.bf16.msra.mxu0 %v741
        %859 = vmatprep.subr.bf16.mxu0 %v746
        %860 = vmatpush1.bf16.msra.mxu0 %v745
        %861 = vmatprep.subr.bf16.mxu0 %v750
        %862 = vmatpush1.bf16.msra.mxu0 %v749
        %863 = vmatprep.subr.bf16.mxu0 %v754
        %864 = vmatpush1.bf16.msra.mxu0 %v753
        %865 = vmatprep.subr.bf16.mxu0 %v758
        %866 = vmatpush1.bf16.msra.mxu0 %v757
        %867 = vmatprep.subr.bf16.mxu0 %v762
        %868 = vmatpush1.bf16.msra.mxu0 %v761
        %869 = vmatprep.subr.bf16.mxu0 %v766
        %870 = vmatpush1.bf16.msra.mxu0 %v765
        %871 = vmatprep.subr.bf16.mxu0 %v770
        %872 = vmatpush1.bf16.msra.mxu0 %v769
        %873 = vmatprep.subr.bf16.mxu0 %v774
        %874 = vmatpush1.bf16.msra.mxu0 %v773
        %875 = vmatprep.subr.bf16.mxu0 %v778
        %876 = vmatpush1.bf16.msra.mxu0 %v777
        %877 = vmatprep.mubr.bf16.mxu0 %v460
        %878 = vmatmul.mubr.bf16.gmra.mrb[0].mxu0 %v459
        %v879 = vpop.f32.mrb[0].mxu0
        %v880 = vadd.f32 0.0, %v879
        %v881 = vpop.f32.mrb[0].mxu0
        %v882 = vadd.f32 0.0, %v881
        %v883 = vpop.f32.mrb[0].mxu0
        %v884 = vadd.f32 0.0, %v883
        %v885 = vpop.f32.mrb[0].mxu0
        %v886 = vadd.f32 0.0, %v885
        %887 = vdwg.mxu0
        %888 = vmatprep.subr.bf16.mxu0 %v720
        %889 = vmatpush1.bf16.msra.mxu0 %v719
        %890 = vmatprep.subr.bf16.mxu0 %v724
        %891 = vmatpush1.bf16.msra.mxu0 %v723
        %892 = vmatprep.subr.bf16.mxu0 %v728
        %893 = vmatpush1.bf16.msra.mxu0 %v727
        %894 = vmatprep.subr.bf16.mxu0 %v732
        %895 = vmatpush1.bf16.msra.mxu0 %v731
        %896 = vmatprep.subr.bf16.mxu0 %v736
        %897 = vmatpush1.bf16.msra.mxu0 %v735
        %898 = vmatprep.subr.bf16.mxu0 %v740
        %899 = vmatpush1.bf16.msra.mxu0 %v739
        %900 = vmatprep.subr.bf16.mxu0 %v744
        %901 = vmatpush1.bf16.msra.mxu0 %v743
        %902 = vmatprep.subr.bf16.mxu0 %v748
        %903 = vmatpush1.bf16.msra.mxu0 %v747
        %904 = vmatprep.subr.bf16.mxu0 %v752
        %905 = vmatpush1.bf16.msra.mxu0 %v751
        %906 = vmatprep.subr.bf16.mxu0 %v756
        %907 = vmatpush1.bf16.msra.mxu0 %v755
        %908 = vmatprep.subr.bf16.mxu0 %v760
        %909 = vmatpush1.bf16.msra.mxu0 %v759
        %910 = vmatprep.subr.bf16.mxu0 %v764
        %911 = vmatpush1.bf16.msra.mxu0 %v763
        %912 = vmatprep.subr.bf16.mxu0 %v768
        %913 = vmatpush1.bf16.msra.mxu0 %v767
        %914 = vmatprep.subr.bf16.mxu0 %v772
        %915 = vmatpush1.bf16.msra.mxu0 %v771
        %916 = vmatprep.subr.bf16.mxu0 %v776
        %917 = vmatpush1.bf16.msra.mxu0 %v775
        %918 = vmatprep.subr.bf16.mxu0 %v780
        %919 = vmatpush1.bf16.msra.mxu0 %v779
        %920 = vmatprep.mubr.bf16.mxu0 %v460
        %921 = vmatmul.mubr.bf16.gmra.mrb[0].mxu0 %v459
        %v922 = vpop.f32.mrb[0].mxu0
        %v923 = vadd.f32 0.0, %v922
        %v924 = vpop.f32.mrb[0].mxu0
        %v925 = vadd.f32 0.0, %v924
        %v926 = vpop.f32.mrb[0].mxu0
        %v927 = vadd.f32 0.0, %v926
        %v928 = vpop.f32.mrb[0].mxu0
        %v929 = vadd.f32 0.0, %v928
        %930 = vdwg.mxu0
        %v931 = vadd.f32 %v447, %v880
        %v932 = vadd.f32 %v448, %v882
        %v933 = vadd.f32 %v449, %v923
        %v934 = vadd.f32 %v450, %v925
        %v935 = vadd.f32 %v451, %v884
        %v936 = vadd.f32 %v452, %v886
        %v937 = vadd.f32 %v453, %v927
        %v938 = vadd.f32 %v454, %v929
        %939 = vst [vmem:[#allocation2] sm:$0xff] %v931
        %940 = vst [vmem:[#allocation2 + $0x8] sm:$0xff] %v932
        %941 = vst [vmem:[#allocation2 + $0x10] sm:$0xff] %v933
        %942 = vst [vmem:[#allocation2 + $0x18] sm:$0xff] %v934
        %943 = vst [vmem:[#allocation2 + $0x20] sm:$0xff] %v935
        %944 = vst [vmem:[#allocation2 + $0x28] sm:$0xff] %v936
        %945 = vst [vmem:[#allocation2 + $0x30] sm:$0xff] %v937
        %946 = vst [vmem:[#allocation2 + $0x38] sm:$0xff] %v938
        // Predicated region
        $region73: #{tpu_custom_call.1} parent=55 // pred_check
          %p947 = pneg %p435
        $region74: #{tpu_custom_call.1} parent=55 // pred_check_branch
          %949 = sbr.rel (%p947) target = $region76
        $region75: #{tpu_custom_call.1} parent=55 // pred_region
          %v950 = vld [vmem:[#allocation2] sm:$0xff]
          %v951 = vld [vmem:[#allocation2 + $0x8] sm:$0xff]
          %v952 = vld [vmem:[#allocation2 + $0x10] sm:$0xff]
          %v953 = vld [vmem:[#allocation2 + $0x18] sm:$0xff]
          %v954 = vld [vmem:[#allocation2 + $0x20] sm:$0xff]
          %v955 = vld [vmem:[#allocation2 + $0x28] sm:$0xff]
          %v956 = vld [vmem:[#allocation2 + $0x30] sm:$0xff]
          %v957 = vld [vmem:[#allocation2 + $0x38] sm:$0xff]
          %v958 = vld [vmem:[%s426] sm:$0xff]
          %v959 = vld [vmem:[%s426 + $0x8] sm:$0xff]
          %v960 = vld [vmem:[%s3] sm:$0xf]
          %962 = vset.pattern.permute.xlu0 0
          %963 = vperm.xlu0 %962, %v958
          %v964 = vpop.permute.xlu0 %963
          %967 = vset.pattern.permute.xlu0 0
          %968 = vperm.xlu0 %967, %v959
          %v969 = vpop.permute.xlu0 %968
          %v972 = vlaneseq
          %v973 = vshrl.u32 %v972, 7
          %v974 = vsub.s32 0, %v973
          %v975 = vrot.slane %v960, %v974
          %v976 = vlaneseq
          %v977 = vshrl.u32 %v976, 7
          %v978 = vsub.s32 1, %v977
          %v979 = vrot.slane %v960, %v978
          %v980 = vlaneseq
          %v981 = vshrl.u32 %v980, 7
          %v982 = vsub.s32 2, %v981
          %v983 = vrot.slane %v960, %v982
          %v984 = vlaneseq
          %v985 = vshrl.u32 %v984, 7
          %v986 = vsub.s32 3, %v985
          %v987 = vrot.slane %v960, %v986
          %v992 = vmul.f32 %v964, %v975
          %v993 = vmul.f32 %v964, %v979
          %v994 = vmul.f32 %v964, %v983
          %v995 = vmul.f32 %v964, %v987
          %v996 = vmul.f32 %v969, %v975
          %v997 = vmul.f32 %v969, %v979
          %v998 = vmul.f32 %v969, %v983
          %v999 = vmul.f32 %v969, %v987
          %v1000 = vadd.f32 %v950, %v992
          %v1001 = vadd.f32 %v951, %v993
          %v1002 = vadd.f32 %v952, %v994
          %v1003 = vadd.f32 %v953, %v995
          %v1004 = vadd.f32 %v954, %v996
          %v1005 = vadd.f32 %v955, %v997
          %v1006 = vadd.f32 %v956, %v998
          %v1007 = vadd.f32 %v957, %v999
          %v1008 = vld [vmem:[%s4] sm:$0xf]
          %v1010 = vlaneseq
          %v1011 = vshrl.u32 %v1010, 7
          %v1012 = vsub.s32 0, %v1011
          %v1013 = vrot.slane %v1008, %v1012
          %v1014 = vlaneseq
          %v1015 = vshrl.u32 %v1014, 7
          %v1016 = vsub.s32 1, %v1015
          %v1017 = vrot.slane %v1008, %v1016
          %v1018 = vlaneseq
          %v1019 = vshrl.u32 %v1018, 7
          %v1020 = vsub.s32 2, %v1019
          %v1021 = vrot.slane %v1008, %v1020
          %v1022 = vlaneseq
          %v1023 = vshrl.u32 %v1022, 7
          %v1024 = vsub.s32 3, %v1023
          %v1025 = vrot.slane %v1008, %v1024
          %v1030 = vadd.f32 %v1000, %v1013
          %v1031 = vadd.f32 %v1001, %v1017
          %v1032 = vadd.f32 %v1002, %v1021
          %v1033 = vadd.f32 %v1003, %v1025
          %v1034 = vadd.f32 %v1004, %v1013
          %v1035 = vadd.f32 %v1005, %v1017
          %v1036 = vadd.f32 %v1006, %v1021
          %v1037 = vadd.f32 %v1007, %v1025
          %v1038 = vmul.f32 %v1030, 0.01
          %v1039 = vmul.f32 %v1031, 0.01
          %v1040 = vmul.f32 %v1032, 0.01
          %v1041 = vmul.f32 %v1033, 0.01
          %v1042 = vmul.f32 %v1034, 0.01
          %v1043 = vmul.f32 %v1035, 0.01
          %v1044 = vmul.f32 %v1036, 0.01
          %v1045 = vmul.f32 %v1037, 0.01
          %v1046 = vmax.f32 %v1030, %v1038
          %v1047 = vmax.f32 %v1031, %v1039
          %v1048 = vmax.f32 %v1032, %v1040
          %v1049 = vmax.f32 %v1033, %v1041
          %v1050 = vmax.f32 %v1034, %v1042
          %v1051 = vmax.f32 %v1035, %v1043
          %v1052 = vmax.f32 %v1036, %v1044
          %v1053 = vmax.f32 %v1037, %v1045
          %v1054 = vpack.c.bf16 %v1050, %v1046
          %v1055 = vpack.c.bf16 %v1051, %v1047
          %v1056 = vpack.c.bf16 %v1052, %v1048
          %v1057 = vpack.c.bf16 %v1053, %v1049
          %v1058 = vld [vmem:[#allocation8] sm:$0xff]
          %v1059 = vld [vmem:[#allocation8 + $0x8] sm:$0xff]
          %v1060 = vld [vmem:[#allocation8 + $0x10] sm:$0xff]
          %v1061 = vld [vmem:[#allocation8 + $0x18] sm:$0xff]
          %v1062 = vld [vmem:[#allocation8 + $0x20] sm:$0xff]
          %v1063 = vld [vmem:[#allocation8 + $0x28] sm:$0xff]
          %v1064 = vld [vmem:[#allocation8 + $0x30] sm:$0xff]
          %v1065 = vld [vmem:[#allocation8 + $0x38] sm:$0xff]
          %v1066 = vld [vmem:[#allocation8 + $0x40] sm:$0xff]
          %v1067 = vld [vmem:[#allocation8 + $0x48] sm:$0xff]
          %v1068 = vld [vmem:[#allocation8 + $0x50] sm:$0xff]
          %v1069 = vld [vmem:[#allocation8 + $0x58] sm:$0xff]
          %v1070 = vld [vmem:[#allocation8 + $0x60] sm:$0xff]
          %v1071 = vld [vmem:[#allocation8 + $0x68] sm:$0xff]
          %v1072 = vld [vmem:[#allocation8 + $0x70] sm:$0xff]
          %v1073 = vld [vmem:[#allocation8 + $0x78] sm:$0xff]
          %v1074 = vld [vmem:[#allocation8 + $0x80] sm:$0xff]
          %v1075 = vld [vmem:[#allocation8 + $0x88] sm:$0xff]
          %v1076 = vld [vmem:[#allocation8 + $0x90] sm:$0xff]
          %v1077 = vld [vmem:[#allocation8 + $0x98] sm:$0xff]
          %v1078 = vld [vmem:[#allocation8 + $0xa0] sm:$0xff]
          %v1079 = vld [vmem:[#allocation8 + $0xa8] sm:$0xff]
          %v1080 = vld [vmem:[#allocation8 + $0xb0] sm:$0xff]
          %v1081 = vld [vmem:[#allocation8 + $0xb8] sm:$0xff]
          %v1082 = vld [vmem:[#allocation8 + $0xc0] sm:$0xff]
          %v1083 = vld [vmem:[#allocation8 + $0xc8] sm:$0xff]
          %v1084 = vld [vmem:[#allocation8 + $0xd0] sm:$0xff]
          %v1085 = vld [vmem:[#allocation8 + $0xd8] sm:$0xff]
          %v1086 = vld [vmem:[#allocation8 + $0xe0] sm:$0xff]
          %v1087 = vld [vmem:[#allocation8 + $0xe8] sm:$0xff]
          %v1088 = vld [vmem:[#allocation8 + $0xf0] sm:$0xff]
          %v1089 = vld [vmem:[#allocation8 + $0xf8] sm:$0xff]
          %v1090 = vld [vmem:[#allocation8 + $0x100] sm:$0xff]
          %v1091 = vld [vmem:[#allocation8 + $0x108] sm:$0xff]
          %v1092 = vld [vmem:[#allocation8 + $0x110] sm:$0xff]
          %v1093 = vld [vmem:[#allocation8 + $0x118] sm:$0xff]
          %v1094 = vld [vmem:[#allocation8 + $0x120] sm:$0xff]
          %v1095 = vld [vmem:[#allocation8 + $0x128] sm:$0xff]
          %v1096 = vld [vmem:[#allocation8 + $0x130] sm:$0xff]
          %v1097 = vld [vmem:[#allocation8 + $0x138] sm:$0xff]
          %v1098 = vld [vmem:[#allocation8 + $0x140] sm:$0xff]
          %v1099 = vld [vmem:[#allocation8 + $0x148] sm:$0xff]
          %v1100 = vld [vmem:[#allocation8 + $0x150] sm:$0xff]
          %v1101 = vld [vmem:[#allocation8 + $0x158] sm:$0xff]
          %v1102 = vld [vmem:[#allocation8 + $0x160] sm:$0xff]
          %v1103 = vld [vmem:[#allocation8 + $0x168] sm:$0xff]
          %v1104 = vld [vmem:[#allocation8 + $0x170] sm:$0xff]
          %v1105 = vld [vmem:[#allocation8 + $0x178] sm:$0xff]
          %v1106 = vld [vmem:[#allocation8 + $0x180] sm:$0xff]
          %v1107 = vld [vmem:[#allocation8 + $0x188] sm:$0xff]
          %v1108 = vld [vmem:[#allocation8 + $0x190] sm:$0xff]
          %v1109 = vld [vmem:[#allocation8 + $0x198] sm:$0xff]
          %v1110 = vld [vmem:[#allocation8 + $0x1a0] sm:$0xff]
          %v1111 = vld [vmem:[#allocation8 + $0x1a8] sm:$0xff]
          %v1112 = vld [vmem:[#allocation8 + $0x1b0] sm:$0xff]
          %v1113 = vld [vmem:[#allocation8 + $0x1b8] sm:$0xff]
          %v1114 = vld [vmem:[#allocation8 + $0x1c0] sm:$0xff]
          %v1115 = vld [vmem:[#allocation8 + $0x1c8] sm:$0xff]
          %v1116 = vld [vmem:[#allocation8 + $0x1d0] sm:$0xff]
          %v1117 = vld [vmem:[#allocation8 + $0x1d8] sm:$0xff]
          %v1118 = vld [vmem:[#allocation8 + $0x1e0] sm:$0xff]
          %v1119 = vld [vmem:[#allocation8 + $0x1e8] sm:$0xff]
          %v1120 = vld [vmem:[#allocation8 + $0x1f0] sm:$0xff]
          %v1121 = vld [vmem:[#allocation8 + $0x1f8] sm:$0xff]
          %v1122 = vld [vmem:[%s6] sm:$0x3]
          %v1124 = vlaneseq
          %v1125 = vshrl.u32 %v1124, 7
          %v1126 = vsub.s32 0, %v1125
          %v1127 = vrot.slane %v1122, %v1126
          %v1128 = vlaneseq
          %v1129 = vshrl.u32 %v1128, 7
          %v1130 = vsub.s32 1, %v1129
          %v1131 = vrot.slane %v1122, %v1130
          %v1198 = vunpack.c.l.b16 %v1058
          %v1199 = vunpack.c.h.b16 %v1058
          %v1200 = vunpack.c.l.b16 %v1059
          %v1201 = vunpack.c.h.b16 %v1059
          %v1202 = vunpack.c.l.b16 %v1060
          %v1203 = vunpack.c.h.b16 %v1060
          %v1204 = vunpack.c.l.b16 %v1061
          %v1205 = vunpack.c.h.b16 %v1061
          %v1206 = vunpack.c.l.b16 %v1062
          %v1207 = vunpack.c.h.b16 %v1062
          %v1208 = vunpack.c.l.b16 %v1063
          %v1209 = vunpack.c.h.b16 %v1063
          %v1210 = vunpack.c.l.b16 %v1064
          %v1211 = vunpack.c.h.b16 %v1064
          %v1212 = vunpack.c.l.b16 %v1065
          %v1213 = vunpack.c.h.b16 %v1065
          %v1214 = vunpack.c.l.b16 %v1066
          %v1215 = vunpack.c.h.b16 %v1066
          %v1216 = vunpack.c.l.b16 %v1067
          %v1217 = vunpack.c.h.b16 %v1067
          %v1218 = vunpack.c.l.b16 %v1068
          %v1219 = vunpack.c.h.b16 %v1068
          %v1220 = vunpack.c.l.b16 %v1069
          %v1221 = vunpack.c.h.b16 %v1069
          %v1222 = vunpack.c.l.b16 %v1070
          %v1223 = vunpack.c.h.b16 %v1070
          %v1224 = vunpack.c.l.b16 %v1071
          %v1225 = vunpack.c.h.b16 %v1071
          %v1226 = vunpack.c.l.b16 %v1072
          %v1227 = vunpack.c.h.b16 %v1072
          %v1228 = vunpack.c.l.b16 %v1073
          %v1229 = vunpack.c.h.b16 %v1073
          %v1230 = vunpack.c.l.b16 %v1074
          %v1231 = vunpack.c.h.b16 %v1074
          %v1232 = vunpack.c.l.b16 %v1075
          %v1233 = vunpack.c.h.b16 %v1075
          %v1234 = vunpack.c.l.b16 %v1076
          %v1235 = vunpack.c.h.b16 %v1076
          %v1236 = vunpack.c.l.b16 %v1077
          %v1237 = vunpack.c.h.b16 %v1077
          %v1238 = vunpack.c.l.b16 %v1078
          %v1239 = vunpack.c.h.b16 %v1078
          %v1240 = vunpack.c.l.b16 %v1079
          %v1241 = vunpack.c.h.b16 %v1079
          %v1242 = vunpack.c.l.b16 %v1080
          %v1243 = vunpack.c.h.b16 %v1080
          %v1244 = vunpack.c.l.b16 %v1081
          %v1245 = vunpack.c.h.b16 %v1081
          %v1246 = vunpack.c.l.b16 %v1082
          %v1247 = vunpack.c.h.b16 %v1082
          %v1248 = vunpack.c.l.b16 %v1083
          %v1249 = vunpack.c.h.b16 %v1083
          %v1250 = vunpack.c.l.b16 %v1084
          %v1251 = vunpack.c.h.b16 %v1084
          %v1252 = vunpack.c.l.b16 %v1085
          %v1253 = vunpack.c.h.b16 %v1085
          %v1254 = vunpack.c.l.b16 %v1086
          %v1255 = vunpack.c.h.b16 %v1086
          %v1256 = vunpack.c.l.b16 %v1087
          %v1257 = vunpack.c.h.b16 %v1087
          %v1258 = vunpack.c.l.b16 %v1088
          %v1259 = vunpack.c.h.b16 %v1088
          %v1260 = vunpack.c.l.b16 %v1089
          %v1261 = vunpack.c.h.b16 %v1089
          %v1262 = vunpack.c.l.b16 %v1090
          %v1263 = vunpack.c.h.b16 %v1090
          %v1264 = vunpack.c.l.b16 %v1091
          %v1265 = vunpack.c.h.b16 %v1091
          %v1266 = vunpack.c.l.b16 %v1092
          %v1267 = vunpack.c.h.b16 %v1092
          %v1268 = vunpack.c.l.b16 %v1093
          %v1269 = vunpack.c.h.b16 %v1093
          %v1270 = vunpack.c.l.b16 %v1094
          %v1271 = vunpack.c.h.b16 %v1094
          %v1272 = vunpack.c.l.b16 %v1095
          %v1273 = vunpack.c.h.b16 %v1095
          %v1274 = vunpack.c.l.b16 %v1096
          %v1275 = vunpack.c.h.b16 %v1096
          %v1276 = vunpack.c.l.b16 %v1097
          %v1277 = vunpack.c.h.b16 %v1097
          %v1278 = vunpack.c.l.b16 %v1098
          %v1279 = vunpack.c.h.b16 %v1098
          %v1280 = vunpack.c.l.b16 %v1099
          %v1281 = vunpack.c.h.b16 %v1099
          %v1282 = vunpack.c.l.b16 %v1100
          %v1283 = vunpack.c.h.b16 %v1100
          %v1284 = vunpack.c.l.b16 %v1101
          %v1285 = vunpack.c.h.b16 %v1101
          %v1286 = vunpack.c.l.b16 %v1102
          %v1287 = vunpack.c.h.b16 %v1102
          %v1288 = vunpack.c.l.b16 %v1103
          %v1289 = vunpack.c.h.b16 %v1103
          %v1290 = vunpack.c.l.b16 %v1104
          %v1291 = vunpack.c.h.b16 %v1104
          %v1292 = vunpack.c.l.b16 %v1105
          %v1293 = vunpack.c.h.b16 %v1105
          %v1294 = vunpack.c.l.b16 %v1106
          %v1295 = vunpack.c.h.b16 %v1106
          %v1296 = vunpack.c.l.b16 %v1107
          %v1297 = vunpack.c.h.b16 %v1107
          %v1298 = vunpack.c.l.b16 %v1108
          %v1299 = vunpack.c.h.b16 %v1108
          %v1300 = vunpack.c.l.b16 %v1109
          %v1301 = vunpack.c.h.b16 %v1109
          %v1302 = vunpack.c.l.b16 %v1110
          %v1303 = vunpack.c.h.b16 %v1110
          %v1304 = vunpack.c.l.b16 %v1111
          %v1305 = vunpack.c.h.b16 %v1111
          %v1306 = vunpack.c.l.b16 %v1112
          %v1307 = vunpack.c.h.b16 %v1112
          %v1308 = vunpack.c.l.b16 %v1113
          %v1309 = vunpack.c.h.b16 %v1113
          %v1310 = vunpack.c.l.b16 %v1114
          %v1311 = vunpack.c.h.b16 %v1114
          %v1312 = vunpack.c.l.b16 %v1115
          %v1313 = vunpack.c.h.b16 %v1115
          %v1314 = vunpack.c.l.b16 %v1116
          %v1315 = vunpack.c.h.b16 %v1116
          %v1316 = vunpack.c.l.b16 %v1117
          %v1317 = vunpack.c.h.b16 %v1117
          %v1318 = vunpack.c.l.b16 %v1118
          %v1319 = vunpack.c.h.b16 %v1118
          %v1320 = vunpack.c.l.b16 %v1119
          %v1321 = vunpack.c.h.b16 %v1119
          %v1322 = vunpack.c.l.b16 %v1120
          %v1323 = vunpack.c.h.b16 %v1120
          %v1324 = vunpack.c.l.b16 %v1121
          %v1325 = vunpack.c.h.b16 %v1121
          %v1326 = vpack.c.b16 %v1200, %v1198
          %v1327 = vpack.c.b16 %v1201, %v1199
          %v1328 = vpack.c.b16 %v1204, %v1202
          %v1329 = vpack.c.b16 %v1205, %v1203
          %v1330 = vpack.c.b16 %v1208, %v1206
          %v1331 = vpack.c.b16 %v1209, %v1207
          %v1332 = vpack.c.b16 %v1212, %v1210
          %v1333 = vpack.c.b16 %v1213, %v1211
          %v1334 = vpack.c.b16 %v1216, %v1214
          %v1335 = vpack.c.b16 %v1217, %v1215
          %v1336 = vpack.c.b16 %v1220, %v1218
          %v1337 = vpack.c.b16 %v1221, %v1219
          %v1338 = vpack.c.b16 %v1224, %v1222
          %v1339 = vpack.c.b16 %v1225, %v1223
          %v1340 = vpack.c.b16 %v1228, %v1226
          %v1341 = vpack.c.b16 %v1229, %v1227
          %v1342 = vpack.c.b16 %v1232, %v1230
          %v1343 = vpack.c.b16 %v1233, %v1231
          %v1344 = vpack.c.b16 %v1236, %v1234
          %v1345 = vpack.c.b16 %v1237, %v1235
          %v1346 = vpack.c.b16 %v1240, %v1238
          %v1347 = vpack.c.b16 %v1241, %v1239
          %v1348 = vpack.c.b16 %v1244, %v1242
          %v1349 = vpack.c.b16 %v1245, %v1243
          %v1350 = vpack.c.b16 %v1248, %v1246
          %v1351 = vpack.c.b16 %v1249, %v1247
          %v1352 = vpack.c.b16 %v1252, %v1250
          %v1353 = vpack.c.b16 %v1253, %v1251
          %v1354 = vpack.c.b16 %v1256, %v1254
          %v1355 = vpack.c.b16 %v1257, %v1255
          %v1356 = vpack.c.b16 %v1260, %v1258
          %v1357 = vpack.c.b16 %v1261, %v1259
          %v1358 = vpack.c.b16 %v1264, %v1262
          %v1359 = vpack.c.b16 %v1265, %v1263
          %v1360 = vpack.c.b16 %v1268, %v1266
          %v1361 = vpack.c.b16 %v1269, %v1267
          %v1362 = vpack.c.b16 %v1272, %v1270
          %v1363 = vpack.c.b16 %v1273, %v1271
          %v1364 = vpack.c.b16 %v1276, %v1274
          %v1365 = vpack.c.b16 %v1277, %v1275
          %v1366 = vpack.c.b16 %v1280, %v1278
          %v1367 = vpack.c.b16 %v1281, %v1279
          %v1368 = vpack.c.b16 %v1284, %v1282
          %v1369 = vpack.c.b16 %v1285, %v1283
          %v1370 = vpack.c.b16 %v1288, %v1286
          %v1371 = vpack.c.b16 %v1289, %v1287
          %v1372 = vpack.c.b16 %v1292, %v1290
          %v1373 = vpack.c.b16 %v1293, %v1291
          %v1374 = vpack.c.b16 %v1296, %v1294
          %v1375 = vpack.c.b16 %v1297, %v1295
          %v1376 = vpack.c.b16 %v1300, %v1298
          %v1377 = vpack.c.b16 %v1301, %v1299
          %v1378 = vpack.c.b16 %v1304, %v1302
          %v1379 = vpack.c.b16 %v1305, %v1303
          %v1380 = vpack.c.b16 %v1308, %v1306
          %v1381 = vpack.c.b16 %v1309, %v1307
          %v1382 = vpack.c.b16 %v1312, %v1310
          %v1383 = vpack.c.b16 %v1313, %v1311
          %v1384 = vpack.c.b16 %v1316, %v1314
          %v1385 = vpack.c.b16 %v1317, %v1315
          %v1386 = vpack.c.b16 %v1320, %v1318
          %v1387 = vpack.c.b16 %v1321, %v1319
          %v1388 = vpack.c.b16 %v1324, %v1322
          %v1389 = vpack.c.b16 %v1325, %v1323
          %1454 = vmatprep.subr.bf16.mxu0 %v1327
          %1455 = vmatpush1.bf16.msra.mxu0 %v1326
          %1456 = vmatprep.subr.bf16.mxu0 %v1329
          %1457 = vmatpush1.bf16.msra.mxu0 %v1328
          %1458 = vmatprep.subr.bf16.mxu0 %v1331
          %1459 = vmatpush1.bf16.msra.mxu0 %v1330
          %1460 = vmatprep.subr.bf16.mxu0 %v1333
          %1461 = vmatpush1.bf16.msra.mxu0 %v1332
          %1462 = vmatprep.subr.bf16.mxu0 %v1335
          %1463 = vmatpush1.bf16.msra.mxu0 %v1334
          %1464 = vmatprep.subr.bf16.mxu0 %v1337
          %1465 = vmatpush1.bf16.msra.mxu0 %v1336
          %1466 = vmatprep.subr.bf16.mxu0 %v1339
          %1467 = vmatpush1.bf16.msra.mxu0 %v1338
          %1468 = vmatprep.subr.bf16.mxu0 %v1341
          %1469 = vmatpush1.bf16.msra.mxu0 %v1340
          %1470 = vmatprep.subr.bf16.mxu0 %v1343
          %1471 = vmatpush1.bf16.msra.mxu0 %v1342
          %1472 = vmatprep.subr.bf16.mxu0 %v1345
          %1473 = vmatpush1.bf16.msra.mxu0 %v1344
          %1474 = vmatprep.subr.bf16.mxu0 %v1347
          %1475 = vmatpush1.bf16.msra.mxu0 %v1346
          %1476 = vmatprep.subr.bf16.mxu0 %v1349
          %1477 = vmatpush1.bf16.msra.mxu0 %v1348
          %1478 = vmatprep.subr.bf16.mxu0 %v1351
          %1479 = vmatpush1.bf16.msra.mxu0 %v1350
          %1480 = vmatprep.subr.bf16.mxu0 %v1353
          %1481 = vmatpush1.bf16.msra.mxu0 %v1352
          %1482 = vmatprep.subr.bf16.mxu0 %v1355
          %1483 = vmatpush1.bf16.msra.mxu0 %v1354
          %1484 = vmatprep.subr.bf16.mxu0 %v1357
          %1485 = vmatpush1.bf16.msra.mxu0 %v1356
          %1486 = vmatprep.mubr.bf16.mxu0 %v1055
          %1487 = vmatmul.mubr.bf16.gmra.mrb[0].mxu0 %v1054
          %v1488 = vpop.f32.mrb[0].mxu0
          %v1489 = vadd.f32 %v1127, %v1488
          %v1490 = vpop.f32.mrb[0].mxu0
          %v1491 = vadd.f32 %v1131, %v1490
          %v1492 = vpop.f32.mrb[0].mxu0
          %v1493 = vadd.f32 %v1127, %v1492
          %v1494 = vpop.f32.mrb[0].mxu0
          %v1495 = vadd.f32 %v1131, %v1494
          %1496 = vdwg.mxu0
          %1497 = vmatprep.subr.bf16.mxu0 %v1359
          %1498 = vmatpush1.bf16.msra.mxu0 %v1358
          %1499 = vmatprep.subr.bf16.mxu0 %v1361
          %1500 = vmatpush1.bf16.msra.mxu0 %v1360
          %1501 = vmatprep.subr.bf16.mxu0 %v1363
          %1502 = vmatpush1.bf16.msra.mxu0 %v1362
          %1503 = vmatprep.subr.bf16.mxu0 %v1365
          %1504 = vmatpush1.bf16.msra.mxu0 %v1364
          %1505 = vmatprep.subr.bf16.mxu0 %v1367
          %1506 = vmatpush1.bf16.msra.mxu0 %v1366
          %1507 = vmatprep.subr.bf16.mxu0 %v1369
          %1508 = vmatpush1.bf16.msra.mxu0 %v1368
          %1509 = vmatprep.subr.bf16.mxu0 %v1371
          %1510 = vmatpush1.bf16.msra.mxu0 %v1370
          %1511 = vmatprep.subr.bf16.mxu0 %v1373
          %1512 = vmatpush1.bf16.msra.mxu0 %v1372
          %1513 = vmatprep.subr.bf16.mxu0 %v1375
          %1514 = vmatpush1.bf16.msra.mxu0 %v1374
          %1515 = vmatprep.subr.bf16.mxu0 %v1377
          %1516 = vmatpush1.bf16.msra.mxu0 %v1376
          %1517 = vmatprep.subr.bf16.mxu0 %v1379
          %1518 = vmatpush1.bf16.msra.mxu0 %v1378
          %1519 = vmatprep.subr.bf16.mxu0 %v1381
          %1520 = vmatpush1.bf16.msra.mxu0 %v1380
          %1521 = vmatprep.subr.bf16.mxu0 %v1383
          %1522 = vmatpush1.bf16.msra.mxu0 %v1382
          %1523 = vmatprep.subr.bf16.mxu0 %v1385
          %1524 = vmatpush1.bf16.msra.mxu0 %v1384
          %1525 = vmatprep.subr.bf16.mxu0 %v1387
          %1526 = vmatpush1.bf16.msra.mxu0 %v1386
          %1527 = vmatprep.subr.bf16.mxu0 %v1389
          %1528 = vmatpush1.bf16.msra.mxu0 %v1388
          %1529 = vmatprep.mubr.bf16.mxu0 %v1057
          %1530 = vmatmul.mubr.bf16.gmra.mrb[0].mxu0 %v1056
          %v1531 = vpop.f32.mrb[0].mxu0
          %v1532 = vadd.f32 %v1489, %v1531
          %v1533 = vpop.f32.mrb[0].mxu0
          %v1534 = vadd.f32 %v1491, %v1533
          %v1535 = vpop.f32.mrb[0].mxu0
          %v1536 = vadd.f32 %v1493, %v1535
          %v1537 = vpop.f32.mrb[0].mxu0
          %v1538 = vadd.f32 %v1495, %v1537
          %1539 = vdwg.mxu0
          %v1540 = vmul.f32 %v1532, 0.01
          %v1541 = vmul.f32 %v1534, 0.01
          %v1542 = vmul.f32 %v1536, 0.01
          %v1543 = vmul.f32 %v1538, 0.01
          %v1544 = vmax.f32 %v1532, %v1540
          %v1545 = vmax.f32 %v1534, %v1541
          %v1546 = vmax.f32 %v1536, %v1542
          %v1547 = vmax.f32 %v1538, %v1543
          %v1548 = vld [vmem:[%s7] sm:$0x3]
          %v1550 = vlaneseq
          %v1551 = vshrl.u32 %v1550, 7
          %v1552 = vsub.s32 0, %v1551
          %v1553 = vrot.slane %v1548, %v1552
          %v1554 = vlaneseq
          %v1555 = vshrl.u32 %v1554, 7
          %v1556 = vsub.s32 1, %v1555
          %v1557 = vrot.slane %v1548, %v1556
          %v1560 = vmul.f32 %v1544, %v1553
          %v1561 = vmul.f32 %v1545, %v1557
          %v1562 = vmul.f32 %v1546, %v1553
          %v1563 = vmul.f32 %v1547, %v1557
          %v1564 = vadd.f32 %v1560, %v1561
          %1565 = vadd.xlane.f32.xlu0 %v1564
          %v1566 = vpop.xlane.xlu0 %1565
          %v1567 = vadd.f32 %v1562, %v1563
          %1568 = vadd.xlane.f32.xlu0 %v1567
          %v1569 = vpop.xlane.xlu0 %1568
          %s1570 = sld [smem:[#allocation3]]
          %v1571 = vstv %s1570
          %v1572 = vadd.f32 %v1566, %v1571
          %v1573 = vadd.f32 %v1569, %v1571
          %v1574 = vsub.f32 0.0, %v1572
          %v1575 = vsub.f32 0.0, %v1573
          %v1576 = vmul.f32 %v1574, 1.442695
          %v1577 = vpow.pop %v1576
          %v1578 = vmul.f32 %v1575, 1.442695
          %v1579 = vpow.pop %v1578
          %v1580 = vadd.f32 %v1577, 1.0
          %v1581 = vadd.f32 %v1579, 1.0
          %v1582 = vrcp.pop %v1580
          %v1583 = vmul.f32 1.0, %v1582
          %v1584 = vrcp.pop %v1581
          %v1585 = vmul.f32 1.0, %v1584
          %vm1586 = vcmask 7168
          %1587 = vst.msk [vmem:[%s433] sm:$0xff] %vm1586, %v1583
          %1588 = vst.msk [vmem:[%s433 + $0x8] sm:$0xff] %vm1586, %v1585
        $region76: #{tpu_custom_call.1} parent=55 // pred_fallthru
          _
        %s1589 = smul.u32 2, %s29
        %p1590 = scmp.lt.s32.totalorder %s1589, 7
        %s1591 = scalar_select %p1590, %s1589, 7
        %s1592 = smul.addr %s1591, 8
        %s1593 = scalar_lea.vmem %s9, %s1592
        // Predicated region
        $region77: #{tpu_custom_call.1} parent=55 // pred_check
          %p1594 = pneg %p261
        $region78: #{tpu_custom_call.1} parent=55 // pred_check_branch
          %1596 = sbr.rel (%p1594) target = $region80
        $region79: #{tpu_custom_call.1} parent=55 // pred_region
          %s1597 = smul.u32 2, %s29
        $region80: #{tpu_custom_call.1} parent=55 // pred_fallthru
          _
      $region56: #{tpu_custom_call.1} parent=5 // pred_fallthru
        _
      %p1598 = scmp.le.s32.totalorder 2, %s20
      // Predicated region
      $region81: #{tpu_custom_call.1} parent=5 // pred_check
        %p1599 = pneg %p1598
      $region82: #{tpu_custom_call.1} parent=5 // pred_check_branch
        %1601 = sbr.rel (%p1599) target = $region84
      $region83: #{tpu_custom_call.1} parent=5 // pred_region
        %s1602 = ssub.s32 %s20, 2
        // Predicated region
        $region85: #{tpu_custom_call.1} parent=83 // pred_check
          %p1603 = pneg %p267
        $region86: #{tpu_custom_call.1} parent=83 // pred_check_branch
          %1605 = sbr.rel (%p1603) target = $region88
        $region87: #{tpu_custom_call.1} parent=83 // pred_region
          %s1606 = smul.u32 2, %s31
          %p1607 = scmp.lt.s32.totalorder %s1606, 7
          %s1608 = scalar_select %p1607, %s1606, 7
          %s1609 = smul.addr %s1608, 8
          %s1610 = scalar_lea.vmem %s9, %s1609
        $region88: #{tpu_custom_call.1} parent=83 // pred_fallthru
          _
      $region84: #{tpu_custom_call.1} parent=5 // pred_fallthru
        _
    $region6: #{tpu_custom_call.1} parent=1 // loop_footer
      %s24 = sadd.s32 1, %s20
    $region7: #{tpu_custom_call.1} parent=1 // loop_footer_branch
      %19 = sbr.rel target = $region3
    $region8: #{tpu_custom_call.1} parent=1 // loop_exit
      _
    %1611 = vsyncpa [#allocation5], 1
    %s1612 = scalar_lea.sflag [#allocation5], 1
    %1613 = vsyncpa %s1612, 1
    %1614 = vsyncpa [#allocation7], 1

// kernel: tpu_custom_call.1
$region0: #{tpu_custom_call.1}
  #allocation0 [shape = 'u32[]', space=smem, size = 0x4, offset = 0x4, fixed_abs, tag = 'smem constant byte address 0x4 - core index']
  #allocation1 [shape = 'u32[144,128]{1,0:T(1,128)}', space=vmem, size = 0x12000, scoped, tag = 'internal scratch']
  #allocation2 [shape = 'f32[16,512]{1,0:T(8,128)}', space=vmem, size = 0x8000, scoped, tag = 'scratch operand']
  #allocation3 [shape = 'f32[1]{0:T(128)S(6)}', space=smem, size = 0x200, scoped, tag = 'scoped memory for tpu_custom_call.1']
  %s0 = inlined_call_operand.hbm [shape: f32[64,256], index: 0, kind: input, shape index: {}]
  %s1 = inlined_call_operand.vmem [shape: f32[64,1], index: 1, kind: input, shape index: {}]
  %s2 = inlined_call_operand.hbm [shape: bf16[256,512], index: 2, kind: input, shape index: {}]
  %s3 = inlined_call_operand.vmem [shape: f32[1,512], index: 3, kind: input, shape index: {}]
  %s4 = inlined_call_operand.vmem [shape: f32[1,512], index: 4, kind: input, shape index: {}]
  %s5 = inlined_call_operand.hbm [shape: bf16[512,256], index: 5, kind: input, shape index: {}]
  %s6 = inlined_call_operand.vmem [shape: f32[1,256], index: 6, kind: input, shape index: {}]
  %s7 = inlined_call_operand.vmem [shape: f32[1,256], index: 7, kind: input, shape index: {}]
  %s8 = inlined_call_operand.<no memory space> [shape: f32[1], index: 8, kind: input, shape index: {}]
  %s9 = inlined_call_operand.vmem [shape: f32[64,1], index: 9, kind: output, shape index: {}]
  %s10 = sld [smem:[#allocation0]]
  $region89: #{tpu_custom_call.1} parent=0
    _
  %s12 = ssub.s32 1, %s10
  %s13 = scalar_select 0, %s12, %s10
  %14 = sst [smem:[#allocation3]] %s8
  $region1: #{tpu_custom_call.1} parent=0
    #allocation4 [shape = 'u8[32768]{0}', space=vmem, size = 0x8000, scoped, tag = 'input window, operand 0']
    #allocation5 [shape = 's32[2]{0}', space=sflag, size = 0x8, scoped, tag = 'scoped memory for tpu_custom_call.1']
    #allocation6 [shape = 'u8[262144]{0}', space=vmem, size = 0x40000, scoped, tag = 'input window, operand 2, single buffered']
    #allocation7 [shape = 's32[1]{0}', space=sflag, size = 0x4, scoped, tag = 'scoped memory for tpu_custom_call.1']
    #allocation8 [shape = 'u8[262144]{0}', space=vmem, size = 0x40000, scoped, tag = 'input window, operand 5, single buffered']
    %15 = vsyncpa [#allocation5], 0
    %s16 = scalar_lea.sflag [#allocation5], 1
    %17 = vsyncpa %s16, 0
    %18 = vsyncpa [#allocation7], 0
    loop: start=0, step=1, limit=6
    $region2: #{tpu_custom_call.1} parent=1 // loop_pre_header
      _
    $region3: #{tpu_custom_call.1} parent=1 // loop_header
      %s20 = sphi 0, %s24
      %p21 = scmp.ge.s32.totalorder %s20, 6
      %s27 = sphi 0, %s39
      %s28 = sphi 0, %s35
      %s29 = sphi 0, %s27
      %s30 = sphi 0, %s28
      %s31 = sphi 0, %s29
      %s32 = sphi 0, %s30
      %s44 = sphi 0, %s46
      %s47 = sphi 0, %s44
      %s48 = sphi 0, %s47
      %s64 = sphi 0, %s48
      %s70 = sphi 0, %s72
      %s73 = sphi 0, %s70
      %s74 = sphi 0, %s73
      %s90 = sphi 0, %s74
      %s96 = sphi 0, %s98
      %s99 = sphi 0, %s96
      %s100 = sphi 0, %s99
      %s116 = sphi 0, %s100
      %s120 = sphi 0, %s120
      %s122 = sphi 0, %s120
      %s123 = sphi 0, %s122
      %s137 = sphi 0, %s123
      %s141 = sphi 0, %s141
      %s143 = sphi 0, %s141
      %s144 = sphi 0, %s143
      %s158 = sphi 0, %s144
      %s162 = sphi 0, %s162
      %s164 = sphi 0, %s162
      %s165 = sphi 0, %s164
      %s179 = sphi 0, %s165
      %s183 = sphi 0, %s183
      %s185 = sphi 0, %s183
      %s186 = sphi 0, %s185
      %s200 = sphi 0, %s186
      %s204 = sphi 0, %s204
      %s206 = sphi 0, %s204
      %s207 = sphi 0, %s206
      %s221 = sphi 0, %s207
      %s225 = sphi 0, %s225
      %s227 = sphi 0, %s225
      %s228 = sphi 0, %s227
      %s242 = sphi 0, %s228
      %s248 = sphi 0, %s250
      %s251 = sphi 0, %s248
      %s252 = sphi 0, %s251
      %s268 = sphi 0, %s252
    $region4: #{tpu_custom_call.1} parent=1 // loop_header_branch
      %23 = sbr.rel (%p21) target = $region8
    $region5: #{tpu_custom_call.1} parent=1 // loop_body
      %s25 = ssub.s32 %s20, 1
      %s26 = ssub.s32 %s20, 2
      %s33 = sadd.s32 1, %s28
      %p34 = scmp.ge.s32.totalorder %s33, 1
      %s35 = scalar_select %p34, 0, %s33
      %s36 = sadd.s32 1, %s27
      %s37 = scalar_select %p34, %s36, %s27
      %p38 = scmp.ge.s32.totalorder %s37, 4
      %s39 = scalar_select %p38, 0, %s37
      %s40 = ssub.s32 %s27, %s39
      %s41 = ssub.s32 %s28, %s35
      %s42 = sor.u32 %s40, %s41
      %p43 = scmp.eq.s32.totalorder %s42, 0
      %s45 = sadd.s32 %s44, 1
      %s46 = scalar_select %p43, %s44, %s45
      %p49 = pneg %p43
      %p50 = scmp.eq.s32.totalorder %s20, 3
      %p51 = por %p49, %p50
      %p52 = scmp.ne.s32.totalorder %s44, %s47
      %p53 = scmp.eq.s32.totalorder %s20, 0
      %p54 = por %p52, %p53
      %p55 = scmp.ne.s32.totalorder %s44, %s47
      %p56 = scmp.eq.s32.totalorder %s25, 3
      %p57 = por %p55, %p56
      %p58 = scmp.ne.s32.totalorder %s47, %s48
      %p59 = scmp.eq.s32.totalorder %s25, 0
      %p60 = por %p58, %p59
      %p61 = scmp.ne.s32.totalorder %s47, %s48
      %p62 = scmp.eq.s32.totalorder %s26, 3
      %p63 = por %p61, %p62
      %p65 = scmp.ne.s32.totalorder %s48, %s64
      %p66 = scmp.eq.s32.totalorder %s26, 0
      %p67 = por %p65, %p66
      %s68 = ssub.s32 %s27, %s39
      %p69 = scmp.eq.s32.totalorder %s68, 0
      %s71 = sadd.s32 %s70, 1
      %s72 = scalar_select %p69, %s70, %s71
      %p75 = pneg %p69
      %p76 = scmp.eq.s32.totalorder %s20, 3
      %p77 = por %p75, %p76
      %p78 = scmp.ne.s32.totalorder %s70, %s73
      %p79 = scmp.eq.s32.totalorder %s20, 0
      %p80 = por %p78, %p79
      %p81 = scmp.ne.s32.totalorder %s70, %s73
      %p82 = scmp.eq.s32.totalorder %s25, 3
      %p83 = por %p81, %p82
      %p84 = scmp.ne.s32.totalorder %s73, %s74
      %p85 = scmp.eq.s32.totalorder %s25, 0
      %p86 = por %p84, %p85
      %p87 = scmp.ne.s32.totalorder %s73, %s74
      %p88 = scmp.eq.s32.totalorder %s26, 3
      %p89 = por %p87, %p88
      %p91 = scmp.ne.s32.totalorder %s74, %s90
      %p92 = scmp.eq.s32.totalorder %s26, 0
      %p93 = por %p91, %p92
      %s94 = ssub.s32 %s28, %s35
      %p95 = scmp.eq.s32.totalorder %s94, 0
      %s97 = sadd.s32 %s96, 1
      %s98 = scalar_select %p95, %s96, %s97
      %p101 = pneg %p95
      %p102 = scmp.eq.s32.totalorder %s20, 3
      %p103 = por %p101, %p102
      %p104 = scmp.ne.s32.totalorder %s96, %s99
      %p105 = scmp.eq.s32.totalorder %s20, 0
      %p106 = por %p104, %p105
      %p107 = scmp.ne.s32.totalorder %s96, %s99
      %p108 = scmp.eq.s32.totalorder %s25, 3
      %p109 = por %p107, %p108
      %p110 = scmp.ne.s32.totalorder %s99, %s100
      %p111 = scmp.eq.s32.totalorder %s25, 0
      %p112 = por %p110, %p111
      %p113 = scmp.ne.s32.totalorder %s99, %s100
      %p114 = scmp.eq.s32.totalorder %s26, 3
      %p115 = por %p113, %p114
      %p117 = scmp.ne.s32.totalorder %s100, %s116
      %p118 = scmp.eq.s32.totalorder %s26, 0
      %p119 = por %p117, %p118
      %s121 = sadd.s32 %s120, 1
      %p124 = scmp.eq.s32.totalorder %s20, 3
      %p125 = scmp.ne.s32.totalorder %s120, %s122
      %p126 = scmp.eq.s32.totalorder %s20, 0
      %p127 = por %p125, %p126
      %p128 = scmp.ne.s32.totalorder %s120, %s122
      %p129 = scmp.eq.s32.totalorder %s25, 3
      %p130 = por %p128, %p129
      %p131 = scmp.ne.s32.totalorder %s122, %s123
      %p132 = scmp.eq.s32.totalorder %s25, 0
      %p133 = por %p131, %p132
      %p134 = scmp.ne.s32.totalorder %s122, %s123
      %p135 = scmp.eq.s32.totalorder %s26, 3
      %p136 = por %p134, %p135
      %p138 = scmp.ne.s32.totalorder %s123, %s137
      %p139 = scmp.eq.s32.totalorder %s26, 0
      %p140 = por %p138, %p139
      %s142 = sadd.s32 %s141, 1
      %p145 = scmp.eq.s32.totalorder %s20, 3
      %p146 = scmp.ne.s32.totalorder %s141, %s143
      %p147 = scmp.eq.s32.totalorder %s20, 0
      %p148 = por %p146, %p147
      %p149 = scmp.ne.s32.totalorder %s141, %s143
      %p150 = scmp.eq.s32.totalorder %s25, 3
      %p151 = por %p149, %p150
      %p152 = scmp.ne.s32.totalorder %s143, %s144
      %p153 = scmp.eq.s32.totalorder %s25, 0
      %p154 = por %p152, %p153
      %p155 = scmp.ne.s32.totalorder %s143, %s144
      %p156 = scmp.eq.s32.totalorder %s26, 3
      %p157 = por %p155, %p156
      %p159 = scmp.ne.s32.totalorder %s144, %s158
      %p160 = scmp.eq.s32.totalorder %s26, 0
      %p161 = por %p159, %p160
      %s163 = sadd.s32 %s162, 1
      %p166 = scmp.eq.s32.totalorder %s20, 3
      %p167 = scmp.ne.s32.totalorder %s162, %s164
      %p168 = scmp.eq.s32.totalorder %s20, 0
      %p169 = por %p167, %p168
      %p170 = scmp.ne.s32.totalorder %s162, %s164
      %p171 = scmp.eq.s32.totalorder %s25, 3
      %p172 = por %p170, %p171
      %p173 = scmp.ne.s32.totalorder %s164, %s165
      %p174 = scmp.eq.s32.totalorder %s25, 0
      %p175 = por %p173, %p174
      %p176 = scmp.ne.s32.totalorder %s164, %s165
      %p177 = scmp.eq.s32.totalorder %s26, 3
      %p178 = por %p176, %p177
      %p180 = scmp.ne.s32.totalorder %s165, %s179
      %p181 = scmp.eq.s32.totalorder %s26, 0
      %p182 = por %p180, %p181
      %s184 = sadd.s32 %s183, 1
      %p187 = scmp.eq.s32.totalorder %s20, 3
      %p188 = scmp.ne.s32.totalorder %s183, %s185
      %p189 = scmp.eq.s32.totalorder %s20, 0
      %p190 = por %p188, %p189
      %p191 = scmp.ne.s32.totalorder %s183, %s185
      %p192 = scmp.eq.s32.totalorder %s25, 3
      %p193 = por %p191, %p192
      %p194 = scmp.ne.s32.totalorder %s185, %s186
      %p195 = scmp.eq.s32.totalorder %s25, 0
      %p196 = por %p194, %p195
      %p197 = scmp.ne.s32.totalorder %s185, %s186
      %p198 = scmp.eq.s32.totalorder %s26, 3
      %p199 = por %p197, %p198
      %p201 = scmp.ne.s32.totalorder %s186, %s200
      %p202 = scmp.eq.s32.totalorder %s26, 0
      %p203 = por %p201, %p202
      %s205 = sadd.s32 %s204, 1
      %p208 = scmp.eq.s32.totalorder %s20, 3
      %p209 = scmp.ne.s32.totalorder %s204, %s206
      %p210 = scmp.eq.s32.totalorder %s20, 0
      %p211 = por %p209, %p210
      %p212 = scmp.ne.s32.totalorder %s204, %s206
      %p213 = scmp.eq.s32.totalorder %s25, 3
      %p214 = por %p212, %p213
      %p215 = scmp.ne.s32.totalorder %s206, %s207
      %p216 = scmp.eq.s32.totalorder %s25, 0
      %p217 = por %p215, %p216
      %p218 = scmp.ne.s32.totalorder %s206, %s207
      %p219 = scmp.eq.s32.totalorder %s26, 3
      %p220 = por %p218, %p219
      %p222 = scmp.ne.s32.totalorder %s207, %s221
      %p223 = scmp.eq.s32.totalorder %s26, 0
      %p224 = por %p222, %p223
      %s226 = sadd.s32 %s225, 1
      %p229 = scmp.eq.s32.totalorder %s20, 3
      %p230 = scmp.ne.s32.totalorder %s225, %s227
      %p231 = scmp.eq.s32.totalorder %s20, 0
      %p232 = por %p230, %p231
      %p233 = scmp.ne.s32.totalorder %s225, %s227
      %p234 = scmp.eq.s32.totalorder %s25, 3
      %p235 = por %p233, %p234
      %p236 = scmp.ne.s32.totalorder %s227, %s228
      %p237 = scmp.eq.s32.totalorder %s25, 0
      %p238 = por %p236, %p237
      %p239 = scmp.ne.s32.totalorder %s227, %s228
      %p240 = scmp.eq.s32.totalorder %s26, 3
      %p241 = por %p239, %p240
      %p243 = scmp.ne.s32.totalorder %s228, %s242
      %p244 = scmp.eq.s32.totalorder %s26, 0
      %p245 = por %p243, %p244
      %s246 = ssub.s32 %s27, %s39
      %p247 = scmp.eq.s32.totalorder %s246, 0
      %s249 = sadd.s32 %s248, 1
      %s250 = scalar_select %p247, %s248, %s249
      %p253 = pneg %p247
      %p254 = scmp.eq.s32.totalorder %s20, 3
      %p255 = por %p253, %p254
      %p256 = scmp.ne.s32.totalorder %s248, %s251
      %p257 = scmp.eq.s32.totalorder %s20, 0
      %p258 = por %p256, %p257
      %p259 = scmp.ne.s32.totalorder %s248, %s251
      %p260 = scmp.eq.s32.totalorder %s25, 3
      %p261 = por %p259, %p260
      %p262 = scmp.ne.s32.totalorder %s251, %s252
      %p263 = scmp.eq.s32.totalorder %s25, 0
      %p264 = por %p262, %p263
      %p265 = scmp.ne.s32.totalorder %s251, %s252
      %p266 = scmp.eq.s32.totalorder %s26, 3
      %p267 = por %p265, %p266
      %p269 = scmp.ne.s32.totalorder %s252, %s268
      %p270 = scmp.eq.s32.totalorder %s26, 0
      %p271 = por %p269, %p270
      %p272 = scmp.le.s32.totalorder 1, %s20
      %p273 = scmp.lt.s32.totalorder %s20, 5
      %p274 = pnand %p272, %p273
      %p275 = pneg %p274
      // Predicated region
      $region9: #{tpu_custom_call.1} parent=5 // pred_check
        _
      $region10: #{tpu_custom_call.1} parent=5 // pred_check_branch
        %277 = sbr.rel (%p274) target = $region12
      $region11: #{tpu_custom_call.1} parent=5 // pred_region
        %s278 = ssub.s32 %s20, 1
        // Predicated region
        $region13: #{tpu_custom_call.1} parent=11 // pred_check
          %p279 = pneg %p112
        $region14: #{tpu_custom_call.1} parent=11 // pred_check_branch
          %281 = sbr.rel (%p279) target = $region16
        $region15: #{tpu_custom_call.1} parent=11 // pred_region
          %s282 = smul.u32 32, %s30
          %s284 = ssub.s32 8192, 8192
          %285 = vsyncadd [#allocation7], %s284
          %s286 = smul.addr %s282, 4
          %s287 = smul.addr %s286, 64
          %s288 = scalar_lea.hbm %s2, %s287
          %s289 = sshll.u32 [#allocation6], 4
          %s290 = int_to_ptr.vmem [resolvable:$true] %s289
          %295 = dma.hbm_to_vmem [thread:$0]  %s288, 8192, %s290, [#allocation7], 256, 256, 16
        $region16: #{tpu_custom_call.1} parent=11 // pred_fallthru
          _
        // Predicated region
        $region17: #{tpu_custom_call.1} parent=11 // pred_check
          %p296 = pneg %p133
        $region18: #{tpu_custom_call.1} parent=11 // pred_check_branch
          %298 = sbr.rel (%p296) target = $region20
        $region19: #{tpu_custom_call.1} parent=11 // pred_region
          _
        $region20: #{tpu_custom_call.1} parent=11 // pred_fallthru
          _
        // Predicated region
        $region21: #{tpu_custom_call.1} parent=11 // pred_check
          %p299 = pneg %p154
        $region22: #{tpu_custom_call.1} parent=11 // pred_check_branch
          %301 = sbr.rel (%p299) target = $region24
        $region23: #{tpu_custom_call.1} parent=11 // pred_region
          _
        $region24: #{tpu_custom_call.1} parent=11 // pred_fallthru
          _
        // Predicated region
        $region25: #{tpu_custom_call.1} parent=11 // pred_check
          %p302 = pneg %p175
        $region26: #{tpu_custom_call.1} parent=11 // pred_check_branch
          %304 = sbr.rel (%p302) target = $region28
        $region27: #{tpu_custom_call.1} parent=11 // pred_region
          %s306 = ssub.s32 8192, 8192
          %307 = vsyncadd [#allocation7], %s306
          %s308 = sshll.u32 [#allocation8], 4
          %s309 = int_to_ptr.vmem [resolvable:$true] %s308
          %314 = dma.hbm_to_vmem [thread:$0]  %s5, 8192, %s309, [#allocation7], 128, 128, 8
        $region28: #{tpu_custom_call.1} parent=11 // pred_fallthru
          _
        // Predicated region
        $region29: #{tpu_custom_call.1} parent=11 // pred_check
          %p315 = pneg %p196
        $region30: #{tpu_custom_call.1} parent=11 // pred_check_branch
          %317 = sbr.rel (%p315) target = $region32
        $region31: #{tpu_custom_call.1} parent=11 // pred_region
          _
        $region32: #{tpu_custom_call.1} parent=11 // pred_fallthru
          _
        // Predicated region
        $region33: #{tpu_custom_call.1} parent=11 // pred_check
          %p318 = pneg %p217
        $region34: #{tpu_custom_call.1} parent=11 // pred_check_branch
          %320 = sbr.rel (%p318) target = $region36
        $region35: #{tpu_custom_call.1} parent=11 // pred_region
          _
        $region36: #{tpu_custom_call.1} parent=11 // pred_fallthru
          _
        // Predicated region
        $region37: #{tpu_custom_call.1} parent=11 // pred_check
          %p321 = pneg %p238
        $region38: #{tpu_custom_call.1} parent=11 // pred_check_branch
          %323 = sbr.rel (%p321) target = $region40
        $region39: #{tpu_custom_call.1} parent=11 // pred_region
          _
        $region40: #{tpu_custom_call.1} parent=11 // pred_fallthru
          _
      $region12: #{tpu_custom_call.1} parent=5 // pred_fallthru
        _
      %p324 = scmp.lt.s32.totalorder %s20, 4
      // Predicated region
      $region41: #{tpu_custom_call.1} parent=5 // pred_check
        %p325 = pneg %p324
      $region42: #{tpu_custom_call.1} parent=5 // pred_check_branch
        %327 = sbr.rel (%p325) target = $region44
      $region43: #{tpu_custom_call.1} parent=5 // pred_region
        // Predicated region
        $region45: #{tpu_custom_call.1} parent=43 // pred_check
          %p328 = pneg %p54
        $region46: #{tpu_custom_call.1} parent=43 // pred_check_branch
          %330 = sbr.rel (%p328) target = $region48
        $region47: #{tpu_custom_call.1} parent=43 // pred_region
          %s331 = sand.u32 %s44, 1
          %s332 = scalar_lea.sflag [#allocation5], %s331
          %s333 = sand.u32 %s44, 1
          %s334 = smul.addr %s333, 32
          %s335 = scalar_lea.vmem [#allocation4], %s334
          %s336 = smul.u32 2, %s27
          %s337 = smul.u32 2, %s28
          %s339 = ssub.s32 512, 512
          %340 = vsyncadd %s332, %s339
          %s341 = smul.addr %s336, 2
          %s342 = sadd.s32 %s337, %s341
          %s343 = smul.addr %s342, 128
          %s344 = scalar_lea.hbm %s0, %s343
          %s345 = sshll.u32 %s335, 4
          %s346 = int_to_ptr.vmem [resolvable:$true] %s345
          %351 = dma.hbm_to_vmem [thread:$0]  %s344, 512, %s346, %s332, 256, 256, 16
        $region48: #{tpu_custom_call.1} parent=43 // pred_fallthru
          _
        // Predicated region
        $region49: #{tpu_custom_call.1} parent=43 // pred_check
          %p352 = pneg %p80
        $region50: #{tpu_custom_call.1} parent=43 // pred_check_branch
          %354 = sbr.rel (%p352) target = $region52
        $region51: #{tpu_custom_call.1} parent=43 // pred_region
          %s355 = smul.u32 2, %s27
          %p356 = scmp.lt.s32.totalorder %s355, 7
          %s357 = scalar_select %p356, %s355, 7
          %s358 = smul.addr %s357, 8
          %s359 = scalar_lea.vmem %s1, %s358
          %s360 = smul.u32 2, %s27
        $region52: #{tpu_custom_call.1} parent=43 // pred_fallthru
          _
      $region44: #{tpu_custom_call.1} parent=5 // pred_fallthru
        _
      %p361 = scmp.le.s32.totalorder 1, %s20
      %p362 = scmp.lt.s32.totalorder %s20, 5
      %p363 = pnand %p361, %p362
      %p364 = pneg %p363
      // Predicated region
      $region53: #{tpu_custom_call.1} parent=5 // pred_check
        _
      $region54: #{tpu_custom_call.1} parent=5 // pred_check_branch
        %366 = sbr.rel (%p363) target = $region56
      $region55: #{tpu_custom_call.1} parent=5 // pred_region
        %s367 = ssub.s32 %s20, 1
        %s368 = sand.u32 %s47, 1
        %s369 = scalar_lea.sflag [#allocation5], %s368
        %s370 = sand.u32 %s47, 1
        %s371 = smul.addr %s370, 32
        %s372 = scalar_lea.vmem [#allocation4], %s371
        // Predicated region
        $region57: #{tpu_custom_call.1} parent=55 // pred_check
          %p373 = pneg %p60
        $region58: #{tpu_custom_call.1} parent=55 // pred_check_branch
          %375 = sbr.rel (%p373) target = $region60
        $region59: #{tpu_custom_call.1} parent=55 // pred_region
          %376 = dma.done %s369, 512
        $region60: #{tpu_custom_call.1} parent=55 // pred_fallthru
          _
        // Predicated region
        $region61: #{tpu_custom_call.1} parent=55 // pred_check
          %p377 = pneg %p112
        $region62: #{tpu_custom_call.1} parent=55 // pred_check_branch
          %379 = sbr.rel (%p377) target = $region64
        $region63: #{tpu_custom_call.1} parent=55 // pred_region
          %380 = dma.done [#allocation7], 8192
        $region64: #{tpu_custom_call.1} parent=55 // pred_fallthru
          _
        // Predicated region
        $region65: #{tpu_custom_call.1} parent=55 // pred_check
          %p381 = pneg %p175
        $region66: #{tpu_custom_call.1} parent=55 // pred_check_branch
          %383 = sbr.rel (%p381) target = $region68
        $region67: #{tpu_custom_call.1} parent=55 // pred_region
          %384 = dma.done [#allocation7], 8192
        $region68: #{tpu_custom_call.1} parent=55 // pred_fallthru
          _
        %s385 = sand.u32 %s47, 1
        %s386 = scalar_lea.sflag [#allocation5], %s385
        %s387 = sand.u32 %s47, 1
        %s388 = smul.addr %s387, 32
        %s389 = scalar_lea.vmem [#allocation4], %s388
        %p390 = pneg %p60
        %p391 = pneg %p57
        %s392 = smul.u32 2, %s29
        %p393 = scmp.lt.s32.totalorder %s392, 7
        %s394 = scalar_select %p393, %s392, 7
        %s395 = smul.addr %s394, 8
        %s396 = scalar_lea.vmem %s1, %s395
        %p397 = pneg %p86
        %p398 = pneg %p83
        %p399 = pneg %p112
        %p400 = pneg %p109
        %p401 = pneg %p133
        %p402 = pneg %p130
        %p403 = pneg %p154
        %p404 = pneg %p151
        %p405 = pneg %p175
        %p406 = pneg %p172
        %p407 = pneg %p196
        %p408 = pneg %p193
        %p409 = pneg %p217
        %p410 = pneg %p214
        %p411 = pneg %p238
        %p412 = pneg %p235
        %p413 = pneg %p264
        %p414 = pneg %p261
        %s415 = smul.u32 2, %s29
        %p416 = scmp.lt.s32.totalorder %s415, 7
        %s417 = scalar_select %p416, %s415, 7
        %s418 = smul.addr %s417, 8
        %s419 = scalar_lea.vmem %s9, %s418
        %s420 = smul.u32 2, %s29
        %s421 = smul.u32 2, %s30
        %s422 = smul.u32 2, %s29
        %p423 = scmp.lt.s32.totalorder %s422, 7
        %s424 = scalar_select %p423, %s422, 7
        %s425 = smul.addr %s424, 8
        %s426 = scalar_lea.vmem %s1, %s425
        %s427 = smul.u32 2, %s29
        %s428 = smul.u32 32, %s30
        %s429 = smul.u32 2, %s29
        %p430 = scmp.lt.s32.totalorder %s429, 7
        %s431 = scalar_select %p430, %s429, 7
        %s432 = smul.addr %s431, 8
        %s433 = scalar_lea.vmem %s9, %s432
        %s434 = smul.u32 2, %s29
        %p435 = scmp.eq.s32.totalorder %s30, 0
        // Predicated region
        $region69: #{tpu_custom_call.1} parent=55 // pred_check
          %p436 = pneg %p435
        $region70: #{tpu_custom_call.1} parent=55 // pred_check_branch
          %438 = sbr.rel (%p436) target = $region72
        $region71: #{tpu_custom_call.1} parent=55 // pred_region
          %439 = vst [vmem:[#allocation2] sm:$0xff] 0.0
          %440 = vst [vmem:[#allocation2 + $0x8] sm:$0xff] 0.0
          %441 = vst [vmem:[#allocation2 + $0x10] sm:$0xff] 0.0
          %442 = vst [vmem:[#allocation2 + $0x18] sm:$0xff] 0.0
          %443 = vst [vmem:[#allocation2 + $0x20] sm:$0xff] 0.0
          %444 = vst [vmem:[#allocation2 + $0x28] sm:$0xff] 0.0
          %445 = vst [vmem:[#allocation2 + $0x30] sm:$0xff] 0.0
          %446 = vst [vmem:[#allocation2 + $0x38] sm:$0xff] 0.0
        $region72: #{tpu_custom_call.1} parent=55 // pred_fallthru
          _
        %v447 = vld [vmem:[#allocation2] sm:$0xff]
        %v448 = vld [vmem:[#allocation2 + $0x8] sm:$0xff]
        %v449 = vld [vmem:[#allocation2 + $0x10] sm:$0xff]
        %v450 = vld [vmem:[#allocation2 + $0x18] sm:$0xff]
        %v451 = vld [vmem:[#allocation2 + $0x20] sm:$0xff]
        %v452 = vld [vmem:[#allocation2 + $0x28] sm:$0xff]
        %v453 = vld [vmem:[#allocation2 + $0x30] sm:$0xff]
        %v454 = vld [vmem:[#allocation2 + $0x38] sm:$0xff]
        %v455 = vld [vmem:[%s372] sm:$0xff]
        %v456 = vld [vmem:[%s372 + $0x8] sm:$0xff]
        %v457 = vld [vmem:[%s372 + $0x10] sm:$0xff]
        %v458 = vld [vmem:[%s372 + $0x18] sm:$0xff]
        %v459 = vpack.c.bf16 %v457, %v455
        %v460 = vpack.c.bf16 %v458, %v456
        %v461 = vld [vmem:[#allocation6] sm:$0xff]
        %v462 = vld [vmem:[#allocation6 + $0x8] sm:$0xff]
        %v463 = vld [vmem:[#allocation6 + $0x10] sm:$0xff]
        %v464 = vld [vmem:[#allocation6 + $0x18] sm:$0xff]
        %v465 = vld [vmem:[#allocation6 + $0x20] sm:$0xff]
        %v466 = vld [vmem:[#allocation6 + $0x28] sm:$0xff]
        %v467 = vld [vmem:[#allocation6 + $0x30] sm:$0xff]
        %v468 = vld [vmem:[#allocation6 + $0x38] sm:$0xff]
        %v469 = vld [vmem:[#allocation6 + $0x40] sm:$0xff]
        %v470 = vld [vmem:[#allocation6 + $0x48] sm:$0xff]
        %v471 = vld [vmem:[#allocation6 + $0x50] sm:$0xff]
        %v472 = vld [vmem:[#allocation6 + $0x58] sm:$0xff]
        %v473 = vld [vmem:[#allocation6 + $0x60] sm:$0xff]
        %v474 = vld [vmem:[#allocation6 + $0x68] sm:$0xff]
        %v475 = vld [vmem:[#allocation6 + $0x70] sm:$0xff]
        %v476 = vld [vmem:[#allocation6 + $0x78] sm:$0xff]
        %v477 = vld [vmem:[#allocation6 + $0x80] sm:$0xff]
        %v478 = vld [vmem:[#allocation6 + $0x88] sm:$0xff]
        %v479 = vld [vmem:[#allocation6 + $0x90] sm:$0xff]
        %v480 = vld [vmem:[#allocation6 + $0x98] sm:$0xff]
        %v481 = vld [vmem:[#allocation6 + $0xa0] sm:$0xff]
        %v482 = vld [vmem:[#allocation6 + $0xa8] sm:$0xff]
        %v483 = vld [vmem:[#allocation6 + $0xb0] sm:$0xff]
        %v484 = vld [vmem:[#allocation6 + $0xb8] sm:$0xff]
        %v485 = vld [vmem:[#allocation6 + $0xc0] sm:$0xff]
        %v486 = vld [vmem:[#allocation6 + $0xc8] sm:$0xff]
        %v487 = vld [vmem:[#allocation6 + $0xd0] sm:$0xff]
        %v488 = vld [vmem:[#allocation6 + $0xd8] sm:$0xff]
        %v489 = vld [vmem:[#allocation6 + $0xe0] sm:$0xff]
        %v490 = vld [vmem:[#allocation6 + $0xe8] sm:$0xff]
        %v491 = vld [vmem:[#allocation6 + $0xf0] sm:$0xff]
        %v492 = vld [vmem:[#allocation6 + $0xf8] sm:$0xff]
        %v493 = vld [vmem:[#allocation6 + $0x100] sm:$0xff]
        %v494 = vld [vmem:[#allocation6 + $0x108] sm:$0xff]
        %v495 = vld [vmem:[#allocation6 + $0x110] sm:$0xff]
        %v496 = vld [vmem:[#allocation6 + $0x118] sm:$0xff]
        %v497 = vld [vmem:[#allocation6 + $0x120] sm:$0xff]
        %v498 = vld [vmem:[#allocation6 + $0x128] sm:$0xff]
        %v499 = vld [vmem:[#allocation6 + $0x130] sm:$0xff]
        %v500 = vld [vmem:[#allocation6 + $0x138] sm:$0xff]
        %v501 = vld [vmem:[#allocation6 + $0x140] sm:$0xff]
        %v502 = vld [vmem:[#allocation6 + $0x148] sm:$0xff]
        %v503 = vld [vmem:[#allocation6 + $0x150] sm:$0xff]
        %v504 = vld [vmem:[#allocation6 + $0x158] sm:$0xff]
        %v505 = vld [vmem:[#allocation6 + $0x160] sm:$0xff]
        %v506 = vld [vmem:[#allocation6 + $0x168] sm:$0xff]
        %v507 = vld [vmem:[#allocation6 + $0x170] sm:$0xff]
        %v508 = vld [vmem:[#allocation6 + $0x178] sm:$0xff]
        %v509 = vld [vmem:[#allocation6 + $0x180] sm:$0xff]
        %v510 = vld [vmem:[#allocation6 + $0x188] sm:$0xff]
        %v511 = vld [vmem:[#allocation6 + $0x190] sm:$0xff]
        %v512 = vld [vmem:[#allocation6 + $0x198] sm:$0xff]
        %v513 = vld [vmem:[#allocation6 + $0x1a0] sm:$0xff]
        %v514 = vld [vmem:[#allocation6 + $0x1a8] sm:$0xff]
        %v515 = vld [vmem:[#allocation6 + $0x1b0] sm:$0xff]
        %v516 = vld [vmem:[#allocation6 + $0x1b8] sm:$0xff]
        %v517 = vld [vmem:[#allocation6 + $0x1c0] sm:$0xff]
        %v518 = vld [vmem:[#allocation6 + $0x1c8] sm:$0xff]
        %v519 = vld [vmem:[#allocation6 + $0x1d0] sm:$0xff]
        %v520 = vld [vmem:[#allocation6 + $0x1d8] sm:$0xff]
        %v521 = vld [vmem:[#allocation6 + $0x1e0] sm:$0xff]
        %v522 = vld [vmem:[#allocation6 + $0x1e8] sm:$0xff]
        %v523 = vld [vmem:[#allocation6 + $0x1f0] sm:$0xff]
        %v524 = vld [vmem:[#allocation6 + $0x1f8] sm:$0xff]
        %v589 = vunpack.c.l.b16 %v461
        %v590 = vunpack.c.h.b16 %v461
        %v591 = vunpack.c.l.b16 %v462
        %v592 = vunpack.c.h.b16 %v462
        %v593 = vunpack.c.l.b16 %v463
        %v594 = vunpack.c.h.b16 %v463
        %v595 = vunpack.c.l.b16 %v464
        %v596 = vunpack.c.h.b16 %v464
        %v597 = vunpack.c.l.b16 %v465
        %v598 = vunpack.c.h.b16 %v465
        %v599 = vunpack.c.l.b16 %v466
        %v600 = vunpack.c.h.b16 %v466
        %v601 = vunpack.c.l.b16 %v467
        %v602 = vunpack.c.h.b16 %v467
        %v603 = vunpack.c.l.b16 %v468
        %v604 = vunpack.c.h.b16 %v468
        %v605 = vunpack.c.l.b16 %v469
        %v606 = vunpack.c.h.b16 %v469
        %v607 = vunpack.c.l.b16 %v470
        %v608 = vunpack.c.h.b16 %v470
        %v609 = vunpack.c.l.b16 %v471
        %v610 = vunpack.c.h.b16 %v471
        %v611 = vunpack.c.l.b16 %v472
        %v612 = vunpack.c.h.b16 %v472
        %v613 = vunpack.c.l.b16 %v473
        %v614 = vunpack.c.h.b16 %v473
        %v615 = vunpack.c.l.b16 %v474
        %v616 = vunpack.c.h.b16 %v474
        %v617 = vunpack.c.l.b16 %v475
        %v618 = vunpack.c.h.b16 %v475
        %v619 = vunpack.c.l.b16 %v476
        %v620 = vunpack.c.h.b16 %v476
        %v621 = vunpack.c.l.b16 %v477
        %v622 = vunpack.c.h.b16 %v477
        %v623 = vunpack.c.l.b16 %v478
        %v624 = vunpack.c.h.b16 %v478
        %v625 = vunpack.c.l.b16 %v479
        %v626 = vunpack.c.h.b16 %v479
        %v627 = vunpack.c.l.b16 %v480
        %v628 = vunpack.c.h.b16 %v480
        %v629 = vunpack.c.l.b16 %v481
        %v630 = vunpack.c.h.b16 %v481
        %v631 = vunpack.c.l.b16 %v482
        %v632 = vunpack.c.h.b16 %v482
        %v633 = vunpack.c.l.b16 %v483
        %v634 = vunpack.c.h.b16 %v483
        %v635 = vunpack.c.l.b16 %v484
        %v636 = vunpack.c.h.b16 %v484
        %v637 = vunpack.c.l.b16 %v485
        %v638 = vunpack.c.h.b16 %v485
        %v639 = vunpack.c.l.b16 %v486
        %v640 = vunpack.c.h.b16 %v486
        %v641 = vunpack.c.l.b16 %v487
        %v642 = vunpack.c.h.b16 %v487
        %v643 = vunpack.c.l.b16 %v488
        %v644 = vunpack.c.h.b16 %v488
        %v645 = vunpack.c.l.b16 %v489
        %v646 = vunpack.c.h.b16 %v489
        %v647 = vunpack.c.l.b16 %v490
        %v648 = vunpack.c.h.b16 %v490
        %v649 = vunpack.c.l.b16 %v491
        %v650 = vunpack.c.h.b16 %v491
        %v651 = vunpack.c.l.b16 %v492
        %v652 = vunpack.c.h.b16 %v492
        %v653 = vunpack.c.l.b16 %v493
        %v654 = vunpack.c.h.b16 %v493
        %v655 = vunpack.c.l.b16 %v494
        %v656 = vunpack.c.h.b16 %v494
        %v657 = vunpack.c.l.b16 %v495
        %v658 = vunpack.c.h.b16 %v495
        %v659 = vunpack.c.l.b16 %v496
        %v660 = vunpack.c.h.b16 %v496
        %v661 = vunpack.c.l.b16 %v497
        %v662 = vunpack.c.h.b16 %v497
        %v663 = vunpack.c.l.b16 %v498
        %v664 = vunpack.c.h.b16 %v498
        %v665 = vunpack.c.l.b16 %v499
        %v666 = vunpack.c.h.b16 %v499
        %v667 = vunpack.c.l.b16 %v500
        %v668 = vunpack.c.h.b16 %v500
        %v669 = vunpack.c.l.b16 %v501
        %v670 = vunpack.c.h.b16 %v501
        %v671 = vunpack.c.l.b16 %v502
        %v672 = vunpack.c.h.b16 %v502
        %v673 = vunpack.c.l.b16 %v503
        %v674 = vunpack.c.h.b16 %v503
        %v675 = vunpack.c.l.b16 %v504
        %v676 = vunpack.c.h.b16 %v504
        %v677 = vunpack.c.l.b16 %v505
        %v678 = vunpack.c.h.b16 %v505
        %v679 = vunpack.c.l.b16 %v506
        %v680 = vunpack.c.h.b16 %v506
        %v681 = vunpack.c.l.b16 %v507
        %v682 = vunpack.c.h.b16 %v507
        %v683 = vunpack.c.l.b16 %v508
        %v684 = vunpack.c.h.b16 %v508
        %v685 = vunpack.c.l.b16 %v509
        %v686 = vunpack.c.h.b16 %v509
        %v687 = vunpack.c.l.b16 %v510
        %v688 = vunpack.c.h.b16 %v510
        %v689 = vunpack.c.l.b16 %v511
        %v690 = vunpack.c.h.b16 %v511
        %v691 = vunpack.c.l.b16 %v512
        %v692 = vunpack.c.h.b16 %v512
        %v693 = vunpack.c.l.b16 %v513
        %v694 = vunpack.c.h.b16 %v513
        %v695 = vunpack.c.l.b16 %v514
        %v696 = vunpack.c.h.b16 %v514
        %v697 = vunpack.c.l.b16 %v515
        %v698 = vunpack.c.h.b16 %v515
        %v699 = vunpack.c.l.b16 %v516
        %v700 = vunpack.c.h.b16 %v516
        %v701 = vunpack.c.l.b16 %v517
        %v702 = vunpack.c.h.b16 %v517
        %v703 = vunpack.c.l.b16 %v518
        %v704 = vunpack.c.h.b16 %v518
        %v705 = vunpack.c.l.b16 %v519
        %v706 = vunpack.c.h.b16 %v519
        %v707 = vunpack.c.l.b16 %v520
        %v708 = vunpack.c.h.b16 %v520
        %v709 = vunpack.c.l.b16 %v521
        %v710 = vunpack.c.h.b16 %v521
        %v711 = vunpack.c.l.b16 %v522
        %v712 = vunpack.c.h.b16 %v522
        %v713 = vunpack.c.l.b16 %v523
        %v714 = vunpack.c.h.b16 %v523
        %v715 = vunpack.c.l.b16 %v524
        %v716 = vunpack.c.h.b16 %v524
        %v717 = vpack.c.b16 %v593, %v589
        %v718 = vpack.c.b16 %v594, %v590
        %v719 = vpack.c.b16 %v595, %v591
        %v720 = vpack.c.b16 %v596, %v592
        %v721 = vpack.c.b16 %v601, %v597
        %v722 = vpack.c.b16 %v602, %v598
        %v723 = vpack.c.b16 %v603, %v599
        %v724 = vpack.c.b16 %v604, %v600
        %v725 = vpack.c.b16 %v609, %v605
        %v726 = vpack.c.b16 %v610, %v606
        %v727 = vpack.c.b16 %v611, %v607
        %v728 = vpack.c.b16 %v612, %v608
        %v729 = vpack.c.b16 %v617, %v613
        %v730 = vpack.c.b16 %v618, %v614
        %v731 = vpack.c.b16 %v619, %v615
        %v732 = vpack.c.b16 %v620, %v616
        %v733 = vpack.c.b16 %v625, %v621
        %v734 = vpack.c.b16 %v626, %v622
        %v735 = vpack.c.b16 %v627, %v623
        %v736 = vpack.c.b16 %v628, %v624
        %v737 = vpack.c.b16 %v633, %v629
        %v738 = vpack.c.b16 %v634, %v630
        %v739 = vpack.c.b16 %v635, %v631
        %v740 = vpack.c.b16 %v636, %v632
        %v741 = vpack.c.b16 %v641, %v637
        %v742 = vpack.c.b16 %v642, %v638
        %v743 = vpack.c.b16 %v643, %v639
        %v744 = vpack.c.b16 %v644, %v640
        %v745 = vpack.c.b16 %v649, %v645
        %v746 = vpack.c.b16 %v650, %v646
        %v747 = vpack.c.b16 %v651, %v647
        %v748 = vpack.c.b16 %v652, %v648
        %v749 = vpack.c.b16 %v657, %v653
        %v750 = vpack.c.b16 %v658, %v654
        %v751 = vpack.c.b16 %v659, %v655
        %v752 = vpack.c.b16 %v660, %v656
        %v753 = vpack.c.b16 %v665, %v661
        %v754 = vpack.c.b16 %v666, %v662
        %v755 = vpack.c.b16 %v667, %v663
        %v756 = vpack.c.b16 %v668, %v664
        %v757 = vpack.c.b16 %v673, %v669
        %v758 = vpack.c.b16 %v674, %v670
        %v759 = vpack.c.b16 %v675, %v671
        %v760 = vpack.c.b16 %v676, %v672
        %v761 = vpack.c.b16 %v681, %v677
        %v762 = vpack.c.b16 %v682, %v678
        %v763 = vpack.c.b16 %v683, %v679
        %v764 = vpack.c.b16 %v684, %v680
        %v765 = vpack.c.b16 %v689, %v685
        %v766 = vpack.c.b16 %v690, %v686
        %v767 = vpack.c.b16 %v691, %v687
        %v768 = vpack.c.b16 %v692, %v688
        %v769 = vpack.c.b16 %v697, %v693
        %v770 = vpack.c.b16 %v698, %v694
        %v771 = vpack.c.b16 %v699, %v695
        %v772 = vpack.c.b16 %v700, %v696
        %v773 = vpack.c.b16 %v705, %v701
        %v774 = vpack.c.b16 %v706, %v702
        %v775 = vpack.c.b16 %v707, %v703
        %v776 = vpack.c.b16 %v708, %v704
        %v777 = vpack.c.b16 %v713, %v709
        %v778 = vpack.c.b16 %v714, %v710
        %v779 = vpack.c.b16 %v715, %v711
        %v780 = vpack.c.b16 %v716, %v712
        %845 = vmatprep.subr.bf16.mxu0 %v718
        %846 = vmatpush1.bf16.msra.mxu0 %v717
        %847 = vmatprep.subr.bf16.mxu0 %v722
        %848 = vmatpush1.bf16.msra.mxu0 %v721
        %849 = vmatprep.subr.bf16.mxu0 %v726
        %850 = vmatpush1.bf16.msra.mxu0 %v725
        %851 = vmatprep.subr.bf16.mxu0 %v730
        %852 = vmatpush1.bf16.msra.mxu0 %v729
        %853 = vmatprep.subr.bf16.mxu0 %v734
        %854 = vmatpush1.bf16.msra.mxu0 %v733
        %855 = vmatprep.subr.bf16.mxu0 %v738
        %856 = vmatpush1.bf16.msra.mxu0 %v737
        %857 = vmatprep.subr.bf16.mxu0 %v742
        %858 = vmatpush1.bf16.msra.mxu0 %v741
        %859 = vmatprep.subr.bf16.mxu0 %v746
        %860 = vmatpush1.bf16.msra.mxu0 %v745
        %861 = vmatprep.subr.bf16.mxu0 %v750
        %862 = vmatpush1.bf16.msra.mxu0 %v749
        %863 = vmatprep.subr.bf16.mxu0 %v754
        %864 = vmatpush1.bf16.msra.mxu0 %v753
        %865 = vmatprep.subr.bf16.mxu0 %v758
        %866 = vmatpush1.bf16.msra.mxu0 %v757
        %867 = vmatprep.subr.bf16.mxu0 %v762
        %868 = vmatpush1.bf16.msra.mxu0 %v761
        %869 = vmatprep.subr.bf16.mxu0 %v766
        %870 = vmatpush1.bf16.msra.mxu0 %v765
        %871 = vmatprep.subr.bf16.mxu0 %v770
        %872 = vmatpush1.bf16.msra.mxu0 %v769
        %873 = vmatprep.subr.bf16.mxu0 %v774
        %874 = vmatpush1.bf16.msra.mxu0 %v773
        %875 = vmatprep.subr.bf16.mxu0 %v778
        %876 = vmatpush1.bf16.msra.mxu0 %v777
        %877 = vmatprep.mubr.bf16.mxu0 %v460
        %878 = vmatmul.mubr.bf16.gmra.mrb[0].mxu0 %v459
        %v879 = vpop.f32.mrb[0].mxu0
        %v880 = vadd.f32 0.0, %v879
        %v881 = vpop.f32.mrb[0].mxu0
        %v882 = vadd.f32 0.0, %v881
        %v883 = vpop.f32.mrb[0].mxu0
        %v884 = vadd.f32 0.0, %v883
        %v885 = vpop.f32.mrb[0].mxu0
        %v886 = vadd.f32 0.0, %v885
        %887 = vdwg.mxu0
        %888 = vmatprep.subr.bf16.mxu0 %v720
        %889 = vmatpush1.bf16.msra.mxu0 %v719
        %890 = vmatprep.subr.bf16.mxu0 %v724
        %891 = vmatpush1.bf16.msra.mxu0 %v723
        %892 = vmatprep.subr.bf16.mxu0 %v728
        %893 = vmatpush1.bf16.msra.mxu0 %v727
        %894 = vmatprep.subr.bf16.mxu0 %v732
        %895 = vmatpush1.bf16.msra.mxu0 %v731
        %896 = vmatprep.subr.bf16.mxu0 %v736
        %897 = vmatpush1.bf16.msra.mxu0 %v735
        %898 = vmatprep.subr.bf16.mxu0 %v740
        %899 = vmatpush1.bf16.msra.mxu0 %v739
        %900 = vmatprep.subr.bf16.mxu0 %v744
        %901 = vmatpush1.bf16.msra.mxu0 %v743
        %902 = vmatprep.subr.bf16.mxu0 %v748
        %903 = vmatpush1.bf16.msra.mxu0 %v747
        %904 = vmatprep.subr.bf16.mxu0 %v752
        %905 = vmatpush1.bf16.msra.mxu0 %v751
        %906 = vmatprep.subr.bf16.mxu0 %v756
        %907 = vmatpush1.bf16.msra.mxu0 %v755
        %908 = vmatprep.subr.bf16.mxu0 %v760
        %909 = vmatpush1.bf16.msra.mxu0 %v759
        %910 = vmatprep.subr.bf16.mxu0 %v764
        %911 = vmatpush1.bf16.msra.mxu0 %v763
        %912 = vmatprep.subr.bf16.mxu0 %v768
        %913 = vmatpush1.bf16.msra.mxu0 %v767
        %914 = vmatprep.subr.bf16.mxu0 %v772
        %915 = vmatpush1.bf16.msra.mxu0 %v771
        %916 = vmatprep.subr.bf16.mxu0 %v776
        %917 = vmatpush1.bf16.msra.mxu0 %v775
        %918 = vmatprep.subr.bf16.mxu0 %v780
        %919 = vmatpush1.bf16.msra.mxu0 %v779
        %920 = vmatprep.mubr.bf16.mxu0 %v460
        %921 = vmatmul.mubr.bf16.gmra.mrb[0].mxu0 %v459
        %v922 = vpop.f32.mrb[0].mxu0
        %v923 = vadd.f32 0.0, %v922
        %v924 = vpop.f32.mrb[0].mxu0
        %v925 = vadd.f32 0.0, %v924
        %v926 = vpop.f32.mrb[0].mxu0
        %v927 = vadd.f32 0.0, %v926
        %v928 = vpop.f32.mrb[0].mxu0
        %v929 = vadd.f32 0.0, %v928
        %930 = vdwg.mxu0
        %v931 = vadd.f32 %v447, %v880
        %v932 = vadd.f32 %v448, %v882
        %v933 = vadd.f32 %v449, %v923
        %v934 = vadd.f32 %v450, %v925
        %v935 = vadd.f32 %v451, %v884
        %v936 = vadd.f32 %v452, %v886
        %v937 = vadd.f32 %v453, %v927
        %v938 = vadd.f32 %v454, %v929
        %939 = vst [vmem:[#allocation2] sm:$0xff] %v931
        %940 = vst [vmem:[#allocation2 + $0x8] sm:$0xff] %v932
        %941 = vst [vmem:[#allocation2 + $0x10] sm:$0xff] %v933
        %942 = vst [vmem:[#allocation2 + $0x18] sm:$0xff] %v934
        %943 = vst [vmem:[#allocation2 + $0x20] sm:$0xff] %v935
        %944 = vst [vmem:[#allocation2 + $0x28] sm:$0xff] %v936
        %945 = vst [vmem:[#allocation2 + $0x30] sm:$0xff] %v937
        %946 = vst [vmem:[#allocation2 + $0x38] sm:$0xff] %v938
        // Predicated region
        $region73: #{tpu_custom_call.1} parent=55 // pred_check
          %p947 = pneg %p435
        $region74: #{tpu_custom_call.1} parent=55 // pred_check_branch
          %949 = sbr.rel (%p947) target = $region76
        $region75: #{tpu_custom_call.1} parent=55 // pred_region
          %v950 = vld [vmem:[#allocation2] sm:$0xff]
          %v951 = vld [vmem:[#allocation2 + $0x8] sm:$0xff]
          %v952 = vld [vmem:[#allocation2 + $0x10] sm:$0xff]
          %v953 = vld [vmem:[#allocation2 + $0x18] sm:$0xff]
          %v954 = vld [vmem:[#allocation2 + $0x20] sm:$0xff]
          %v955 = vld [vmem:[#allocation2 + $0x28] sm:$0xff]
          %v956 = vld [vmem:[#allocation2 + $0x30] sm:$0xff]
          %v957 = vld [vmem:[#allocation2 + $0x38] sm:$0xff]
          %v958 = vld [vmem:[%s426] sm:$0xff]
          %v959 = vld [vmem:[%s426 + $0x8] sm:$0xff]
          %v960 = vld [vmem:[%s3] sm:$0xf]
          %962 = vset.pattern.permute.xlu0 0
          %963 = vperm.xlu0 %962, %v958
          %v964 = vpop.permute.xlu0 %963
          %967 = vset.pattern.permute.xlu0 0
          %968 = vperm.xlu0 %967, %v959
          %v969 = vpop.permute.xlu0 %968
          %v972 = vlaneseq
          %v973 = vshrl.u32 %v972, 7
          %v974 = vsub.s32 0, %v973
          %v975 = vrot.slane %v960, %v974
          %v976 = vlaneseq
          %v977 = vshrl.u32 %v976, 7
          %v978 = vsub.s32 1, %v977
          %v979 = vrot.slane %v960, %v978
          %v980 = vlaneseq
          %v981 = vshrl.u32 %v980, 7
          %v982 = vsub.s32 2, %v981
          %v983 = vrot.slane %v960, %v982
          %v984 = vlaneseq
          %v985 = vshrl.u32 %v984, 7
          %v986 = vsub.s32 3, %v985
          %v987 = vrot.slane %v960, %v986
          %v992 = vmul.f32 %v964, %v975
          %v993 = vmul.f32 %v964, %v979
          %v994 = vmul.f32 %v964, %v983
          %v995 = vmul.f32 %v964, %v987
          %v996 = vmul.f32 %v969, %v975
          %v997 = vmul.f32 %v969, %v979
          %v998 = vmul.f32 %v969, %v983
          %v999 = vmul.f32 %v969, %v987
          %v1000 = vadd.f32 %v950, %v992
          %v1001 = vadd.f32 %v951, %v993
          %v1002 = vadd.f32 %v952, %v994
          %v1003 = vadd.f32 %v953, %v995
          %v1004 = vadd.f32 %v954, %v996
          %v1005 = vadd.f32 %v955, %v997
          %v1006 = vadd.f32 %v956, %v998
          %v1007 = vadd.f32 %v957, %v999
          %v1008 = vld [vmem:[%s4] sm:$0xf]
          %v1010 = vlaneseq
          %v1011 = vshrl.u32 %v1010, 7
          %v1012 = vsub.s32 0, %v1011
          %v1013 = vrot.slane %v1008, %v1012
          %v1014 = vlaneseq
          %v1015 = vshrl.u32 %v1014, 7
          %v1016 = vsub.s32 1, %v1015
          %v1017 = vrot.slane %v1008, %v1016
          %v1018 = vlaneseq
          %v1019 = vshrl.u32 %v1018, 7
          %v1020 = vsub.s32 2, %v1019
          %v1021 = vrot.slane %v1008, %v1020
          %v1022 = vlaneseq
          %v1023 = vshrl.u32 %v1022, 7
          %v1024 = vsub.s32 3, %v1023
          %v1025 = vrot.slane %v1008, %v1024
          %v1030 = vadd.f32 %v1000, %v1013
          %v1031 = vadd.f32 %v1001, %v1017
          %v1032 = vadd.f32 %v1002, %v1021
          %v1033 = vadd.f32 %v1003, %v1025
          %v1034 = vadd.f32 %v1004, %v1013
          %v1035 = vadd.f32 %v1005, %v1017
          %v1036 = vadd.f32 %v1006, %v1021
          %v1037 = vadd.f32 %v1007, %v1025
          %v1038 = vmul.f32 %v1030, 0.01
          %v1039 = vmul.f32 %v1031, 0.01
          %v1040 = vmul.f32 %v1032, 0.01
          %v1041 = vmul.f32 %v1033, 0.01
          %v1042 = vmul.f32 %v1034, 0.01
          %v1043 = vmul.f32 %v1035, 0.01
          %v1044 = vmul.f32 %v1036, 0.01
          %v1045 = vmul.f32 %v1037, 0.01
          %v1046 = vmax.f32 %v1030, %v1038
          %v1047 = vmax.f32 %v1031, %v1039
          %v1048 = vmax.f32 %v1032, %v1040
          %v1049 = vmax.f32 %v1033, %v1041
          %v1050 = vmax.f32 %v1034, %v1042
          %v1051 = vmax.f32 %v1035, %v1043
          %v1052 = vmax.f32 %v1036, %v1044
          %v1053 = vmax.f32 %v1037, %v1045
          %v1054 = vpack.c.bf16 %v1050, %v1046
          %v1055 = vpack.c.bf16 %v1051, %v1047
          %v1056 = vpack.c.bf16 %v1052, %v1048
          %v1057 = vpack.c.bf16 %v1053, %v1049
          %v1058 = vld [vmem:[#allocation8] sm:$0xff]
          %v1059 = vld [vmem:[#allocation8 + $0x8] sm:$0xff]
          %v1060 = vld [vmem:[#allocation8 + $0x10] sm:$0xff]
          %v1061 = vld [vmem:[#allocation8 + $0x18] sm:$0xff]
          %v1062 = vld [vmem:[#allocation8 + $0x20] sm:$0xff]
          %v1063 = vld [vmem:[#allocation8 + $0x28] sm:$0xff]
          %v1064 = vld [vmem:[#allocation8 + $0x30] sm:$0xff]
          %v1065 = vld [vmem:[#allocation8 + $0x38] sm:$0xff]
          %v1066 = vld [vmem:[#allocation8 + $0x40] sm:$0xff]
          %v1067 = vld [vmem:[#allocation8 + $0x48] sm:$0xff]
          %v1068 = vld [vmem:[#allocation8 + $0x50] sm:$0xff]
          %v1069 = vld [vmem:[#allocation8 + $0x58] sm:$0xff]
          %v1070 = vld [vmem:[#allocation8 + $0x60] sm:$0xff]
          %v1071 = vld [vmem:[#allocation8 + $0x68] sm:$0xff]
          %v1072 = vld [vmem:[#allocation8 + $0x70] sm:$0xff]
          %v1073 = vld [vmem:[#allocation8 + $0x78] sm:$0xff]
          %v1074 = vld [vmem:[#allocation8 + $0x80] sm:$0xff]
          %v1075 = vld [vmem:[#allocation8 + $0x88] sm:$0xff]
          %v1076 = vld [vmem:[#allocation8 + $0x90] sm:$0xff]
          %v1077 = vld [vmem:[#allocation8 + $0x98] sm:$0xff]
          %v1078 = vld [vmem:[#allocation8 + $0xa0] sm:$0xff]
          %v1079 = vld [vmem:[#allocation8 + $0xa8] sm:$0xff]
          %v1080 = vld [vmem:[#allocation8 + $0xb0] sm:$0xff]
          %v1081 = vld [vmem:[#allocation8 + $0xb8] sm:$0xff]
          %v1082 = vld [vmem:[#allocation8 + $0xc0] sm:$0xff]
          %v1083 = vld [vmem:[#allocation8 + $0xc8] sm:$0xff]
          %v1084 = vld [vmem:[#allocation8 + $0xd0] sm:$0xff]
          %v1085 = vld [vmem:[#allocation8 + $0xd8] sm:$0xff]
          %v1086 = vld [vmem:[#allocation8 + $0xe0] sm:$0xff]
          %v1087 = vld [vmem:[#allocation8 + $0xe8] sm:$0xff]
          %v1088 = vld [vmem:[#allocation8 + $0xf0] sm:$0xff]
          %v1089 = vld [vmem:[#allocation8 + $0xf8] sm:$0xff]
          %v1090 = vld [vmem:[#allocation8 + $0x100] sm:$0xff]
          %v1091 = vld [vmem:[#allocation8 + $0x108] sm:$0xff]
          %v1092 = vld [vmem:[#allocation8 + $0x110] sm:$0xff]
          %v1093 = vld [vmem:[#allocation8 + $0x118] sm:$0xff]
          %v1094 = vld [vmem:[#allocation8 + $0x120] sm:$0xff]
          %v1095 = vld [vmem:[#allocation8 + $0x128] sm:$0xff]
          %v1096 = vld [vmem:[#allocation8 + $0x130] sm:$0xff]
          %v1097 = vld [vmem:[#allocation8 + $0x138] sm:$0xff]
          %v1098 = vld [vmem:[#allocation8 + $0x140] sm:$0xff]
          %v1099 = vld [vmem:[#allocation8 + $0x148] sm:$0xff]
          %v1100 = vld [vmem:[#allocation8 + $0x150] sm:$0xff]
          %v1101 = vld [vmem:[#allocation8 + $0x158] sm:$0xff]
          %v1102 = vld [vmem:[#allocation8 + $0x160] sm:$0xff]
          %v1103 = vld [vmem:[#allocation8 + $0x168] sm:$0xff]
          %v1104 = vld [vmem:[#allocation8 + $0x170] sm:$0xff]
          %v1105 = vld [vmem:[#allocation8 + $0x178] sm:$0xff]
          %v1106 = vld [vmem:[#allocation8 + $0x180] sm:$0xff]
          %v1107 = vld [vmem:[#allocation8 + $0x188] sm:$0xff]
          %v1108 = vld [vmem:[#allocation8 + $0x190] sm:$0xff]
          %v1109 = vld [vmem:[#allocation8 + $0x198] sm:$0xff]
          %v1110 = vld [vmem:[#allocation8 + $0x1a0] sm:$0xff]
          %v1111 = vld [vmem:[#allocation8 + $0x1a8] sm:$0xff]
          %v1112 = vld [vmem:[#allocation8 + $0x1b0] sm:$0xff]
          %v1113 = vld [vmem:[#allocation8 + $0x1b8] sm:$0xff]
          %v1114 = vld [vmem:[#allocation8 + $0x1c0] sm:$0xff]
          %v1115 = vld [vmem:[#allocation8 + $0x1c8] sm:$0xff]
          %v1116 = vld [vmem:[#allocation8 + $0x1d0] sm:$0xff]
          %v1117 = vld [vmem:[#allocation8 + $0x1d8] sm:$0xff]
          %v1118 = vld [vmem:[#allocation8 + $0x1e0] sm:$0xff]
          %v1119 = vld [vmem:[#allocation8 + $0x1e8] sm:$0xff]
          %v1120 = vld [vmem:[#allocation8 + $0x1f0] sm:$0xff]
          %v1121 = vld [vmem:[#allocation8 + $0x1f8] sm:$0xff]
          %v1122 = vld [vmem:[%s6] sm:$0x3]
          %v1124 = vlaneseq
          %v1125 = vshrl.u32 %v1124, 7
          %v1126 = vsub.s32 0, %v1125
          %v1127 = vrot.slane %v1122, %v1126
          %v1128 = vlaneseq
          %v1129 = vshrl.u32 %v1128, 7
          %v1130 = vsub.s32 1, %v1129
          %v1131 = vrot.slane %v1122, %v1130
          %v1198 = vunpack.c.l.b16 %v1058
          %v1199 = vunpack.c.h.b16 %v1058
          %v1200 = vunpack.c.l.b16 %v1059
          %v1201 = vunpack.c.h.b16 %v1059
          %v1202 = vunpack.c.l.b16 %v1060
          %v1203 = vunpack.c.h.b16 %v1060
          %v1204 = vunpack.c.l.b16 %v1061
          %v1205 = vunpack.c.h.b16 %v1061
          %v1206 = vunpack.c.l.b16 %v1062
          %v1207 = vunpack.c.h.b16 %v1062
          %v1208 = vunpack.c.l.b16 %v1063
          %v1209 = vunpack.c.h.b16 %v1063
          %v1210 = vunpack.c.l.b16 %v1064
          %v1211 = vunpack.c.h.b16 %v1064
          %v1212 = vunpack.c.l.b16 %v1065
          %v1213 = vunpack.c.h.b16 %v1065
          %v1214 = vunpack.c.l.b16 %v1066
          %v1215 = vunpack.c.h.b16 %v1066
          %v1216 = vunpack.c.l.b16 %v1067
          %v1217 = vunpack.c.h.b16 %v1067
          %v1218 = vunpack.c.l.b16 %v1068
          %v1219 = vunpack.c.h.b16 %v1068
          %v1220 = vunpack.c.l.b16 %v1069
          %v1221 = vunpack.c.h.b16 %v1069
          %v1222 = vunpack.c.l.b16 %v1070
          %v1223 = vunpack.c.h.b16 %v1070
          %v1224 = vunpack.c.l.b16 %v1071
          %v1225 = vunpack.c.h.b16 %v1071
          %v1226 = vunpack.c.l.b16 %v1072
          %v1227 = vunpack.c.h.b16 %v1072
          %v1228 = vunpack.c.l.b16 %v1073
          %v1229 = vunpack.c.h.b16 %v1073
          %v1230 = vunpack.c.l.b16 %v1074
          %v1231 = vunpack.c.h.b16 %v1074
          %v1232 = vunpack.c.l.b16 %v1075
          %v1233 = vunpack.c.h.b16 %v1075
          %v1234 = vunpack.c.l.b16 %v1076
          %v1235 = vunpack.c.h.b16 %v1076
          %v1236 = vunpack.c.l.b16 %v1077
          %v1237 = vunpack.c.h.b16 %v1077
          %v1238 = vunpack.c.l.b16 %v1078
          %v1239 = vunpack.c.h.b16 %v1078
          %v1240 = vunpack.c.l.b16 %v1079
          %v1241 = vunpack.c.h.b16 %v1079
          %v1242 = vunpack.c.l.b16 %v1080
          %v1243 = vunpack.c.h.b16 %v1080
          %v1244 = vunpack.c.l.b16 %v1081
          %v1245 = vunpack.c.h.b16 %v1081
          %v1246 = vunpack.c.l.b16 %v1082
          %v1247 = vunpack.c.h.b16 %v1082
          %v1248 = vunpack.c.l.b16 %v1083
          %v1249 = vunpack.c.h.b16 %v1083
          %v1250 = vunpack.c.l.b16 %v1084
          %v1251 = vunpack.c.h.b16 %v1084
          %v1252 = vunpack.c.l.b16 %v1085
          %v1253 = vunpack.c.h.b16 %v1085
          %v1254 = vunpack.c.l.b16 %v1086
          %v1255 = vunpack.c.h.b16 %v1086
          %v1256 = vunpack.c.l.b16 %v1087
          %v1257 = vunpack.c.h.b16 %v1087
          %v1258 = vunpack.c.l.b16 %v1088
          %v1259 = vunpack.c.h.b16 %v1088
          %v1260 = vunpack.c.l.b16 %v1089
          %v1261 = vunpack.c.h.b16 %v1089
          %v1262 = vunpack.c.l.b16 %v1090
          %v1263 = vunpack.c.h.b16 %v1090
          %v1264 = vunpack.c.l.b16 %v1091
          %v1265 = vunpack.c.h.b16 %v1091
          %v1266 = vunpack.c.l.b16 %v1092
          %v1267 = vunpack.c.h.b16 %v1092
          %v1268 = vunpack.c.l.b16 %v1093
          %v1269 = vunpack.c.h.b16 %v1093
          %v1270 = vunpack.c.l.b16 %v1094
          %v1271 = vunpack.c.h.b16 %v1094
          %v1272 = vunpack.c.l.b16 %v1095
          %v1273 = vunpack.c.h.b16 %v1095
          %v1274 = vunpack.c.l.b16 %v1096
          %v1275 = vunpack.c.h.b16 %v1096
          %v1276 = vunpack.c.l.b16 %v1097
          %v1277 = vunpack.c.h.b16 %v1097
          %v1278 = vunpack.c.l.b16 %v1098
          %v1279 = vunpack.c.h.b16 %v1098
          %v1280 = vunpack.c.l.b16 %v1099
          %v1281 = vunpack.c.h.b16 %v1099
          %v1282 = vunpack.c.l.b16 %v1100
          %v1283 = vunpack.c.h.b16 %v1100
          %v1284 = vunpack.c.l.b16 %v1101
          %v1285 = vunpack.c.h.b16 %v1101
          %v1286 = vunpack.c.l.b16 %v1102
          %v1287 = vunpack.c.h.b16 %v1102
          %v1288 = vunpack.c.l.b16 %v1103
          %v1289 = vunpack.c.h.b16 %v1103
          %v1290 = vunpack.c.l.b16 %v1104
          %v1291 = vunpack.c.h.b16 %v1104
          %v1292 = vunpack.c.l.b16 %v1105
          %v1293 = vunpack.c.h.b16 %v1105
          %v1294 = vunpack.c.l.b16 %v1106
          %v1295 = vunpack.c.h.b16 %v1106
          %v1296 = vunpack.c.l.b16 %v1107
          %v1297 = vunpack.c.h.b16 %v1107
          %v1298 = vunpack.c.l.b16 %v1108
          %v1299 = vunpack.c.h.b16 %v1108
          %v1300 = vunpack.c.l.b16 %v1109
          %v1301 = vunpack.c.h.b16 %v1109
          %v1302 = vunpack.c.l.b16 %v1110
          %v1303 = vunpack.c.h.b16 %v1110
          %v1304 = vunpack.c.l.b16 %v1111
          %v1305 = vunpack.c.h.b16 %v1111
          %v1306 = vunpack.c.l.b16 %v1112
          %v1307 = vunpack.c.h.b16 %v1112
          %v1308 = vunpack.c.l.b16 %v1113
          %v1309 = vunpack.c.h.b16 %v1113
          %v1310 = vunpack.c.l.b16 %v1114
          %v1311 = vunpack.c.h.b16 %v1114
          %v1312 = vunpack.c.l.b16 %v1115
          %v1313 = vunpack.c.h.b16 %v1115
          %v1314 = vunpack.c.l.b16 %v1116
          %v1315 = vunpack.c.h.b16 %v1116
          %v1316 = vunpack.c.l.b16 %v1117
          %v1317 = vunpack.c.h.b16 %v1117
          %v1318 = vunpack.c.l.b16 %v1118
          %v1319 = vunpack.c.h.b16 %v1118
          %v1320 = vunpack.c.l.b16 %v1119
          %v1321 = vunpack.c.h.b16 %v1119
          %v1322 = vunpack.c.l.b16 %v1120
          %v1323 = vunpack.c.h.b16 %v1120
          %v1324 = vunpack.c.l.b16 %v1121
          %v1325 = vunpack.c.h.b16 %v1121
          %v1326 = vpack.c.b16 %v1200, %v1198
          %v1327 = vpack.c.b16 %v1201, %v1199
          %v1328 = vpack.c.b16 %v1204, %v1202
          %v1329 = vpack.c.b16 %v1205, %v1203
          %v1330 = vpack.c.b16 %v1208, %v1206
          %v1331 = vpack.c.b16 %v1209, %v1207
          %v1332 = vpack.c.b16 %v1212, %v1210
          %v1333 = vpack.c.b16 %v1213, %v1211
          %v1334 = vpack.c.b16 %v1216, %v1214
          %v1335 = vpack.c.b16 %v1217, %v1215
          %v1336 = vpack.c.b16 %v1220, %v1218
          %v1337 = vpack.c.b16 %v1221, %v1219
          %v1338 = vpack.c.b16 %v1224, %v1222
          %v1339 = vpack.c.b16 %v1225, %v1223
          %v1340 = vpack.c.b16 %v1228, %v1226
          %v1341 = vpack.c.b16 %v1229, %v1227
          %v1342 = vpack.c.b16 %v1232, %v1230
          %v1343 = vpack.c.b16 %v1233, %v1231
          %v1344 = vpack.c.b16 %v1236, %v1234
          %v1345 = vpack.c.b16 %v1237, %v1235
          %v1346 = vpack.c.b16 %v1240, %v1238
          %v1347 = vpack.c.b16 %v1241, %v1239
          %v1348 = vpack.c.b16 %v1244, %v1242
          %v1349 = vpack.c.b16 %v1245, %v1243
          %v1350 = vpack.c.b16 %v1248, %v1246
          %v1351 = vpack.c.b16 %v1249, %v1247
          %v1352 = vpack.c.b16 %v1252, %v1250
          %v1353 = vpack.c.b16 %v1253, %v1251
          %v1354 = vpack.c.b16 %v1256, %v1254
          %v1355 = vpack.c.b16 %v1257, %v1255
          %v1356 = vpack.c.b16 %v1260, %v1258
          %v1357 = vpack.c.b16 %v1261, %v1259
          %v1358 = vpack.c.b16 %v1264, %v1262
          %v1359 = vpack.c.b16 %v1265, %v1263
          %v1360 = vpack.c.b16 %v1268, %v1266
          %v1361 = vpack.c.b16 %v1269, %v1267
          %v1362 = vpack.c.b16 %v1272, %v1270
          %v1363 = vpack.c.b16 %v1273, %v1271
          %v1364 = vpack.c.b16 %v1276, %v1274
          %v1365 = vpack.c.b16 %v1277, %v1275
          %v1366 = vpack.c.b16 %v1280, %v1278
          %v1367 = vpack.c.b16 %v1281, %v1279
          %v1368 = vpack.c.b16 %v1284, %v1282
          %v1369 = vpack.c.b16 %v1285, %v1283
          %v1370 = vpack.c.b16 %v1288, %v1286
          %v1371 = vpack.c.b16 %v1289, %v1287
          %v1372 = vpack.c.b16 %v1292, %v1290
          %v1373 = vpack.c.b16 %v1293, %v1291
          %v1374 = vpack.c.b16 %v1296, %v1294
          %v1375 = vpack.c.b16 %v1297, %v1295
          %v1376 = vpack.c.b16 %v1300, %v1298
          %v1377 = vpack.c.b16 %v1301, %v1299
          %v1378 = vpack.c.b16 %v1304, %v1302
          %v1379 = vpack.c.b16 %v1305, %v1303
          %v1380 = vpack.c.b16 %v1308, %v1306
          %v1381 = vpack.c.b16 %v1309, %v1307
          %v1382 = vpack.c.b16 %v1312, %v1310
          %v1383 = vpack.c.b16 %v1313, %v1311
          %v1384 = vpack.c.b16 %v1316, %v1314
          %v1385 = vpack.c.b16 %v1317, %v1315
          %v1386 = vpack.c.b16 %v1320, %v1318
          %v1387 = vpack.c.b16 %v1321, %v1319
          %v1388 = vpack.c.b16 %v1324, %v1322
          %v1389 = vpack.c.b16 %v1325, %v1323
          %1454 = vmatprep.subr.bf16.mxu0 %v1327
          %1455 = vmatpush1.bf16.msra.mxu0 %v1326
          %1456 = vmatprep.subr.bf16.mxu0 %v1329
          %1457 = vmatpush1.bf16.msra.mxu0 %v1328
          %1458 = vmatprep.subr.bf16.mxu0 %v1331
          %1459 = vmatpush1.bf16.msra.mxu0 %v1330
          %1460 = vmatprep.subr.bf16.mxu0 %v1333
          %1461 = vmatpush1.bf16.msra.mxu0 %v1332
          %1462 = vmatprep.subr.bf16.mxu0 %v1335
          %1463 = vmatpush1.bf16.msra.mxu0 %v1334
          %1464 = vmatprep.subr.bf16.mxu0 %v1337
          %1465 = vmatpush1.bf16.msra.mxu0 %v1336
          %1466 = vmatprep.subr.bf16.mxu0 %v1339
          %1467 = vmatpush1.bf16.msra.mxu0 %v1338
          %1468 = vmatprep.subr.bf16.mxu0 %v1341
          %1469 = vmatpush1.bf16.msra.mxu0 %v1340
          %1470 = vmatprep.subr.bf16.mxu0 %v1343
          %1471 = vmatpush1.bf16.msra.mxu0 %v1342
          %1472 = vmatprep.subr.bf16.mxu0 %v1345
          %1473 = vmatpush1.bf16.msra.mxu0 %v1344
          %1474 = vmatprep.subr.bf16.mxu0 %v1347
          %1475 = vmatpush1.bf16.msra.mxu0 %v1346
          %1476 = vmatprep.subr.bf16.mxu0 %v1349
          %1477 = vmatpush1.bf16.msra.mxu0 %v1348
          %1478 = vmatprep.subr.bf16.mxu0 %v1351
          %1479 = vmatpush1.bf16.msra.mxu0 %v1350
          %1480 = vmatprep.subr.bf16.mxu0 %v1353
          %1481 = vmatpush1.bf16.msra.mxu0 %v1352
          %1482 = vmatprep.subr.bf16.mxu0 %v1355
          %1483 = vmatpush1.bf16.msra.mxu0 %v1354
          %1484 = vmatprep.subr.bf16.mxu0 %v1357
          %1485 = vmatpush1.bf16.msra.mxu0 %v1356
          %1486 = vmatprep.mubr.bf16.mxu0 %v1055
          %1487 = vmatmul.mubr.bf16.gmra.mrb[0].mxu0 %v1054
          %v1488 = vpop.f32.mrb[0].mxu0
          %v1489 = vadd.f32 %v1127, %v1488
          %v1490 = vpop.f32.mrb[0].mxu0
          %v1491 = vadd.f32 %v1131, %v1490
          %v1492 = vpop.f32.mrb[0].mxu0
          %v1493 = vadd.f32 %v1127, %v1492
          %v1494 = vpop.f32.mrb[0].mxu0
          %v1495 = vadd.f32 %v1131, %v1494
          %1496 = vdwg.mxu0
          %1497 = vmatprep.subr.bf16.mxu0 %v1359
          %1498 = vmatpush1.bf16.msra.mxu0 %v1358
          %1499 = vmatprep.subr.bf16.mxu0 %v1361
          %1500 = vmatpush1.bf16.msra.mxu0 %v1360
          %1501 = vmatprep.subr.bf16.mxu0 %v1363
          %1502 = vmatpush1.bf16.msra.mxu0 %v1362
          %1503 = vmatprep.subr.bf16.mxu0 %v1365
          %1504 = vmatpush1.bf16.msra.mxu0 %v1364
          %1505 = vmatprep.subr.bf16.mxu0 %v1367
          %1506 = vmatpush1.bf16.msra.mxu0 %v1366
          %1507 = vmatprep.subr.bf16.mxu0 %v1369
          %1508 = vmatpush1.bf16.msra.mxu0 %v1368
          %1509 = vmatprep.subr.bf16.mxu0 %v1371
          %1510 = vmatpush1.bf16.msra.mxu0 %v1370
          %1511 = vmatprep.subr.bf16.mxu0 %v1373
          %1512 = vmatpush1.bf16.msra.mxu0 %v1372
          %1513 = vmatprep.subr.bf16.mxu0 %v1375
          %1514 = vmatpush1.bf16.msra.mxu0 %v1374
          %1515 = vmatprep.subr.bf16.mxu0 %v1377
          %1516 = vmatpush1.bf16.msra.mxu0 %v1376
          %1517 = vmatprep.subr.bf16.mxu0 %v1379
          %1518 = vmatpush1.bf16.msra.mxu0 %v1378
          %1519 = vmatprep.subr.bf16.mxu0 %v1381
          %1520 = vmatpush1.bf16.msra.mxu0 %v1380
          %1521 = vmatprep.subr.bf16.mxu0 %v1383
          %1522 = vmatpush1.bf16.msra.mxu0 %v1382
          %1523 = vmatprep.subr.bf16.mxu0 %v1385
          %1524 = vmatpush1.bf16.msra.mxu0 %v1384
          %1525 = vmatprep.subr.bf16.mxu0 %v1387
          %1526 = vmatpush1.bf16.msra.mxu0 %v1386
          %1527 = vmatprep.subr.bf16.mxu0 %v1389
          %1528 = vmatpush1.bf16.msra.mxu0 %v1388
          %1529 = vmatprep.mubr.bf16.mxu0 %v1057
          %1530 = vmatmul.mubr.bf16.gmra.mrb[0].mxu0 %v1056
          %v1531 = vpop.f32.mrb[0].mxu0
          %v1532 = vadd.f32 %v1489, %v1531
          %v1533 = vpop.f32.mrb[0].mxu0
          %v1534 = vadd.f32 %v1491, %v1533
          %v1535 = vpop.f32.mrb[0].mxu0
          %v1536 = vadd.f32 %v1493, %v1535
          %v1537 = vpop.f32.mrb[0].mxu0
          %v1538 = vadd.f32 %v1495, %v1537
          %1539 = vdwg.mxu0
          %v1540 = vmul.f32 %v1532, 0.01
          %v1541 = vmul.f32 %v1534, 0.01
          %v1542 = vmul.f32 %v1536, 0.01
          %v1543 = vmul.f32 %v1538, 0.01
          %v1544 = vmax.f32 %v1532, %v1540
          %v1545 = vmax.f32 %v1534, %v1541
          %v1546 = vmax.f32 %v1536, %v1542
          %v1547 = vmax.f32 %v1538, %v1543
          %v1548 = vld [vmem:[%s7] sm:$0x3]
          %v1550 = vlaneseq
          %v1551 = vshrl.u32 %v1550, 7
          %v1552 = vsub.s32 0, %v1551
          %v1553 = vrot.slane %v1548, %v1552
          %v1554 = vlaneseq
          %v1555 = vshrl.u32 %v1554, 7
          %v1556 = vsub.s32 1, %v1555
          %v1557 = vrot.slane %v1548, %v1556
          %v1560 = vmul.f32 %v1544, %v1553
          %v1561 = vmul.f32 %v1545, %v1557
          %v1562 = vmul.f32 %v1546, %v1553
          %v1563 = vmul.f32 %v1547, %v1557
          %v1564 = vadd.f32 %v1560, %v1561
          %1565 = vadd.xlane.f32.xlu0 %v1564
          %v1566 = vpop.xlane.xlu0 %1565
          %v1567 = vadd.f32 %v1562, %v1563
          %1568 = vadd.xlane.f32.xlu0 %v1567
          %v1569 = vpop.xlane.xlu0 %1568
          %s1570 = sld [smem:[#allocation3]]
          %v1571 = vstv %s1570
          %v1572 = vadd.f32 %v1566, %v1571
          %v1573 = vadd.f32 %v1569, %v1571
          %v1574 = vsub.f32 0.0, %v1572
          %v1575 = vsub.f32 0.0, %v1573
          %v1576 = vmul.f32 %v1574, 1.442695
          %v1577 = vpow.pop %v1576
          %v1578 = vmul.f32 %v1575, 1.442695
          %v1579 = vpow.pop %v1578
          %v1580 = vadd.f32 %v1577, 1.0
          %v1581 = vadd.f32 %v1579, 1.0
          %v1582 = vrcp.pop %v1580
          %v1583 = vmul.f32 1.0, %v1582
          %v1584 = vrcp.pop %v1581
          %v1585 = vmul.f32 1.0, %v1584
          %vm1586 = vcmask 7168
          %1587 = vst.msk [vmem:[%s433] sm:$0xff] %vm1586, %v1583
          %1588 = vst.msk [vmem:[%s433 + $0x8] sm:$0xff] %vm1586, %v1585
        $region76: #{tpu_custom_call.1} parent=55 // pred_fallthru
          _
        %s1589 = smul.u32 2, %s29
        %p1590 = scmp.lt.s32.totalorder %s1589, 7
        %s1591 = scalar_select %p1590, %s1589, 7
        %s1592 = smul.addr %s1591, 8
        %s1593 = scalar_lea.vmem %s9, %s1592
        // Predicated region
        $region77: #{tpu_custom_call.1} parent=55 // pred_check
          %p1594 = pneg %p261
        $region78: #{tpu_custom_call.1} parent=55 // pred_check_branch
          %1596 = sbr.rel (%p1594) target = $region80
        $region79: #{tpu_custom_call.1} parent=55 // pred_region
          %s1597 = smul.u32 2, %s29
        $region80: #{tpu_custom_call.1} parent=55 // pred_fallthru
          _
      $region56: #{tpu_custom_call.1} parent=5 // pred_fallthru
        _
      %p1598 = scmp.le.s32.totalorder 2, %s20
      // Predicated region
      $region81: #{tpu_custom_call.1} parent=5 // pred_check
        %p1599 = pneg %p1598
      $region82: #{tpu_custom_call.1} parent=5 // pred_check_branch
        %1601 = sbr.rel (%p1599) target = $region84
      $region83: #{tpu_custom_call.1} parent=5 // pred_region
        %s1602 = ssub.s32 %s20, 2
        // Predicated region
        $region85: #{tpu_custom_call.1} parent=83 // pred_check
          %p1603 = pneg %p267
        $region86: #{tpu_custom_call.1} parent=83 // pred_check_branch
          %1605 = sbr.rel (%p1603) target = $region88
        $region87: #{tpu_custom_call.1} parent=83 // pred_region
          %s1606 = smul.u32 2, %s31
          %p1607 = scmp.lt.s32.totalorder %s1606, 7
          %s1608 = scalar_select %p1607, %s1606, 7
          %s1609 = smul.addr %s1608, 8
          %s1610 = scalar_lea.vmem %s9, %s1609
        $region88: #{tpu_custom_call.1} parent=83 // pred_fallthru
          _
      $region84: #{tpu_custom_call.1} parent=5 // pred_fallthru
        _
    $region6: #{tpu_custom_call.1} parent=1 // loop_footer
      %s24 = sadd.s32 1, %s20
    $region7: #{tpu_custom_call.1} parent=1 // loop_footer_branch
      %19 = sbr.rel target = $region3
    $region8: #{tpu_custom_call.1} parent=1 // loop_exit
      _
    %1611 = vsyncpa [#allocation5], 1
    %s1612 = scalar_lea.sflag [#allocation5], 1
    %1613 = vsyncpa %s1612, 1
    %1614 = vsyncpa [#allocation7], 1

</llo_original>
